<compile_context>
chip_gen: v5e
topology: v5e:2x2
jax: 0.10.0
libtpu: 0.0.40
codegen_flags: <defaults>
</compile_context>

<pallas_src>
import functools

import jax
import jax.numpy as jnp
from jax import lax
from jax.experimental import pallas as pl
from jax.experimental.pallas import tpu as pltpu

FASHIONMNIST_MEAN = 0.2860
FASHIONMNIST_STD = 0.3530

# conv2 geometry: 28x28x128 -> 13x13x64, k=3, stride=2, valid padding.
_OH = 13                          # conv2 output spatial size
_QH = 14                          # parity-plane spatial size (28 / 2)
_NPOS = _QH * _QH                 # 196 positions per (row-parity, col-parity) plane
_NROWS = (_OH - 1) * _QH + _OH    # 181 accumulator rows (p = oh*14 + ow)
_H2_ROWS = 192                    # stored rows: 181 valid + 11 zero pad (mult. of 8)
_K_FC1 = _H2_ROWS * 64            # 12288


def _round_up(x, m):
    return ((x + m - 1) // m) * m


def _cdiv(a, b):
    return (a + b - 1) // b


# ----------------------------------------------------------------------------
# Fused conv1 + conv2 kernel.
#
# patch_ref[img, a, b, p=r*14+c, t] holds the 9 conv1 taps of output position
# (h=2r+a, w=2c+b).  conv1 per parity plane is a (196,9)@(9,128) MXU matmul;
# the result lives only in the VMEM scratch h1_scr.  conv2 tap (i,j) for
# output p = oh*14+ow then reads the contiguous slice
#   h1_scr[i%2, j%2, p + (i//2)*14 + (j//2), :]
# so each of the 9 taps is one (181,128)@(128,64) matmul.
# ----------------------------------------------------------------------------
def _conv_fused_kernel(patch_ref, w1_ref, b1_ref, w2_ref, b2_ref, o_ref,
                       h1_scr, *, img_block):
    # patch_ref: (IMG, 2, 2, 196, 9) bf16 | w1_ref: (9, 128) bf16
    # b1_ref   : (1, 128) f32            | w2_ref: (9, 128, 64) bf16
    # b2_ref   : (1, 64) f32             | o_ref : (IMG, 192, 64) bf16
    # h1_scr   : VMEM (2, 2, 196, 128) bf16 (reused across images / steps)
    for img in range(img_block):
        # conv_1 (+ folded input normalization) + ReLU, four parity planes.
        for a in range(2):
            for b in range(2):
                acc1 = jnp.dot(patch_ref[img, a, b, :, :], w1_ref[...],
                               preferred_element_type=jnp.float32)
                acc1 = jnp.maximum(acc1 + b1_ref[...], 0.0)
                h1_scr[a, b, :, :] = acc1.astype(jnp.bfloat16)

        # conv_2 + ReLU: 9-tap accumulation over the VMEM-resident planes.
        acc2 = jnp.zeros((_NROWS, 64), jnp.float32)
        for i in range(3):
            for j in range(3):
                start = (i // 2) * _QH + (j // 2)          # 0, 1, 14 or 15
                a_tap = h1_scr[i % 2, j % 2, start:start + _NROWS, :]
                acc2 = acc2 + jnp.dot(a_tap, w2_ref[i * 3 + j],
                                      preferred_element_type=jnp.float32)
        acc2 = jnp.maximum(acc2 + b2_ref[...], 0.0)
        o_ref[img, :_NROWS, :] = acc2.astype(o_ref.dtype)
        # zero the pad rows so the (zero-weighted) fc1 contribution is exactly 0.
        o_ref[img, _NROWS:, :] = jnp.zeros((_H2_ROWS - _NROWS, 64), o_ref.dtype)


def conv_stage(patches, w1, b1, w2, b2, *, img_block_max=8):
    """patches: (N, 2, 2, 196, 9) bf16 -> h2: (N, 192, 64) bf16."""
    N = patches.shape[0]
    # >= 2 grid blocks whenever N >= 2 (keeps both v7x TensorCores busy),
    # capped at img_block_max (VMEM: ~0.6 MB live per image at bf16).
    img_block = max(1, min(img_block_max, _cdiv(N, 2)))
    Np = _round_up(N, img_block)
    if Np != N:
        patches = jnp.pad(patches,
                          ((0, Np - N), (0, 0), (0, 0), (0, 0), (0, 0)))
    b1r = b1.reshape(1, 128).astype(jnp.float32)
    b2r = b2.reshape(1, 64).astype(jnp.float32)

    out = pl.pallas_call(
        functools.partial(_conv_fused_kernel, img_block=img_block),
        out_shape=jax.ShapeDtypeStruct((Np, _H2_ROWS, 64), jnp.bfloat16),
        grid=(Np // img_block,),
        in_specs=[
            pl.BlockSpec((img_block, 2, 2, _NPOS, 9),
                         lambda n: (n, 0, 0, 0, 0)),
            pl.BlockSpec((9, 128), lambda n: (0, 0)),          # resident
            pl.BlockSpec((1, 128), lambda n: (0, 0)),
            pl.BlockSpec((9, 128, 64), lambda n: (0, 0, 0)),   # resident
            pl.BlockSpec((1, 64), lambda n: (0, 0)),
        ],
        out_specs=pl.BlockSpec((img_block, _H2_ROWS, 64), lambda n: (n, 0, 0)),
        scratch_shapes=[pltpu.VMEM((2, 2, _NPOS, 128), jnp.bfloat16)],
        compiler_params=pltpu.CompilerParams(
            dimension_semantics=("parallel",)),
    )(patches, w1, b1r, w2, b2r)
    return out[:N] if Np != N else out


# ----------------------------------------------------------------------------
# Fused fc1 + fc2 kernel: K-tiled f32 accumulation for fc1, then in the
# last-K finalize: bias + ReLU, fc2 matmul (128x10, VMEM-resident), bias,
# write logits directly.  (drop_1 / drop_2 are identity in eval mode.)
# ----------------------------------------------------------------------------
def _fc_fused_kernel(a_ref, w1_ref, b1_ref, w2_ref, b2_ref, o_ref, acc_ref):
    @pl.when(pl.program_id(1) == 0)
    def _():
        acc_ref[...] = jnp.zeros_like(acc_ref)

    acc_ref[...] += jnp.dot(a_ref[...], w1_ref[...],
                            preferred_element_type=jnp.float32)

    @pl.when(pl.program_id(1) == pl.num_programs(1) - 1)
    def _():
        h3 = jnp.maximum(acc_ref[...] + b1_ref[...], 0.0)
        logits = jnp.dot(h3, w2_ref[...],
                         preferred_element_type=jnp.float32) + b2_ref[...]
        o_ref[...] = logits.astype(o_ref.dtype)


def fc_stage(flat, wf1, bf1, wf2, bf2, *, tm_max=512, tk=2048):
    """flat:(M,12288) bf16, wf1:(12288,128) bf16, wf2:(128,10) f32 -> (M,10) f32."""
    M, K = flat.shape
    assert K == wf1.shape[0]
    O1 = wf1.shape[1]
    O2 = wf2.shape[1]
    # M tile: <= tm_max, but also <= ceil(M/2) so there are >=2 "parallel"
    # M blocks at moderate batch (v7x: 2 TensorCores).  Multiple of 16 (bf16).
    tm = max(16, min(tm_max, _round_up(_cdiv(M, 2), 16)))
    Mp = _round_up(M, tm)
    if Mp != M:
        flat = jnp.pad(flat, ((0, Mp - M), (0, 0)))
    if tk >= K:
        tk = K
    assert K % tk == 0, (K, tk)
    b1r = bf1.reshape(1, O1).astype(jnp.float32)
    b2r = bf2.reshape(1, O2).astype(jnp.float32)

    out = pl.pallas_call(
        _fc_fused_kernel,
        out_shape=jax.ShapeDtypeStruct((Mp, O2), jnp.float32),
        grid=(Mp // tm, K // tk),
        in_specs=[
            pl.BlockSpec((tm, tk), lambda i, k: (i, k)),
            pl.BlockSpec((tk, O1), lambda i, k: (k, 0)),
            pl.BlockSpec((1, O1), lambda i, k: (0, 0)),
            pl.BlockSpec((O1, O2), lambda i, k: (0, 0)),
            pl.BlockSpec((1, O2), lambda i, k: (0, 0)),
        ],
        out_specs=pl.BlockSpec((tm, O2), lambda i, k: (i, 0)),
        scratch_shapes=[pltpu.VMEM((tm, O1), jnp.float32)],
        compiler_params=pltpu.CompilerParams(
            dimension_semantics=("parallel", "arbitrary")),
    )(flat, wf1, b1r, wf2, b2r)
    return out[:M] if Mp != M else out


# ----------------------------------------------------------------------------
# conv1 patch extraction (tiny XLA glue: ~3 KB in / ~14 KB out per image).
# Rows are ordered (n, h%2, w%2, h//2, w//2) so conv1's in-kernel output lands
# directly in the parity-split layout the conv2 taps consume.  Padding uses
# the dataset mean so the folded normalization stays exact.
# ----------------------------------------------------------------------------
def _conv1_patches_split(x):
    """(N,1,28,28) raw input -> (N, 2, 2, 196, 9) bf16 patch rows."""
    N = x.shape[0]
    xp = jnp.pad(x[:, 0], ((0, 0), (1, 1), (1, 1)),
                 constant_values=FASHIONMNIST_MEAN)               # (N, 30, 30)
    taps = [xp[:, i:i + 28, j:j + 28] for i in range(3) for j in range(3)]
    t = jnp.stack(taps, axis=-1)                                  # (N, 28, 28, 9)
    t = t.reshape(N, _QH, 2, _QH, 2, 9).transpose(0, 2, 4, 1, 3, 5)
    return t.reshape(N, 2, 2, _NPOS, 9).astype(jnp.bfloat16)


# ----------------------------------------------------------------------------
# Parameters: PyTorch-layout init + one-time preparation (fold / permute / cast)
# ----------------------------------------------------------------------------
def init_params(key):
    def uinit(k, shape, fan_in):
        bound = 1.0 / jnp.sqrt(fan_in)
        return jax.random.uniform(k, shape, jnp.float32, -bound, bound)

    ks = jax.random.split(key, 8)
    return {
        "conv1_w": uinit(ks[0], (128, 1, 3, 3), 9),
        "conv1_b": uinit(ks[1], (128,), 9),
        "conv2_w": uinit(ks[2], (64, 128, 3, 3), 1152),
        "conv2_b": uinit(ks[3], (64,), 1152),
        "fc1_w": uinit(ks[4], (128, 10816), 10816),
        "fc1_b": uinit(ks[5], (128,), 10816),
        "fc2_w": uinit(ks[6], (10, 128), 128),
        "fc2_b": uinit(ks[7], (10,), 128),
    }


def prepare_params(params):
    """One-time weight folding / reshaping / permutation / casting."""
    f32 = jnp.float32
    # conv1: fold (x - mean) / std into the weights and bias (exact).
    w1m = params["conv1_w"].reshape(128, 9)                       # (out, tap)
    w1 = (w1m.T / FASHIONMNIST_STD).astype(jnp.bfloat16)          # (9, 128)
    b1 = (params["conv1_b"]
          - (FASHIONMNIST_MEAN / FASHIONMNIST_STD) * w1m.sum(axis=1)).astype(f32)

    # conv2: per-tap (in_ch, out_ch) matrices, bf16.
    w2 = params["conv2_w"].transpose(2, 3, 1, 0).reshape(9, 128, 64)
    w2 = w2.astype(jnp.bfloat16)
    b2 = params["conv2_b"].astype(f32)

    # fc1: permute rows from PyTorch's (c, h, w) flatten order to our
    # (p = oh*14 + ow, c) layout; the unused rows (ow == 13 garbage positions
    # and the 181..191 pad rows) stay exactly zero -> K = 192 * 64 = 12288.
    wt = params["fc1_w"].T.astype(f32)                            # (10816, 128)
    oh = jnp.arange(_OH)
    ow = jnp.arange(_OH)
    c = jnp.arange(64)
    src = (c[None, None, :] * (_OH * _OH)
           + oh[:, None, None] * _OH + ow[None, :, None]).reshape(-1)
    dst = ((oh[:, None, None] * _QH + ow[None, :, None]) * 64
           + c[None, None, :]).reshape(-1)
    wf1 = jnp.zeros((_K_FC1, 128), f32).at[dst].set(wt[src])
    wf1 = wf1.astype(jnp.bfloat16)
    bf1 = params["fc1_b"].astype(f32)

    wf2 = params["fc2_w"].T.astype(f32)                           # (128, 10)
    bf2 = params["fc2_b"].astype(f32)
    return {"w1": w1, "b1": b1, "w2": w2, "b2": b2,
            "wf1": wf1, "bf1": bf1, "wf2": wf2, "bf2": bf2}


# ----------------------------------------------------------------------------
# Forward pass (2 pallas_calls total).
# ----------------------------------------------------------------------------
def classifier_c_forward(x, p):
    """x: (N, 1, 28, 28) float32 NCHW (as in PyTorch); p: prepare_params output."""
    N = x.shape[0]

    # conv_1 (+ folded normalization) + ReLU + conv_2 + ReLU, fully fused;
    # h1 never touches HBM.  drop_1 = identity (eval).
    patches = _conv1_patches_split(x)                             # (N,2,2,196,9) bf16
    h2 = conv_stage(patches, p["w1"], p["b1"], p["w2"], p["b2"])  # (N,192,64) bf16

    # fc_1 + ReLU + fc_2, fused (K-tiled accumulator, logits written directly).
    # drop_2 = identity (eval).
    flat = h2.reshape(N, _K_FC1)                                  # (N, 12288)
    return fc_stage(flat, p["wf1"], p["bf1"], p["wf2"], p["bf2"]) # (N, 10) f32


# ----------------------------------------------------------------------------
# Plain-XLA reference (f32) for a loose numerical sanity check.
# ----------------------------------------------------------------------------
def _reference_forward(x, params):
    xn = (x - FASHIONMNIST_MEAN) / FASHIONMNIST_STD
    dn = ("NCHW", "OIHW", "NCHW")
    h1 = jax.nn.relu(
        lax.conv_general_dilated(xn, params["conv1_w"], (1, 1),
                                 ((1, 1), (1, 1)), dimension_numbers=dn)
        + params["conv1_b"][None, :, None, None])
    h2 = jax.nn.relu(
        lax.conv_general_dilated(h1, params["conv2_w"], (2, 2),
                                 ((0, 0), (0, 0)), dimension_numbers=dn)
        + params["conv2_b"][None, :, None, None])
    flat = h2.reshape(x.shape[0], -1)
    h3 = jax.nn.relu(flat @ params["fc1_w"].T + params["fc1_b"])
    return h3 @ params["fc2_w"].T + params["fc2_b"]


if __name__ == "__main__":
    key = jax.random.PRNGKey(0)
    pkey, xkey = jax.random.split(key)
    params = init_params(pkey)
    prepared = prepare_params(params)

    # Fashion-MNIST sized input: batch=2, 1 channel, 28x28 (required by fc_1).
    x = jax.random.uniform(xkey, (2, 1, 28, 28), jnp.float32)

    fwd = jax.jit(classifier_c_forward)
    logits = fwd(x, prepared)
    jax.block_until_ready(logits)
    assert logits.shape == (2, 10)

    # Loose tolerance: conv1/conv2/fc1 run in bf16 (expected |err| ~ 1e-3).
    ref = _reference_forward(x, params)
    max_err = float(jnp.max(jnp.abs(logits - ref)))
    assert max_err < 5e-2, f"max abs err vs reference: {max_err}"

    print("KERNEL_OK")
</pallas_src>

<mosaic_0001>
module attributes {stable_mosaic.version = 11 : i64} {
  func.func @_conv_fused_kernel(%arg0: i32, %arg1: memref<1x2x2x196x9xbf16, #tpu.memory_space<vmem>>, %arg2: memref<9x128xbf16, #tpu.memory_space<vmem>>, %arg3: memref<1x128xf32, #tpu.memory_space<vmem>>, %arg4: memref<9x128x64xbf16, #tpu.memory_space<vmem>>, %arg5: memref<1x64xf32, #tpu.memory_space<vmem>>, %arg6: memref<1x192x64xbf16, #tpu.memory_space<vmem>>, %arg7: memref<2x2x196x128xbf16, #tpu.memory_space<vmem>>) attributes {dimension_semantics = [#tpu.dimension_semantics<parallel>], iteration_bounds = array<i64: 2>, scalar_prefetch = 0 : i64, scratch_operands = 1 : i64, tpu.core_type = #tpu.core_type<tc>, window_params = [{transform_indices = @transform_0, window_bounds = array<i64: 1, 2, 2, 196, 9>}, {pipeline_mode = #tpu.pipeline_mode<synchronous>, transform_indices = @transform_1, window_bounds = array<i64: 9, 128>}, {pipeline_mode = #tpu.pipeline_mode<synchronous>, transform_indices = @transform_2, window_bounds = array<i64: 1, 128>}, {pipeline_mode = #tpu.pipeline_mode<synchronous>, transform_indices = @transform_3, window_bounds = array<i64: 9, 128, 64>}, {pipeline_mode = #tpu.pipeline_mode<synchronous>, transform_indices = @transform_4, window_bounds = array<i64: 1, 64>}, {transform_indices = @transform_5, window_bounds = array<i64: 1, 192, 64>}]} {
    %c0 = arith.constant 0 : index
    %c0_0 = arith.constant 0 : index
    %c0_1 = arith.constant 0 : index
    %c0_2 = arith.constant 0 : index
    %c0_3 = arith.constant 0 : index
    %0 = vector.load %arg1[%c0, %c0_0, %c0_1, %c0_2, %c0_3] : memref<1x2x2x196x9xbf16, #tpu.memory_space<vmem>>, vector<1x1x1x196x9xbf16>
    %1 = vector.shape_cast %0 : vector<1x1x1x196x9xbf16> to vector<196x9xbf16>
    %c0_4 = arith.constant 0 : index
    %c0_5 = arith.constant 0 : index
    %2 = vector.load %arg2[%c0_4, %c0_5] : memref<9x128xbf16, #tpu.memory_space<vmem>>, vector<9x128xbf16>
    %cst = arith.constant dense<0.000000e+00> : vector<196x128xf32>
    %3 = tpu.matmul %1, %2, %cst {dimension_numbers = #tpu.dot_dimension_numbers<[1], [0], [0], [1], [0, 0, 1, 1], [], []>} : vector<196x9xbf16>, vector<9x128xbf16>, vector<196x128xf32> -> vector<196x128xf32>
    %c0_6 = arith.constant 0 : index
    %c0_7 = arith.constant 0 : index
    %4 = vector.load %arg3[%c0_6, %c0_7] : memref<1x128xf32, #tpu.memory_space<vmem>>, vector<1x128xf32>
    %5 = vector.broadcast %4 : vector<1x128xf32> to vector<196x128xf32>
    %6 = arith.addf %3, %5 : vector<196x128xf32>
    %cst_8 = arith.constant 0.000000e+00 : f32
    %7 = vector.broadcast %cst_8 : f32 to vector<196x128xf32>
    %8 = arith.maximumf %6, %7 : vector<196x128xf32>
    %9 = arith.truncf %8 : vector<196x128xf32> to vector<196x128xbf16>
    %c0_9 = arith.constant 0 : index
    %c0_10 = arith.constant 0 : index
    %c0_11 = arith.constant 0 : index
    %c0_12 = arith.constant 0 : index
    %10 = vector.load %arg7[%c0_9, %c0_10, %c0_11, %c0_12] : memref<2x2x196x128xbf16, #tpu.memory_space<vmem>>, vector<1x1x196x128xbf16>
    %11 = vector.shape_cast %10 : vector<1x1x196x128xbf16> to vector<196x128xbf16>
    %12 = vector.shape_cast %9 : vector<196x128xbf16> to vector<1x1x196x128xbf16>
    tpu.vector_store %arg7[%c0_9, %c0_10, %c0_11, %c0_12], %12 {strides = array<i32>} : memref<2x2x196x128xbf16, #tpu.memory_space<vmem>>, vector<1x1x196x128xbf16>,
    %c0_13 = arith.constant 0 : index
    %c0_14 = arith.constant 0 : index
    %c1 = arith.constant 1 : index
    %c0_15 = arith.constant 0 : index
    %c0_16 = arith.constant 0 : index
    %13 = vector.load %arg1[%c0_13, %c0_14, %c1, %c0_15, %c0_16] : memref<1x2x2x196x9xbf16, #tpu.memory_space<vmem>>, vector<1x1x1x196x9xbf16>
    %14 = vector.shape_cast %13 : vector<1x1x1x196x9xbf16> to vector<196x9xbf16>
    %c0_17 = arith.constant 0 : index
    %c0_18 = arith.constant 0 : index
    %15 = vector.load %arg2[%c0_17, %c0_18] : memref<9x128xbf16, #tpu.memory_space<vmem>>, vector<9x128xbf16>
    %cst_19 = arith.constant dense<0.000000e+00> : vector<196x128xf32>
    %16 = tpu.matmul %14, %15, %cst_19 {dimension_numbers = #tpu.dot_dimension_numbers<[1], [0], [0], [1], [0, 0, 1, 1], [], []>} : vector<196x9xbf16>, vector<9x128xbf16>, vector<196x128xf32> -> vector<196x128xf32>
    %c0_20 = arith.constant 0 : index
    %c0_21 = arith.constant 0 : index
    %17 = vector.load %arg3[%c0_20, %c0_21] : memref<1x128xf32, #tpu.memory_space<vmem>>, vector<1x128xf32>
    %18 = vector.broadcast %17 : vector<1x128xf32> to vector<196x128xf32>
    %19 = arith.addf %16, %18 : vector<196x128xf32>
    %cst_22 = arith.constant 0.000000e+00 : f32
    %20 = vector.broadcast %cst_22 : f32 to vector<196x128xf32>
    %21 = arith.maximumf %19, %20 : vector<196x128xf32>
    %22 = arith.truncf %21 : vector<196x128xf32> to vector<196x128xbf16>
    %c0_23 = arith.constant 0 : index
    %c1_24 = arith.constant 1 : index
    %c0_25 = arith.constant 0 : index
    %c0_26 = arith.constant 0 : index
    %23 = vector.load %arg7[%c0_23, %c1_24, %c0_25, %c0_26] : memref<2x2x196x128xbf16, #tpu.memory_space<vmem>>, vector<1x1x196x128xbf16>
    %24 = vector.shape_cast %23 : vector<1x1x196x128xbf16> to vector<196x128xbf16>
    %25 = vector.shape_cast %22 : vector<196x128xbf16> to vector<1x1x196x128xbf16>
    tpu.vector_store %arg7[%c0_23, %c1_24, %c0_25, %c0_26], %25 {strides = array<i32>} : memref<2x2x196x128xbf16, #tpu.memory_space<vmem>>, vector<1x1x196x128xbf16>,
    %c0_27 = arith.constant 0 : index
    %c1_28 = arith.constant 1 : index
    %c0_29 = arith.constant 0 : index
    %c0_30 = arith.constant 0 : index
    %c0_31 = arith.constant 0 : index
    %26 = vector.load %arg1[%c0_27, %c1_28, %c0_29, %c0_30, %c0_31] : memref<1x2x2x196x9xbf16, #tpu.memory_space<vmem>>, vector<1x1x1x196x9xbf16>
    %27 = vector.shape_cast %26 : vector<1x1x1x196x9xbf16> to vector<196x9xbf16>
    %c0_32 = arith.constant 0 : index
    %c0_33 = arith.constant 0 : index
    %28 = vector.load %arg2[%c0_32, %c0_33] : memref<9x128xbf16, #tpu.memory_space<vmem>>, vector<9x128xbf16>
    %cst_34 = arith.constant dense<0.000000e+00> : vector<196x128xf32>
    %29 = tpu.matmul %27, %28, %cst_34 {dimension_numbers = #tpu.dot_dimension_numbers<[1], [0], [0], [1], [0, 0, 1, 1], [], []>} : vector<196x9xbf16>, vector<9x128xbf16>, vector<196x128xf32> -> vector<196x128xf32>
    %c0_35 = arith.constant 0 : index
    %c0_36 = arith.constant 0 : index
    %30 = vector.load %arg3[%c0_35, %c0_36] : memref<1x128xf32, #tpu.memory_space<vmem>>, vector<1x128xf32>
    %31 = vector.broadcast %30 : vector<1x128xf32> to vector<196x128xf32>
    %32 = arith.addf %29, %31 : vector<196x128xf32>
    %cst_37 = arith.constant 0.000000e+00 : f32
    %33 = vector.broadcast %cst_37 : f32 to vector<196x128xf32>
    %34 = arith.maximumf %32, %33 : vector<196x128xf32>
    %35 = arith.truncf %34 : vector<196x128xf32> to vector<196x128xbf16>
    %c1_38 = arith.constant 1 : index
    %c0_39 = arith.constant 0 : index
    %c0_40 = arith.constant 0 : index
    %c0_41 = arith.constant 0 : index
    %36 = vector.load %arg7[%c1_38, %c0_39, %c0_40, %c0_41] : memref<2x2x196x128xbf16, #tpu.memory_space<vmem>>, vector<1x1x196x128xbf16>
    %37 = vector.shape_cast %36 : vector<1x1x196x128xbf16> to vector<196x128xbf16>
    %38 = vector.shape_cast %35 : vector<196x128xbf16> to vector<1x1x196x128xbf16>
    tpu.vector_store %arg7[%c1_38, %c0_39, %c0_40, %c0_41], %38 {strides = array<i32>} : memref<2x2x196x128xbf16, #tpu.memory_space<vmem>>, vector<1x1x196x128xbf16>,
    %c0_42 = arith.constant 0 : index
    %c1_43 = arith.constant 1 : index
    %c1_44 = arith.constant 1 : index
    %c0_45 = arith.constant 0 : index
    %c0_46 = arith.constant 0 : index
    %39 = vector.load %arg1[%c0_42, %c1_43, %c1_44, %c0_45, %c0_46] : memref<1x2x2x196x9xbf16, #tpu.memory_space<vmem>>, vector<1x1x1x196x9xbf16>
    %40 = vector.shape_cast %39 : vector<1x1x1x196x9xbf16> to vector<196x9xbf16>
    %c0_47 = arith.constant 0 : index
    %c0_48 = arith.constant 0 : index
    %41 = vector.load %arg2[%c0_47, %c0_48] : memref<9x128xbf16, #tpu.memory_space<vmem>>, vector<9x128xbf16>
    %cst_49 = arith.constant dense<0.000000e+00> : vector<196x128xf32>
    %42 = tpu.matmul %40, %41, %cst_49 {dimension_numbers = #tpu.dot_dimension_numbers<[1], [0], [0], [1], [0, 0, 1, 1], [], []>} : vector<196x9xbf16>, vector<9x128xbf16>, vector<196x128xf32> -> vector<196x128xf32>
    %c0_50 = arith.constant 0 : index
    %c0_51 = arith.constant 0 : index
    %43 = vector.load %arg3[%c0_50, %c0_51] : memref<1x128xf32, #tpu.memory_space<vmem>>, vector<1x128xf32>
    %44 = vector.broadcast %43 : vector<1x128xf32> to vector<196x128xf32>
    %45 = arith.addf %42, %44 : vector<196x128xf32>
    %cst_52 = arith.constant 0.000000e+00 : f32
    %46 = vector.broadcast %cst_52 : f32 to vector<196x128xf32>
    %47 = arith.maximumf %45, %46 : vector<196x128xf32>
    %48 = arith.truncf %47 : vector<196x128xf32> to vector<196x128xbf16>
    %c1_53 = arith.constant 1 : index
    %c1_54 = arith.constant 1 : index
    %c0_55 = arith.constant 0 : index
    %c0_56 = arith.constant 0 : index
    %49 = vector.load %arg7[%c1_53, %c1_54, %c0_55, %c0_56] : memref<2x2x196x128xbf16, #tpu.memory_space<vmem>>, vector<1x1x196x128xbf16>
    %50 = vector.shape_cast %49 : vector<1x1x196x128xbf16> to vector<196x128xbf16>
    %51 = vector.shape_cast %48 : vector<196x128xbf16> to vector<1x1x196x128xbf16>
    tpu.vector_store %arg7[%c1_53, %c1_54, %c0_55, %c0_56], %51 {strides = array<i32>} : memref<2x2x196x128xbf16, #tpu.memory_space<vmem>>, vector<1x1x196x128xbf16>,
    %cst_57 = arith.constant 0.000000e+00 : f32
    %52 = vector.broadcast %cst_57 : f32 to vector<181x64xf32>
    %c0_58 = arith.constant 0 : index
    %c0_59 = arith.constant 0 : index
    %c0_60 = arith.constant 0 : index
    %c0_61 = arith.constant 0 : index
    %53 = vector.load %arg7[%c0_58, %c0_59, %c0_60, %c0_61] : memref<2x2x196x128xbf16, #tpu.memory_space<vmem>>, vector<1x1x181x128xbf16>
    %54 = vector.shape_cast %53 : vector<1x1x181x128xbf16> to vector<181x128xbf16>
    %c0_62 = arith.constant 0 : index
    %c0_63 = arith.constant 0 : index
    %c0_64 = arith.constant 0 : index
    %55 = vector.load %arg4[%c0_62, %c0_63, %c0_64] : memref<9x128x64xbf16, #tpu.memory_space<vmem>>, vector<1x128x64xbf16>
    %56 = vector.shape_cast %55 : vector<1x128x64xbf16> to vector<128x64xbf16>
    %cst_65 = arith.constant dense<0.000000e+00> : vector<181x64xf32>
    %57 = tpu.matmul %54, %56, %cst_65 {dimension_numbers = #tpu.dot_dimension_numbers<[1], [0], [0], [1], [0, 0, 1, 1], [], []>} : vector<181x128xbf16>, vector<128x64xbf16>, vector<181x64xf32> -> vector<181x64xf32>
    %58 = arith.addf %52, %57 : vector<181x64xf32>
    %c0_66 = arith.constant 0 : index
    %c1_67 = arith.constant 1 : index
    %c0_68 = arith.constant 0 : index
    %c0_69 = arith.constant 0 : index
    %59 = vector.load %arg7[%c0_66, %c1_67, %c0_68, %c0_69] : memref<2x2x196x128xbf16, #tpu.memory_space<vmem>>, vector<1x1x181x128xbf16>
    %60 = vector.shape_cast %59 : vector<1x1x181x128xbf16> to vector<181x128xbf16>
    %c1_70 = arith.constant 1 : index
    %c0_71 = arith.constant 0 : index
    %c0_72 = arith.constant 0 : index
    %61 = vector.load %arg4[%c1_70, %c0_71, %c0_72] : memref<9x128x64xbf16, #tpu.memory_space<vmem>>, vector<1x128x64xbf16>
    %62 = vector.shape_cast %61 : vector<1x128x64xbf16> to vector<128x64xbf16>
    %cst_73 = arith.constant dense<0.000000e+00> : vector<181x64xf32>
    %63 = tpu.matmul %60, %62, %cst_73 {dimension_numbers = #tpu.dot_dimension_numbers<[1], [0], [0], [1], [0, 0, 1, 1], [], []>} : vector<181x128xbf16>, vector<128x64xbf16>, vector<181x64xf32> -> vector<181x64xf32>
    %64 = arith.addf %58, %63 : vector<181x64xf32>
    %c0_74 = arith.constant 0 : index
    %c0_75 = arith.constant 0 : index
    %c1_76 = arith.constant 1 : index
    %c0_77 = arith.constant 0 : index
    %65 = vector.load %arg7[%c0_74, %c0_75, %c1_76, %c0_77] : memref<2x2x196x128xbf16, #tpu.memory_space<vmem>>, vector<1x1x181x128xbf16>
    %66 = vector.shape_cast %65 : vector<1x1x181x128xbf16> to vector<181x128xbf16>
    %c2 = arith.constant 2 : index
    %c0_78 = arith.constant 0 : index
    %c0_79 = arith.constant 0 : index
    %67 = vector.load %arg4[%c2, %c0_78, %c0_79] : memref<9x128x64xbf16, #tpu.memory_space<vmem>>, vector<1x128x64xbf16>
    %68 = vector.shape_cast %67 : vector<1x128x64xbf16> to vector<128x64xbf16>
    %cst_80 = arith.constant dense<0.000000e+00> : vector<181x64xf32>
    %69 = tpu.matmul %66, %68, %cst_80 {dimension_numbers = #tpu.dot_dimension_numbers<[1], [0], [0], [1], [0, 0, 1, 1], [], []>} : vector<181x128xbf16>, vector<128x64xbf16>, vector<181x64xf32> -> vector<181x64xf32>
    %70 = arith.addf %64, %69 : vector<181x64xf32>
    %c1_81 = arith.constant 1 : index
    %c0_82 = arith.constant 0 : index
    %c0_83 = arith.constant 0 : index
    %c0_84 = arith.constant 0 : index
    %71 = vector.load %arg7[%c1_81, %c0_82, %c0_83, %c0_84] : memref<2x2x196x128xbf16, #tpu.memory_space<vmem>>, vector<1x1x181x128xbf16>
    %72 = vector.shape_cast %71 : vector<1x1x181x128xbf16> to vector<181x128xbf16>
    %c3 = arith.constant 3 : index
    %c0_85 = arith.constant 0 : index
    %c0_86 = arith.constant 0 : index
    %73 = vector.load %arg4[%c3, %c0_85, %c0_86] : memref<9x128x64xbf16, #tpu.memory_space<vmem>>, vector<1x128x64xbf16>
    %74 = vector.shape_cast %73 : vector<1x128x64xbf16> to vector<128x64xbf16>
    %cst_87 = arith.constant dense<0.000000e+00> : vector<181x64xf32>
    %75 = tpu.matmul %72, %74, %cst_87 {dimension_numbers = #tpu.dot_dimension_numbers<[1], [0], [0], [1], [0, 0, 1, 1], [], []>} : vector<181x128xbf16>, vector<128x64xbf16>, vector<181x64xf32> -> vector<181x64xf32>
    %76 = arith.addf %70, %75 : vector<181x64xf32>
    %c1_88 = arith.constant 1 : index
    %c1_89 = arith.constant 1 : index
    %c0_90 = arith.constant 0 : index
    %c0_91 = arith.constant 0 : index
    %77 = vector.load %arg7[%c1_88, %c1_89, %c0_90, %c0_91] : memref<2x2x196x128xbf16, #tpu.memory_space<vmem>>, vector<1x1x181x128xbf16>
    %78 = vector.shape_cast %77 : vector<1x1x181x128xbf16> to vector<181x128xbf16>
    %c4 = arith.constant 4 : index
    %c0_92 = arith.constant 0 : index
    %c0_93 = arith.constant 0 : index
    %79 = vector.load %arg4[%c4, %c0_92, %c0_93] : memref<9x128x64xbf16, #tpu.memory_space<vmem>>, vector<1x128x64xbf16>
    %80 = vector.shape_cast %79 : vector<1x128x64xbf16> to vector<128x64xbf16>
    %cst_94 = arith.constant dense<0.000000e+00> : vector<181x64xf32>
    %81 = tpu.matmul %78, %80, %cst_94 {dimension_numbers = #tpu.dot_dimension_numbers<[1], [0], [0], [1], [0, 0, 1, 1], [], []>} : vector<181x128xbf16>, vector<128x64xbf16>, vector<181x64xf32> -> vector<181x64xf32>
    %82 = arith.addf %76, %81 : vector<181x64xf32>
    %c1_95 = arith.constant 1 : index
    %c0_96 = arith.constant 0 : index
    %c1_97 = arith.constant 1 : index
    %c0_98 = arith.constant 0 : index
    %83 = vector.load %arg7[%c1_95, %c0_96, %c1_97, %c0_98] : memref<2x2x196x128xbf16, #tpu.memory_space<vmem>>, vector<1x1x181x128xbf16>
    %84 = vector.shape_cast %83 : vector<1x1x181x128xbf16> to vector<181x128xbf16>
    %c5 = arith.constant 5 : index
    %c0_99 = arith.constant 0 : index
    %c0_100 = arith.constant 0 : index
    %85 = vector.load %arg4[%c5, %c0_99, %c0_100] : memref<9x128x64xbf16, #tpu.memory_space<vmem>>, vector<1x128x64xbf16>
    %86 = vector.shape_cast %85 : vector<1x128x64xbf16> to vector<128x64xbf16>
    %cst_101 = arith.constant dense<0.000000e+00> : vector<181x64xf32>
    %87 = tpu.matmul %84, %86, %cst_101 {dimension_numbers = #tpu.dot_dimension_numbers<[1], [0], [0], [1], [0, 0, 1, 1], [], []>} : vector<181x128xbf16>, vector<128x64xbf16>, vector<181x64xf32> -> vector<181x64xf32>
    %88 = arith.addf %82, %87 : vector<181x64xf32>
    %c0_102 = arith.constant 0 : index
    %c0_103 = arith.constant 0 : index
    %c14 = arith.constant 14 : index
    %c0_104 = arith.constant 0 : index
    %89 = vector.load %arg7[%c0_102, %c0_103, %c14, %c0_104] : memref<2x2x196x128xbf16, #tpu.memory_space<vmem>>, vector<1x1x181x128xbf16>
    %90 = vector.shape_cast %89 : vector<1x1x181x128xbf16> to vector<181x128xbf16>
    %c6 = arith.constant 6 : index
    %c0_105 = arith.constant 0 : index
    %c0_106 = arith.constant 0 : index
    %91 = vector.load %arg4[%c6, %c0_105, %c0_106] : memref<9x128x64xbf16, #tpu.memory_space<vmem>>, vector<1x128x64xbf16>
    %92 = vector.shape_cast %91 : vector<1x128x64xbf16> to vector<128x64xbf16>
    %cst_107 = arith.constant dense<0.000000e+00> : vector<181x64xf32>
    %93 = tpu.matmul %90, %92, %cst_107 {dimension_numbers = #tpu.dot_dimension_numbers<[1], [0], [0], [1], [0, 0, 1, 1], [], []>} : vector<181x128xbf16>, vector<128x64xbf16>, vector<181x64xf32> -> vector<181x64xf32>
    %94 = arith.addf %88, %93 : vector<181x64xf32>
    %c0_108 = arith.constant 0 : index
    %c1_109 = arith.constant 1 : index
    %c14_110 = arith.constant 14 : index
    %c0_111 = arith.constant 0 : index
    %95 = vector.load %arg7[%c0_108, %c1_109, %c14_110, %c0_111] : memref<2x2x196x128xbf16, #tpu.memory_space<vmem>>, vector<1x1x181x128xbf16>
    %96 = vector.shape_cast %95 : vector<1x1x181x128xbf16> to vector<181x128xbf16>
    %c7 = arith.constant 7 : index
    %c0_112 = arith.constant 0 : index
    %c0_113 = arith.constant 0 : index
    %97 = vector.load %arg4[%c7, %c0_112, %c0_113] : memref<9x128x64xbf16, #tpu.memory_space<vmem>>, vector<1x128x64xbf16>
    %98 = vector.shape_cast %97 : vector<1x128x64xbf16> to vector<128x64xbf16>
    %cst_114 = arith.constant dense<0.000000e+00> : vector<181x64xf32>
    %99 = tpu.matmul %96, %98, %cst_114 {dimension_numbers = #tpu.dot_dimension_numbers<[1], [0], [0], [1], [0, 0, 1, 1], [], []>} : vector<181x128xbf16>, vector<128x64xbf16>, vector<181x64xf32> -> vector<181x64xf32>
    %100 = arith.addf %94, %99 : vector<181x64xf32>
    %c0_115 = arith.constant 0 : index
    %c0_116 = arith.constant 0 : index
    %c15 = arith.constant 15 : index
    %c0_117 = arith.constant 0 : index
    %101 = vector.load %arg7[%c0_115, %c0_116, %c15, %c0_117] : memref<2x2x196x128xbf16, #tpu.memory_space<vmem>>, vector<1x1x181x128xbf16>
    %102 = vector.shape_cast %101 : vector<1x1x181x128xbf16> to vector<181x128xbf16>
    %c8 = arith.constant 8 : index
    %c0_118 = arith.constant 0 : index
    %c0_119 = arith.constant 0 : index
    %103 = vector.load %arg4[%c8, %c0_118, %c0_119] : memref<9x128x64xbf16, #tpu.memory_space<vmem>>, vector<1x128x64xbf16>
    %104 = vector.shape_cast %103 : vector<1x128x64xbf16> to vector<128x64xbf16>
    %cst_120 = arith.constant dense<0.000000e+00> : vector<181x64xf32>
    %105 = tpu.matmul %102, %104, %cst_120 {dimension_numbers = #tpu.dot_dimension_numbers<[1], [0], [0], [1], [0, 0, 1, 1], [], []>} : vector<181x128xbf16>, vector<128x64xbf16>, vector<181x64xf32> -> vector<181x64xf32>
    %106 = arith.addf %100, %105 : vector<181x64xf32>
    %c0_121 = arith.constant 0 : index
    %c0_122 = arith.constant 0 : index
    %107 = vector.load %arg5[%c0_121, %c0_122] : memref<1x64xf32, #tpu.memory_space<vmem>>, vector<1x64xf32>
    %108 = vector.broadcast %107 : vector<1x64xf32> to vector<181x64xf32>
    %109 = arith.addf %106, %108 : vector<181x64xf32>
    %cst_123 = arith.constant 0.000000e+00 : f32
    %110 = vector.broadcast %cst_123 : f32 to vector<181x64xf32>
    %111 = arith.maximumf %109, %110 : vector<181x64xf32>
    %112 = arith.truncf %111 : vector<181x64xf32> to vector<181x64xbf16>
    %c0_124 = arith.constant 0 : index
    %c0_125 = arith.constant 0 : index
    %c0_126 = arith.constant 0 : index
    %113 = vector.load %arg6[%c0_124, %c0_125, %c0_126] : memref<1x192x64xbf16, #tpu.memory_space<vmem>>, vector<1x181x64xbf16>
    %114 = vector.shape_cast %113 : vector<1x181x64xbf16> to vector<181x64xbf16>
    %115 = vector.shape_cast %112 : vector<181x64xbf16> to vector<1x181x64xbf16>
    tpu.vector_store %arg6[%c0_124, %c0_125, %c0_126], %115 {strides = array<i32>} : memref<1x192x64xbf16, #tpu.memory_space<vmem>>, vector<1x181x64xbf16>,
    %cst_127 = arith.constant 0.000000e+00 : bf16
    %116 = vector.broadcast %cst_127 : bf16 to vector<11x64xbf16>
    %c0_128 = arith.constant 0 : index
    %c181 = arith.constant 181 : index
    %c0_129 = arith.constant 0 : index
    %117 = vector.load %arg6[%c0_128, %c181, %c0_129] : memref<1x192x64xbf16, #tpu.memory_space<vmem>>, vector<1x11x64xbf16>
    %118 = vector.shape_cast %117 : vector<1x11x64xbf16> to vector<11x64xbf16>
    %119 = vector.shape_cast %116 : vector<11x64xbf16> to vector<1x11x64xbf16>
    tpu.vector_store %arg6[%c0_128, %c181, %c0_129], %119 {strides = array<i32>} : memref<1x192x64xbf16, #tpu.memory_space<vmem>>, vector<1x11x64xbf16>,
    return
  }
  func.func @transform_0(%arg0: i32) -> (i32, i32, i32, i32, i32) {
    %c0_i32 = arith.constant 0 : i32
    %c0_i32_0 = arith.constant 0 : i32
    %c0_i32_1 = arith.constant 0 : i32
    %c0_i32_2 = arith.constant 0 : i32
    %c0_i32_3 = arith.constant 0 : i32
    return %arg0, %c0_i32, %c0_i32_0, %c0_i32_1, %c0_i32_2 : i32, i32, i32, i32, i32
  }
  func.func @transform_1(%arg0: i32) -> (i32, i32) {
    %c0_i32 = arith.constant 0 : i32
    %c0_i32_0 = arith.constant 0 : i32
    %c0_i32_1 = arith.constant 0 : i32
    return %c0_i32, %c0_i32_0 : i32, i32
  }
  func.func @transform_2(%arg0: i32) -> (i32, i32) {
    %c0_i32 = arith.constant 0 : i32
    %c0_i32_0 = arith.constant 0 : i32
    %c0_i32_1 = arith.constant 0 : i32
    return %c0_i32, %c0_i32_0 : i32, i32
  }
  func.func @transform_3(%arg0: i32) -> (i32, i32, i32) {
    %c0_i32 = arith.constant 0 : i32
    %c0_i32_0 = arith.constant 0 : i32
    %c0_i32_1 = arith.constant 0 : i32
    %c0_i32_2 = arith.constant 0 : i32
    return %c0_i32, %c0_i32_0, %c0_i32_1 : i32, i32, i32
  }
  func.func @transform_4(%arg0: i32) -> (i32, i32) {
    %c0_i32 = arith.constant 0 : i32
    %c0_i32_0 = arith.constant 0 : i32
    %c0_i32_1 = arith.constant 0 : i32
    return %c0_i32, %c0_i32_0 : i32, i32
  }
  func.func @transform_5(%arg0: i32) -> (i32, i32, i32) {
    %c0_i32 = arith.constant 0 : i32
    %c0_i32_0 = arith.constant 0 : i32
    %c0_i32_1 = arith.constant 0 : i32
    return %arg0, %c0_i32, %c0_i32_0 : i32, i32, i32
  }
}

module attributes {stable_mosaic.version = 11 : i64} {
  func.func @_fc_fused_kernel(%arg0: i32, %arg1: i32, %arg2: memref<16x2048xbf16, #tpu.memory_space<vmem>>, %arg3: memref<2048x128xbf16, #tpu.memory_space<vmem>>, %arg4: memref<1x128xf32, #tpu.memory_space<vmem>>, %arg5: memref<128x10xf32, #tpu.memory_space<vmem>>, %arg6: memref<1x10xf32, #tpu.memory_space<vmem>>, %arg7: memref<16x10xf32, #tpu.memory_space<vmem>>, %arg8: memref<16x128xf32, #tpu.memory_space<vmem>>) attributes {dimension_semantics = [#tpu.dimension_semantics<parallel>, #tpu.dimension_semantics<arbitrary>], iteration_bounds = array<i64: 1, 6>, scalar_prefetch = 0 : i64, scratch_operands = 1 : i64, tpu.core_type = #tpu.core_type<tc>, window_params = [{transform_indices = @transform_0, window_bounds = array<i64: 16, 2048>}, {transform_indices = @transform_1, window_bounds = array<i64: 2048, 128>}, {pipeline_mode = #tpu.pipeline_mode<synchronous>, transform_indices = @transform_2, window_bounds = array<i64: 1, 128>}, {pipeline_mode = #tpu.pipeline_mode<synchronous>, transform_indices = @transform_3, window_bounds = array<i64: 128, 10>}, {pipeline_mode = #tpu.pipeline_mode<synchronous>, transform_indices = @transform_4, window_bounds = array<i64: 1, 10>}, {transform_indices = @transform_5, window_bounds = array<i64: 16, 10>}]} {
    %c0_i32 = arith.constant 0 : i32
    %0 = arith.cmpi eq, %arg1, %c0_i32 : i32
    %1 = arith.extui %0 : i1 to i32
    %c0_i32_0 = arith.constant 0 : i32
    %2 = arith.cmpi ne, %1, %c0_i32_0 : i32
    scf.if %2 {
      %cst_9 = arith.constant 0.000000e+00 : f32
      %12 = vector.broadcast %cst_9 : f32 to vector<16x128xf32>
      %c0_10 = arith.constant 0 : index
      %c0_11 = arith.constant 0 : index
      %13 = vector.load %arg8[%c0_10, %c0_11] : memref<16x128xf32, #tpu.memory_space<vmem>>, vector<16x128xf32>
      tpu.vector_store %arg8[%c0_10, %c0_11], %12 {strides = array<i32>} : memref<16x128xf32, #tpu.memory_space<vmem>>, vector<16x128xf32>,
    } else {
    }
    %c0 = arith.constant 0 : index
    %c0_1 = arith.constant 0 : index
    %3 = vector.load %arg8[%c0, %c0_1] : memref<16x128xf32, #tpu.memory_space<vmem>>, vector<16x128xf32>
    %c0_2 = arith.constant 0 : index
    %c0_3 = arith.constant 0 : index
    %4 = vector.load %arg2[%c0_2, %c0_3] : memref<16x2048xbf16, #tpu.memory_space<vmem>>, vector<16x2048xbf16>
    %c0_4 = arith.constant 0 : index
    %c0_5 = arith.constant 0 : index
    %5 = vector.load %arg3[%c0_4, %c0_5] : memref<2048x128xbf16, #tpu.memory_space<vmem>>, vector<2048x128xbf16>
    %cst = arith.constant dense<0.000000e+00> : vector<16x128xf32>
    %6 = tpu.matmul %4, %5, %cst {dimension_numbers = #tpu.dot_dimension_numbers<[1], [0], [0], [1], [0, 0, 1, 1], [], []>} : vector<16x2048xbf16>, vector<2048x128xbf16>, vector<16x128xf32> -> vector<16x128xf32>
    %7 = arith.addf %3, %6 : vector<16x128xf32>
    %c0_6 = arith.constant 0 : index
    %c0_7 = arith.constant 0 : index
    %8 = vector.load %arg8[%c0_6, %c0_7] : memref<16x128xf32, #tpu.memory_space<vmem>>, vector<16x128xf32>
    tpu.vector_store %arg8[%c0_6, %c0_7], %7 {strides = array<i32>} : memref<16x128xf32, #tpu.memory_space<vmem>>, vector<16x128xf32>,
    %c5_i32 = arith.constant 5 : i32
    %9 = arith.cmpi eq, %arg1, %c5_i32 : i32
    %10 = arith.extui %9 : i1 to i32
    %c0_i32_8 = arith.constant 0 : i32
    %11 = arith.cmpi ne, %10, %c0_i32_8 : i32
    scf.if %11 {
      %c0_9 = arith.constant 0 : index
      %c0_10 = arith.constant 0 : index
      %12 = vector.load %arg8[%c0_9, %c0_10] : memref<16x128xf32, #tpu.memory_space<vmem>>, vector<16x128xf32>
      %c0_11 = arith.constant 0 : index
      %c0_12 = arith.constant 0 : index
      %13 = vector.load %arg4[%c0_11, %c0_12] : memref<1x128xf32, #tpu.memory_space<vmem>>, vector<1x128xf32>
      %14 = vector.broadcast %13 : vector<1x128xf32> to vector<16x128xf32>
      %15 = arith.addf %12, %14 : vector<16x128xf32>
      %cst_13 = arith.constant 0.000000e+00 : f32
      %16 = vector.broadcast %cst_13 : f32 to vector<16x128xf32>
      %17 = arith.maximumf %15, %16 : vector<16x128xf32>
      %c0_14 = arith.constant 0 : index
      %c0_15 = arith.constant 0 : index
      %18 = vector.load %arg5[%c0_14, %c0_15] : memref<128x10xf32, #tpu.memory_space<vmem>>, vector<128x10xf32>
      %cst_16 = arith.constant dense<0.000000e+00> : vector<16x10xf32>
      %19 = tpu.matmul %17, %18, %cst_16 {dimension_numbers = #tpu.dot_dimension_numbers<[1], [0], [0], [1], [0, 0, 1, 1], [], []>} : vector<16x128xf32>, vector<128x10xf32>, vector<16x10xf32> -> vector<16x10xf32>
      %c0_17 = arith.constant 0 : index
      %c0_18 = arith.constant 0 : index
      %20 = vector.load %arg6[%c0_17, %c0_18] : memref<1x10xf32, #tpu.memory_space<vmem>>, vector<1x10xf32>
      %21 = vector.broadcast %20 : vector<1x10xf32> to vector<16x10xf32>
      %22 = arith.addf %19, %21 : vector<16x10xf32>
      %c0_19 = arith.constant 0 : index
      %c0_20 = arith.constant 0 : index
      %23 = vector.load %arg7[%c0_19, %c0_20] : memref<16x10xf32, #tpu.memory_space<vmem>>, vector<16x10xf32>
      tpu.vector_store %arg7[%c0_19, %c0_20], %22 {strides = array<i32>} : memref<16x10xf32, #tpu.memory_space<vmem>>, vector<16x10xf32>,
    } else {
    }
    return
  }
  func.func @transform_0(%arg0: i32, %arg1: i32) -> (i32, i32) {
    %c0_i32 = arith.constant 0 : i32
    return %arg0, %arg1 : i32, i32
  }
  func.func @transform_1(%arg0: i32, %arg1: i32) -> (i32, i32) {
    %c0_i32 = arith.constant 0 : i32
    %c0_i32_0 = arith.constant 0 : i32
    return %arg1, %c0_i32 : i32, i32
  }
  func.func @transform_2(%arg0: i32, %arg1: i32) -> (i32, i32) {
    %c0_i32 = arith.constant 0 : i32
    %c0_i32_0 = arith.constant 0 : i32
    %c0_i32_1 = arith.constant 0 : i32
    return %c0_i32, %c0_i32_0 : i32, i32
  }
  func.func @transform_3(%arg0: i32, %arg1: i32) -> (i32, i32) {
    %c0_i32 = arith.constant 0 : i32
    %c0_i32_0 = arith.constant 0 : i32
    %c0_i32_1 = arith.constant 0 : i32
    return %c0_i32, %c0_i32_0 : i32, i32
  }
  func.func @transform_4(%arg0: i32, %arg1: i32) -> (i32, i32) {
    %c0_i32 = arith.constant 0 : i32
    %c0_i32_0 = arith.constant 0 : i32
    %c0_i32_1 = arith.constant 0 : i32
    return %c0_i32, %c0_i32_0 : i32, i32
  }
  func.func @transform_5(%arg0: i32, %arg1: i32) -> (i32, i32) {
    %c0_i32 = arith.constant 0 : i32
    %c0_i32_0 = arith.constant 0 : i32
    return %arg0, %c0_i32 : i32, i32
  }
}

</mosaic_0001>

<llo_original>
// kernel: classifier_c_forward.3
$region0: #{classifier_c_forward.3}
  #allocation0 [shape = 'u32[]', space=smem, size = 0x4, offset = 0x4, fixed_abs, tag = 'smem constant byte address 0x4 - core index']
  #allocation1 [shape = 'u32[72,128]{1,0:T(1,128)}', space=vmem, size = 0x9000, scoped, tag = 'internal scratch']
  #allocation2 [shape = 'f32[16,128]{1,0:T(8,128)}', space=vmem, size = 0x2000, scoped, tag = 'scratch operand']
  %s0 = inlined_call_operand.vmem [shape: bf16[16,12288], index: 0, kind: input, shape index: {}]
  %s1 = inlined_call_operand.vmem [shape: bf16[12288,128], index: 1, kind: input, shape index: {}]
  %s2 = inlined_call_operand.vmem [shape: f32[1,128], index: 2, kind: input, shape index: {}]
  %s3 = inlined_call_operand.vmem [shape: f32[128,10], index: 3, kind: input, shape index: {}]
  %s4 = inlined_call_operand.vmem [shape: f32[1,10], index: 4, kind: input, shape index: {}]
  %s5 = inlined_call_operand.vmem [shape: f32[16,10], index: 5, kind: output, shape index: {}]
  %s6 = sld [smem:[#allocation0]]
  $region84: #{classifier_c_forward.3} parent=0
    _
  %s8 = ssub.s32 1, %s6
  %s9 = scalar_select 0, %s8, %s6
  $region1: #{classifier_c_forward.3} parent=0
    #allocation3 [shape = 'u8[131072]{0}', space=vmem, size = 0x20000, scoped, tag = 'input window, operand 0']
    loop: start=0, step=1, limit=8
    $region2: #{classifier_c_forward.3} parent=1 // loop_pre_header
      _
    $region3: #{classifier_c_forward.3} parent=1 // loop_header
      %s11 = sphi 0, %s15
      %p12 = scmp.ge.s32.totalorder %s11, 8
      %s18 = sphi 0, %s30
      %s19 = sphi 0, %s26
      %s20 = sphi 0, %s18
      %s21 = sphi 0, %s19
      %s22 = sphi 0, %s20
      %s23 = sphi 0, %s21
      %s35 = sphi 0, %s37
      %s38 = sphi 0, %s35
      %s39 = sphi 0, %s38
      %s55 = sphi 0, %s39
      %s61 = sphi 0, %s63
      %s64 = sphi 0, %s61
      %s65 = sphi 0, %s64
      %s81 = sphi 0, %s65
      %s85 = sphi 0, %s85
      %s87 = sphi 0, %s85
      %s88 = sphi 0, %s87
      %s102 = sphi 0, %s88
      %s106 = sphi 0, %s106
      %s108 = sphi 0, %s106
      %s109 = sphi 0, %s108
      %s123 = sphi 0, %s109
      %s127 = sphi 0, %s127
      %s129 = sphi 0, %s127
      %s130 = sphi 0, %s129
      %s144 = sphi 0, %s130
      %s150 = sphi 0, %s152
      %s153 = sphi 0, %s150
      %s154 = sphi 0, %s153
      %s170 = sphi 0, %s154
    $region4: #{classifier_c_forward.3} parent=1 // loop_header_branch
      %14 = sbr.rel (%p12) target = $region8
    $region5: #{classifier_c_forward.3} parent=1 // loop_body
      %s16 = ssub.s32 %s11, 1
      %s17 = ssub.s32 %s11, 2
      %s24 = sadd.s32 1, %s19
      %p25 = scmp.ge.s32.totalorder %s24, 6
      %s26 = scalar_select %p25, 0, %s24
      %s27 = sadd.s32 1, %s18
      %s28 = scalar_select %p25, %s27, %s18
      %p29 = scmp.ge.s32.totalorder %s28, 1
      %s30 = scalar_select %p29, 0, %s28
      %s31 = ssub.s32 %s18, %s30
      %s32 = ssub.s32 %s19, %s26
      %s33 = sor.u32 %s31, %s32
      %p34 = scmp.eq.s32.totalorder %s33, 0
      %s36 = sadd.s32 %s35, 1
      %s37 = scalar_select %p34, %s35, %s36
      %p40 = pneg %p34
      %p41 = scmp.eq.s32.totalorder %s11, 5
      %p42 = por %p40, %p41
      %p43 = scmp.ne.s32.totalorder %s35, %s38
      %p44 = scmp.eq.s32.totalorder %s11, 0
      %p45 = por %p43, %p44
      %p46 = scmp.ne.s32.totalorder %s35, %s38
      %p47 = scmp.eq.s32.totalorder %s16, 5
      %p48 = por %p46, %p47
      %p49 = scmp.ne.s32.totalorder %s38, %s39
      %p50 = scmp.eq.s32.totalorder %s16, 0
      %p51 = por %p49, %p50
      %p52 = scmp.ne.s32.totalorder %s38, %s39
      %p53 = scmp.eq.s32.totalorder %s17, 5
      %p54 = por %p52, %p53
      %p56 = scmp.ne.s32.totalorder %s39, %s55
      %p57 = scmp.eq.s32.totalorder %s17, 0
      %p58 = por %p56, %p57
      %s59 = ssub.s32 %s19, %s26
      %p60 = scmp.eq.s32.totalorder %s59, 0
      %s62 = sadd.s32 %s61, 1
      %s63 = scalar_select %p60, %s61, %s62
      %p66 = pneg %p60
      %p67 = scmp.eq.s32.totalorder %s11, 5
      %p68 = por %p66, %p67
      %p69 = scmp.ne.s32.totalorder %s61, %s64
      %p70 = scmp.eq.s32.totalorder %s11, 0
      %p71 = por %p69, %p70
      %p72 = scmp.ne.s32.totalorder %s61, %s64
      %p73 = scmp.eq.s32.totalorder %s16, 5
      %p74 = por %p72, %p73
      %p75 = scmp.ne.s32.totalorder %s64, %s65
      %p76 = scmp.eq.s32.totalorder %s16, 0
      %p77 = por %p75, %p76
      %p78 = scmp.ne.s32.totalorder %s64, %s65
      %p79 = scmp.eq.s32.totalorder %s17, 5
      %p80 = por %p78, %p79
      %p82 = scmp.ne.s32.totalorder %s65, %s81
      %p83 = scmp.eq.s32.totalorder %s17, 0
      %p84 = por %p82, %p83
      %s86 = sadd.s32 %s85, 1
      %p89 = scmp.eq.s32.totalorder %s11, 5
      %p90 = scmp.ne.s32.totalorder %s85, %s87
      %p91 = scmp.eq.s32.totalorder %s11, 0
      %p92 = por %p90, %p91
      %p93 = scmp.ne.s32.totalorder %s85, %s87
      %p94 = scmp.eq.s32.totalorder %s16, 5
      %p95 = por %p93, %p94
      %p96 = scmp.ne.s32.totalorder %s87, %s88
      %p97 = scmp.eq.s32.totalorder %s16, 0
      %p98 = por %p96, %p97
      %p99 = scmp.ne.s32.totalorder %s87, %s88
      %p100 = scmp.eq.s32.totalorder %s17, 5
      %p101 = por %p99, %p100
      %p103 = scmp.ne.s32.totalorder %s88, %s102
      %p104 = scmp.eq.s32.totalorder %s17, 0
      %p105 = por %p103, %p104
      %s107 = sadd.s32 %s106, 1
      %p110 = scmp.eq.s32.totalorder %s11, 5
      %p111 = scmp.ne.s32.totalorder %s106, %s108
      %p112 = scmp.eq.s32.totalorder %s11, 0
      %p113 = por %p111, %p112
      %p114 = scmp.ne.s32.totalorder %s106, %s108
      %p115 = scmp.eq.s32.totalorder %s16, 5
      %p116 = por %p114, %p115
      %p117 = scmp.ne.s32.totalorder %s108, %s109
      %p118 = scmp.eq.s32.totalorder %s16, 0
      %p119 = por %p117, %p118
      %p120 = scmp.ne.s32.totalorder %s108, %s109
      %p121 = scmp.eq.s32.totalorder %s17, 5
      %p122 = por %p120, %p121
      %p124 = scmp.ne.s32.totalorder %s109, %s123
      %p125 = scmp.eq.s32.totalorder %s17, 0
      %p126 = por %p124, %p125
      %s128 = sadd.s32 %s127, 1
      %p131 = scmp.eq.s32.totalorder %s11, 5
      %p132 = scmp.ne.s32.totalorder %s127, %s129
      %p133 = scmp.eq.s32.totalorder %s11, 0
      %p134 = por %p132, %p133
      %p135 = scmp.ne.s32.totalorder %s127, %s129
      %p136 = scmp.eq.s32.totalorder %s16, 5
      %p137 = por %p135, %p136
      %p138 = scmp.ne.s32.totalorder %s129, %s130
      %p139 = scmp.eq.s32.totalorder %s16, 0
      %p140 = por %p138, %p139
      %p141 = scmp.ne.s32.totalorder %s129, %s130
      %p142 = scmp.eq.s32.totalorder %s17, 5
      %p143 = por %p141, %p142
      %p145 = scmp.ne.s32.totalorder %s130, %s144
      %p146 = scmp.eq.s32.totalorder %s17, 0
      %p147 = por %p145, %p146
      %s148 = ssub.s32 %s18, %s30
      %p149 = scmp.eq.s32.totalorder %s148, 0
      %s151 = sadd.s32 %s150, 1
      %s152 = scalar_select %p149, %s150, %s151
      %p155 = pneg %p149
      %p156 = scmp.eq.s32.totalorder %s11, 5
      %p157 = por %p155, %p156
      %p158 = scmp.ne.s32.totalorder %s150, %s153
      %p159 = scmp.eq.s32.totalorder %s11, 0
      %p160 = por %p158, %p159
      %p161 = scmp.ne.s32.totalorder %s150, %s153
      %p162 = scmp.eq.s32.totalorder %s16, 5
      %p163 = por %p161, %p162
      %p164 = scmp.ne.s32.totalorder %s153, %s154
      %p165 = scmp.eq.s32.totalorder %s16, 0
      %p166 = por %p164, %p165
      %p167 = scmp.ne.s32.totalorder %s153, %s154
      %p168 = scmp.eq.s32.totalorder %s17, 5
      %p169 = por %p167, %p168
      %p171 = scmp.ne.s32.totalorder %s154, %s170
      %p172 = scmp.eq.s32.totalorder %s17, 0
      %p173 = por %p171, %p172
      %p174 = scmp.le.s32.totalorder 1, %s11
      %p175 = scmp.lt.s32.totalorder %s11, 7
      %p176 = pnand %p174, %p175
      %p177 = pneg %p176
      // Predicated region
      $region9: #{classifier_c_forward.3} parent=5 // pred_check
        _
      $region10: #{classifier_c_forward.3} parent=5 // pred_check_branch
        %179 = sbr.rel (%p176) target = $region12
      $region11: #{classifier_c_forward.3} parent=5 // pred_region
        %s180 = ssub.s32 %s11, 1
        // Predicated region
        $region13: #{classifier_c_forward.3} parent=11 // pred_check
          %p181 = pneg %p98
        $region14: #{classifier_c_forward.3} parent=11 // pred_check_branch
          %183 = sbr.rel (%p181) target = $region16
        $region15: #{classifier_c_forward.3} parent=11 // pred_region
          _
        $region16: #{classifier_c_forward.3} parent=11 // pred_fallthru
          _
        // Predicated region
        $region17: #{classifier_c_forward.3} parent=11 // pred_check
          %p184 = pneg %p119
        $region18: #{classifier_c_forward.3} parent=11 // pred_check_branch
          %186 = sbr.rel (%p184) target = $region20
        $region19: #{classifier_c_forward.3} parent=11 // pred_region
          _
        $region20: #{classifier_c_forward.3} parent=11 // pred_fallthru
          _
        // Predicated region
        $region21: #{classifier_c_forward.3} parent=11 // pred_check
          %p187 = pneg %p140
        $region22: #{classifier_c_forward.3} parent=11 // pred_check_branch
          %189 = sbr.rel (%p187) target = $region24
        $region23: #{classifier_c_forward.3} parent=11 // pred_region
          _
        $region24: #{classifier_c_forward.3} parent=11 // pred_fallthru
          _
      $region12: #{classifier_c_forward.3} parent=5 // pred_fallthru
        _
      %p190 = scmp.lt.s32.totalorder %s11, 6
      // Predicated region
      $region25: #{classifier_c_forward.3} parent=5 // pred_check
        %p191 = pneg %p190
      $region26: #{classifier_c_forward.3} parent=5 // pred_check_branch
        %193 = sbr.rel (%p191) target = $region28
      $region27: #{classifier_c_forward.3} parent=5 // pred_region
        // Predicated region
        $region29: #{classifier_c_forward.3} parent=27 // pred_check
          %p194 = pneg %p45
        $region30: #{classifier_c_forward.3} parent=27 // pred_check_branch
          %196 = sbr.rel (%p194) target = $region32
        $region31: #{classifier_c_forward.3} parent=27 // pred_region
          %s197 = sand.u32 %s35, 1
          %s198 = sand.u32 %s35, 1
          %s199 = smul.addr %s198, 128
          %s200 = scalar_lea.vmem [#allocation3], %s199
          %s201 = smul.u32 2, %s18
          %s202 = smul.u32 16, %s19
          %s203 = smul.addr %s201, 96
          %s204 = sadd.s32 %s202, %s203
          %s205 = smul.addr %s204, 4
          %s206 = scalar_lea.vmem %s0, %s205
          // Predicated region
          $region33: #{classifier_c_forward.3} parent=31 // pred_check
            _
          $region34: #{classifier_c_forward.3} parent=31 // pred_check_branch
            %208 = sbr.rel (0) target = $region36
          $region35: #{classifier_c_forward.3} parent=31 // pred_region
            // Predicated region
            $region37: #{classifier_c_forward.3} parent=35 // pred_check
              _
            $region38: #{classifier_c_forward.3} parent=35 // pred_check_branch
              %210 = sbr.rel (0) target = $region40
            $region39: #{classifier_c_forward.3} parent=35 // pred_region
              loop: start=0, step=1, limit=1
              $region41: #{classifier_c_forward.3} parent=39 // loop_pre_header
                _
              $region42: #{classifier_c_forward.3} parent=39 // loop_header
                %s212 = sphi 0, %s216
                %p213 = scmp.ge.s32.totalorder %s212, 1
                %s217 = sphi %s206, %s206
                %s218 = sphi %s200, %s200
              $region43: #{classifier_c_forward.3} parent=39 // loop_header_branch
                %215 = sbr.rel (%p213) target = $region47
              $region44: #{classifier_c_forward.3} parent=39 // loop_body
                %v219 = vld [vmem:[%s217] sm:$0xff]
                %220 = vst [vmem:[%s218] sm:$0xff] %v219
                %v221 = vld [vmem:[%s217 + $0x8] sm:$0xff]
                %222 = vst [vmem:[%s218 + $0x8] sm:$0xff] %v221
                %v223 = vld [vmem:[%s217 + $0x10] sm:$0xff]
                %224 = vst [vmem:[%s218 + $0x10] sm:$0xff] %v223
                %v225 = vld [vmem:[%s217 + $0x18] sm:$0xff]
                %226 = vst [vmem:[%s218 + $0x18] sm:$0xff] %v225
                %v227 = vld [vmem:[%s217 + $0x20] sm:$0xff]
                %228 = vst [vmem:[%s218 + $0x20] sm:$0xff] %v227
                %v229 = vld [vmem:[%s217 + $0x28] sm:$0xff]
                %230 = vst [vmem:[%s218 + $0x28] sm:$0xff] %v229
                %v231 = vld [vmem:[%s217 + $0x30] sm:$0xff]
                %232 = vst [vmem:[%s218 + $0x30] sm:$0xff] %v231
                %v233 = vld [vmem:[%s217 + $0x38] sm:$0xff]
                %234 = vst [vmem:[%s218 + $0x38] sm:$0xff] %v233
                %v235 = vld [vmem:[%s217 + $0x180] sm:$0xff]
                %236 = vst [vmem:[%s218 + $0x40] sm:$0xff] %v235
                %v237 = vld [vmem:[%s217 + $0x188] sm:$0xff]
                %238 = vst [vmem:[%s218 + $0x48] sm:$0xff] %v237
                %v239 = vld [vmem:[%s217 + $0x190] sm:$0xff]
                %240 = vst [vmem:[%s218 + $0x50] sm:$0xff] %v239
                %v241 = vld [vmem:[%s217 + $0x198] sm:$0xff]
                %242 = vst [vmem:[%s218 + $0x58] sm:$0xff] %v241
                %v243 = vld [vmem:[%s217 + $0x1a0] sm:$0xff]
                %244 = vst [vmem:[%s218 + $0x60] sm:$0xff] %v243
                %v245 = vld [vmem:[%s217 + $0x1a8] sm:$0xff]
                %246 = vst [vmem:[%s218 + $0x68] sm:$0xff] %v245
                %v247 = vld [vmem:[%s217 + $0x1b0] sm:$0xff]
                %248 = vst [vmem:[%s218 + $0x70] sm:$0xff] %v247
                %v249 = vld [vmem:[%s217 + $0x1b8] sm:$0xff]
                %250 = vst [vmem:[%s218 + $0x78] sm:$0xff] %v249
              $region45: #{classifier_c_forward.3} parent=39 // loop_footer
                %s216 = sadd.s32 1, %s212
              $region46: #{classifier_c_forward.3} parent=39 // loop_footer_branch
                %211 = sbr.rel target = $region42
              $region47: #{classifier_c_forward.3} parent=39 // loop_exit
                _
            $region40: #{classifier_c_forward.3} parent=35 // pred_fallthru
              _
            // Predicated region
            $region48: #{classifier_c_forward.3} parent=35 // pred_check
              _
            $region49: #{classifier_c_forward.3} parent=35 // pred_check_branch
              %252 = sbr.rel target = $region51
            $region50: #{classifier_c_forward.3} parent=35 // pred_region
              _
            $region51: #{classifier_c_forward.3} parent=35 // pred_fallthru
              _
          $region36: #{classifier_c_forward.3} parent=31 // pred_fallthru
            _
          %253 = vnop
        $region32: #{classifier_c_forward.3} parent=27 // pred_fallthru
          _
        // Predicated region
        $region52: #{classifier_c_forward.3} parent=27 // pred_check
          %p254 = pneg %p71
        $region53: #{classifier_c_forward.3} parent=27 // pred_check_branch
          %256 = sbr.rel (%p254) target = $region55
        $region54: #{classifier_c_forward.3} parent=27 // pred_region
          %s257 = smul.u32 256, %s19
          %p258 = scmp.lt.s32.totalorder %s257, 1535
          %s259 = scalar_select %p258, %s257, 1535
          %s260 = smul.addr %s259, 4
          %s261 = scalar_lea.vmem %s1, %s260
          %s262 = smul.u32 256, %s19
        $region55: #{classifier_c_forward.3} parent=27 // pred_fallthru
          _
      $region28: #{classifier_c_forward.3} parent=5 // pred_fallthru
        _
      %p263 = scmp.le.s32.totalorder 1, %s11
      %p264 = scmp.lt.s32.totalorder %s11, 7
      %p265 = pnand %p263, %p264
      %p266 = pneg %p265
      // Predicated region
      $region56: #{classifier_c_forward.3} parent=5 // pred_check
        _
      $region57: #{classifier_c_forward.3} parent=5 // pred_check_branch
        %268 = sbr.rel (%p265) target = $region59
      $region58: #{classifier_c_forward.3} parent=5 // pred_region
        %s269 = ssub.s32 %s11, 1
        %s270 = sand.u32 %s38, 1
        %s271 = sand.u32 %s38, 1
        %s272 = smul.addr %s271, 128
        %s273 = scalar_lea.vmem [#allocation3], %s272
        // Predicated region
        $region60: #{classifier_c_forward.3} parent=58 // pred_check
          %p274 = pneg %p51
        $region61: #{classifier_c_forward.3} parent=58 // pred_check_branch
          %276 = sbr.rel (%p274) target = $region63
        $region62: #{classifier_c_forward.3} parent=58 // pred_region
          _
        $region63: #{classifier_c_forward.3} parent=58 // pred_fallthru
          _
        %s277 = sand.u32 %s38, 1
        %s278 = sand.u32 %s38, 1
        %s279 = smul.addr %s278, 128
        %s280 = scalar_lea.vmem [#allocation3], %s279
        %p281 = pneg %p51
        %p282 = pneg %p48
        %s283 = smul.u32 256, %s21
        %p284 = scmp.lt.s32.totalorder %s283, 1535
        %s285 = scalar_select %p284, %s283, 1535
        %s286 = smul.addr %s285, 4
        %s287 = scalar_lea.vmem %s1, %s286
        %p288 = pneg %p77
        %p289 = pneg %p74
        %p290 = pneg %p98
        %p291 = pneg %p95
        %p292 = pneg %p119
        %p293 = pneg %p116
        %p294 = pneg %p140
        %p295 = pneg %p137
        %p296 = pneg %p166
        %p297 = pneg %p163
        %s298 = smul.u32 2, %s20
        %p299 = scmp.lt.s32.totalorder %s298, 1
        %s300 = scalar_select %p299, %s298, 1
        %s301 = smul.addr %s300, 8
        %s302 = scalar_lea.vmem %s5, %s301
        %s303 = smul.u32 2, %s20
        %s304 = smul.u32 16, %s21
        %s305 = smul.u32 256, %s21
        %p306 = scmp.lt.s32.totalorder %s305, 1535
        %s307 = scalar_select %p306, %s305, 1535
        %s308 = smul.addr %s307, 4
        %s309 = scalar_lea.vmem %s1, %s308
        %s310 = smul.u32 256, %s21
        %s311 = smul.u32 2, %s20
        %p312 = scmp.lt.s32.totalorder %s311, 1
        %s313 = scalar_select %p312, %s311, 1
        %s314 = smul.addr %s313, 8
        %s315 = scalar_lea.vmem %s5, %s314
        %s316 = smul.u32 2, %s20
        %p317 = scmp.eq.s32.totalorder %s21, 0
        // Predicated region
        $region64: #{classifier_c_forward.3} parent=58 // pred_check
          %p318 = pneg %p317
        $region65: #{classifier_c_forward.3} parent=58 // pred_check_branch
          %320 = sbr.rel (%p318) target = $region67
        $region66: #{classifier_c_forward.3} parent=58 // pred_region
          %321 = vst [vmem:[#allocation2] sm:$0xff] 0.0
          %322 = vst [vmem:[#allocation2 + $0x8] sm:$0xff] 0.0
        $region67: #{classifier_c_forward.3} parent=58 // pred_fallthru
          _
        %v323 = vld [vmem:[#allocation2] sm:$0xff]
        %v324 = vld [vmem:[#allocation2 + $0x8] sm:$0xff]
        %v325 = vld [vmem:[%s273] sm:$0xff]
        %v326 = vld [vmem:[%s273 + $0x8] sm:$0xff]
        %v327 = vld [vmem:[%s273 + $0x10] sm:$0xff]
        %v328 = vld [vmem:[%s273 + $0x18] sm:$0xff]
        %v329 = vld [vmem:[%s273 + $0x20] sm:$0xff]
        %v330 = vld [vmem:[%s273 + $0x28] sm:$0xff]
        %v331 = vld [vmem:[%s273 + $0x30] sm:$0xff]
        %v332 = vld [vmem:[%s273 + $0x38] sm:$0xff]
        %v333 = vld [vmem:[%s273 + $0x40] sm:$0xff]
        %v334 = vld [vmem:[%s273 + $0x48] sm:$0xff]
        %v335 = vld [vmem:[%s273 + $0x50] sm:$0xff]
        %v336 = vld [vmem:[%s273 + $0x58] sm:$0xff]
        %v337 = vld [vmem:[%s273 + $0x60] sm:$0xff]
        %v338 = vld [vmem:[%s273 + $0x68] sm:$0xff]
        %v339 = vld [vmem:[%s273 + $0x70] sm:$0xff]
        %v340 = vld [vmem:[%s273 + $0x78] sm:$0xff]
        %v341 = vld [vmem:[%s309] sm:$0xf]
        %v342 = vld [vmem:[%s309 + $0x4] sm:$0xf]
        %v343 = vld [vmem:[%s309 + $0x8] sm:$0xf]
        %v344 = vld [vmem:[%s309 + $0xc] sm:$0xf]
        %v345 = vld [vmem:[%s309 + $0x10] sm:$0xf]
        %v346 = vld [vmem:[%s309 + $0x14] sm:$0xf]
        %v347 = vld [vmem:[%s309 + $0x18] sm:$0xf]
        %v348 = vld [vmem:[%s309 + $0x1c] sm:$0xf]
        %v349 = vld [vmem:[%s309 + $0x20] sm:$0xf]
        %v350 = vld [vmem:[%s309 + $0x24] sm:$0xf]
        %v351 = vld [vmem:[%s309 + $0x28] sm:$0xf]
        %v352 = vld [vmem:[%s309 + $0x2c] sm:$0xf]
        %v353 = vld [vmem:[%s309 + $0x30] sm:$0xf]
        %v354 = vld [vmem:[%s309 + $0x34] sm:$0xf]
        %v355 = vld [vmem:[%s309 + $0x38] sm:$0xf]
        %v356 = vld [vmem:[%s309 + $0x3c] sm:$0xf]
        %v357 = vld [vmem:[%s309 + $0x40] sm:$0xf]
        %v358 = vld [vmem:[%s309 + $0x44] sm:$0xf]
        %v359 = vld [vmem:[%s309 + $0x48] sm:$0xf]
        %v360 = vld [vmem:[%s309 + $0x4c] sm:$0xf]
        %v361 = vld [vmem:[%s309 + $0x50] sm:$0xf]
        %v362 = vld [vmem:[%s309 + $0x54] sm:$0xf]
        %v363 = vld [vmem:[%s309 + $0x58] sm:$0xf]
        %v364 = vld [vmem:[%s309 + $0x5c] sm:$0xf]
        %v365 = vld [vmem:[%s309 + $0x60] sm:$0xf]
        %v366 = vld [vmem:[%s309 + $0x64] sm:$0xf]
        %v367 = vld [vmem:[%s309 + $0x68] sm:$0xf]
        %v368 = vld [vmem:[%s309 + $0x6c] sm:$0xf]
        %v369 = vld [vmem:[%s309 + $0x70] sm:$0xf]
        %v370 = vld [vmem:[%s309 + $0x74] sm:$0xf]
        %v371 = vld [vmem:[%s309 + $0x78] sm:$0xf]
        %v372 = vld [vmem:[%s309 + $0x7c] sm:$0xf]
        %v373 = vld [vmem:[%s309 + $0x80] sm:$0xf]
        %v374 = vld [vmem:[%s309 + $0x84] sm:$0xf]
        %v375 = vld [vmem:[%s309 + $0x88] sm:$0xf]
        %v376 = vld [vmem:[%s309 + $0x8c] sm:$0xf]
        %v377 = vld [vmem:[%s309 + $0x90] sm:$0xf]
        %v378 = vld [vmem:[%s309 + $0x94] sm:$0xf]
        %v379 = vld [vmem:[%s309 + $0x98] sm:$0xf]
        %v380 = vld [vmem:[%s309 + $0x9c] sm:$0xf]
        %v381 = vld [vmem:[%s309 + $0xa0] sm:$0xf]
        %v382 = vld [vmem:[%s309 + $0xa4] sm:$0xf]
        %v383 = vld [vmem:[%s309 + $0xa8] sm:$0xf]
        %v384 = vld [vmem:[%s309 + $0xac] sm:$0xf]
        %v385 = vld [vmem:[%s309 + $0xb0] sm:$0xf]
        %v386 = vld [vmem:[%s309 + $0xb4] sm:$0xf]
        %v387 = vld [vmem:[%s309 + $0xb8] sm:$0xf]
        %v388 = vld [vmem:[%s309 + $0xbc] sm:$0xf]
        %v389 = vld [vmem:[%s309 + $0xc0] sm:$0xf]
        %v390 = vld [vmem:[%s309 + $0xc4] sm:$0xf]
        %v391 = vld [vmem:[%s309 + $0xc8] sm:$0xf]
        %v392 = vld [vmem:[%s309 + $0xcc] sm:$0xf]
        %v393 = vld [vmem:[%s309 + $0xd0] sm:$0xf]
        %v394 = vld [vmem:[%s309 + $0xd4] sm:$0xf]
        %v395 = vld [vmem:[%s309 + $0xd8] sm:$0xf]
        %v396 = vld [vmem:[%s309 + $0xdc] sm:$0xf]
        %v397 = vld [vmem:[%s309 + $0xe0] sm:$0xf]
        %v398 = vld [vmem:[%s309 + $0xe4] sm:$0xf]
        %v399 = vld [vmem:[%s309 + $0xe8] sm:$0xf]
        %v400 = vld [vmem:[%s309 + $0xec] sm:$0xf]
        %v401 = vld [vmem:[%s309 + $0xf0] sm:$0xf]
        %v402 = vld [vmem:[%s309 + $0xf4] sm:$0xf]
        %v403 = vld [vmem:[%s309 + $0xf8] sm:$0xf]
        %v404 = vld [vmem:[%s309 + $0xfc] sm:$0xf]
        %v405 = vld [vmem:[%s309 + $0x100] sm:$0xf]
        %v406 = vld [vmem:[%s309 + $0x104] sm:$0xf]
        %v407 = vld [vmem:[%s309 + $0x108] sm:$0xf]
        %v408 = vld [vmem:[%s309 + $0x10c] sm:$0xf]
        %v409 = vld [vmem:[%s309 + $0x110] sm:$0xf]
        %v410 = vld [vmem:[%s309 + $0x114] sm:$0xf]
        %v411 = vld [vmem:[%s309 + $0x118] sm:$0xf]
        %v412 = vld [vmem:[%s309 + $0x11c] sm:$0xf]
        %v413 = vld [vmem:[%s309 + $0x120] sm:$0xf]
        %v414 = vld [vmem:[%s309 + $0x124] sm:$0xf]
        %v415 = vld [vmem:[%s309 + $0x128] sm:$0xf]
        %v416 = vld [vmem:[%s309 + $0x12c] sm:$0xf]
        %v417 = vld [vmem:[%s309 + $0x130] sm:$0xf]
        %v418 = vld [vmem:[%s309 + $0x134] sm:$0xf]
        %v419 = vld [vmem:[%s309 + $0x138] sm:$0xf]
        %v420 = vld [vmem:[%s309 + $0x13c] sm:$0xf]
        %v421 = vld [vmem:[%s309 + $0x140] sm:$0xf]
        %v422 = vld [vmem:[%s309 + $0x144] sm:$0xf]
        %v423 = vld [vmem:[%s309 + $0x148] sm:$0xf]
        %v424 = vld [vmem:[%s309 + $0x14c] sm:$0xf]
        %v425 = vld [vmem:[%s309 + $0x150] sm:$0xf]
        %v426 = vld [vmem:[%s309 + $0x154] sm:$0xf]
        %v427 = vld [vmem:[%s309 + $0x158] sm:$0xf]
        %v428 = vld [vmem:[%s309 + $0x15c] sm:$0xf]
        %v429 = vld [vmem:[%s309 + $0x160] sm:$0xf]
        %v430 = vld [vmem:[%s309 + $0x164] sm:$0xf]
        %v431 = vld [vmem:[%s309 + $0x168] sm:$0xf]
        %v432 = vld [vmem:[%s309 + $0x16c] sm:$0xf]
        %v433 = vld [vmem:[%s309 + $0x170] sm:$0xf]
        %v434 = vld [vmem:[%s309 + $0x174] sm:$0xf]
        %v435 = vld [vmem:[%s309 + $0x178] sm:$0xf]
        %v436 = vld [vmem:[%s309 + $0x17c] sm:$0xf]
        %v437 = vld [vmem:[%s309 + $0x180] sm:$0xf]
        %v438 = vld [vmem:[%s309 + $0x184] sm:$0xf]
        %v439 = vld [vmem:[%s309 + $0x188] sm:$0xf]
        %v440 = vld [vmem:[%s309 + $0x18c] sm:$0xf]
        %v441 = vld [vmem:[%s309 + $0x190] sm:$0xf]
        %v442 = vld [vmem:[%s309 + $0x194] sm:$0xf]
        %v443 = vld [vmem:[%s309 + $0x198] sm:$0xf]
        %v444 = vld [vmem:[%s309 + $0x19c] sm:$0xf]
        %v445 = vld [vmem:[%s309 + $0x1a0] sm:$0xf]
        %v446 = vld [vmem:[%s309 + $0x1a4] sm:$0xf]
        %v447 = vld [vmem:[%s309 + $0x1a8] sm:$0xf]
        %v448 = vld [vmem:[%s309 + $0x1ac] sm:$0xf]
        %v449 = vld [vmem:[%s309 + $0x1b0] sm:$0xf]
        %v450 = vld [vmem:[%s309 + $0x1b4] sm:$0xf]
        %v451 = vld [vmem:[%s309 + $0x1b8] sm:$0xf]
        %v452 = vld [vmem:[%s309 + $0x1bc] sm:$0xf]
        %v453 = vld [vmem:[%s309 + $0x1c0] sm:$0xf]
        %v454 = vld [vmem:[%s309 + $0x1c4] sm:$0xf]
        %v455 = vld [vmem:[%s309 + $0x1c8] sm:$0xf]
        %v456 = vld [vmem:[%s309 + $0x1cc] sm:$0xf]
        %v457 = vld [vmem:[%s309 + $0x1d0] sm:$0xf]
        %v458 = vld [vmem:[%s309 + $0x1d4] sm:$0xf]
        %v459 = vld [vmem:[%s309 + $0x1d8] sm:$0xf]
        %v460 = vld [vmem:[%s309 + $0x1dc] sm:$0xf]
        %v461 = vld [vmem:[%s309 + $0x1e0] sm:$0xf]
        %v462 = vld [vmem:[%s309 + $0x1e4] sm:$0xf]
        %v463 = vld [vmem:[%s309 + $0x1e8] sm:$0xf]
        %v464 = vld [vmem:[%s309 + $0x1ec] sm:$0xf]
        %v465 = vld [vmem:[%s309 + $0x1f0] sm:$0xf]
        %v466 = vld [vmem:[%s309 + $0x1f4] sm:$0xf]
        %v467 = vld [vmem:[%s309 + $0x1f8] sm:$0xf]
        %v468 = vld [vmem:[%s309 + $0x1fc] sm:$0xf]
        %v469 = vld [vmem:[%s309 + $0x200] sm:$0xf]
        %v470 = vld [vmem:[%s309 + $0x204] sm:$0xf]
        %v471 = vld [vmem:[%s309 + $0x208] sm:$0xf]
        %v472 = vld [vmem:[%s309 + $0x20c] sm:$0xf]
        %v473 = vld [vmem:[%s309 + $0x210] sm:$0xf]
        %v474 = vld [vmem:[%s309 + $0x214] sm:$0xf]
        %v475 = vld [vmem:[%s309 + $0x218] sm:$0xf]
        %v476 = vld [vmem:[%s309 + $0x21c] sm:$0xf]
        %v477 = vld [vmem:[%s309 + $0x220] sm:$0xf]
        %v478 = vld [vmem:[%s309 + $0x224] sm:$0xf]
        %v479 = vld [vmem:[%s309 + $0x228] sm:$0xf]
        %v480 = vld [vmem:[%s309 + $0x22c] sm:$0xf]
        %v481 = vld [vmem:[%s309 + $0x230] sm:$0xf]
        %v482 = vld [vmem:[%s309 + $0x234] sm:$0xf]
        %v483 = vld [vmem:[%s309 + $0x238] sm:$0xf]
        %v484 = vld [vmem:[%s309 + $0x23c] sm:$0xf]
        %v485 = vld [vmem:[%s309 + $0x240] sm:$0xf]
        %v486 = vld [vmem:[%s309 + $0x244] sm:$0xf]
        %v487 = vld [vmem:[%s309 + $0x248] sm:$0xf]
        %v488 = vld [vmem:[%s309 + $0x24c] sm:$0xf]
        %v489 = vld [vmem:[%s309 + $0x250] sm:$0xf]
        %v490 = vld [vmem:[%s309 + $0x254] sm:$0xf]
        %v491 = vld [vmem:[%s309 + $0x258] sm:$0xf]
        %v492 = vld [vmem:[%s309 + $0x25c] sm:$0xf]
        %v493 = vld [vmem:[%s309 + $0x260] sm:$0xf]
        %v494 = vld [vmem:[%s309 + $0x264] sm:$0xf]
        %v495 = vld [vmem:[%s309 + $0x268] sm:$0xf]
        %v496 = vld [vmem:[%s309 + $0x26c] sm:$0xf]
        %v497 = vld [vmem:[%s309 + $0x270] sm:$0xf]
        %v498 = vld [vmem:[%s309 + $0x274] sm:$0xf]
        %v499 = vld [vmem:[%s309 + $0x278] sm:$0xf]
        %v500 = vld [vmem:[%s309 + $0x27c] sm:$0xf]
        %v501 = vld [vmem:[%s309 + $0x280] sm:$0xf]
        %v502 = vld [vmem:[%s309 + $0x284] sm:$0xf]
        %v503 = vld [vmem:[%s309 + $0x288] sm:$0xf]
        %v504 = vld [vmem:[%s309 + $0x28c] sm:$0xf]
        %v505 = vld [vmem:[%s309 + $0x290] sm:$0xf]
        %v506 = vld [vmem:[%s309 + $0x294] sm:$0xf]
        %v507 = vld [vmem:[%s309 + $0x298] sm:$0xf]
        %v508 = vld [vmem:[%s309 + $0x29c] sm:$0xf]
        %v509 = vld [vmem:[%s309 + $0x2a0] sm:$0xf]
        %v510 = vld [vmem:[%s309 + $0x2a4] sm:$0xf]
        %v511 = vld [vmem:[%s309 + $0x2a8] sm:$0xf]
        %v512 = vld [vmem:[%s309 + $0x2ac] sm:$0xf]
        %v513 = vld [vmem:[%s309 + $0x2b0] sm:$0xf]
        %v514 = vld [vmem:[%s309 + $0x2b4] sm:$0xf]
        %v515 = vld [vmem:[%s309 + $0x2b8] sm:$0xf]
        %v516 = vld [vmem:[%s309 + $0x2bc] sm:$0xf]
        %v517 = vld [vmem:[%s309 + $0x2c0] sm:$0xf]
        %v518 = vld [vmem:[%s309 + $0x2c4] sm:$0xf]
        %v519 = vld [vmem:[%s309 + $0x2c8] sm:$0xf]
        %v520 = vld [vmem:[%s309 + $0x2cc] sm:$0xf]
        %v521 = vld [vmem:[%s309 + $0x2d0] sm:$0xf]
        %v522 = vld [vmem:[%s309 + $0x2d4] sm:$0xf]
        %v523 = vld [vmem:[%s309 + $0x2d8] sm:$0xf]
        %v524 = vld [vmem:[%s309 + $0x2dc] sm:$0xf]
        %v525 = vld [vmem:[%s309 + $0x2e0] sm:$0xf]
        %v526 = vld [vmem:[%s309 + $0x2e4] sm:$0xf]
        %v527 = vld [vmem:[%s309 + $0x2e8] sm:$0xf]
        %v528 = vld [vmem:[%s309 + $0x2ec] sm:$0xf]
        %v529 = vld [vmem:[%s309 + $0x2f0] sm:$0xf]
        %v530 = vld [vmem:[%s309 + $0x2f4] sm:$0xf]
        %v531 = vld [vmem:[%s309 + $0x2f8] sm:$0xf]
        %v532 = vld [vmem:[%s309 + $0x2fc] sm:$0xf]
        %v533 = vld [vmem:[%s309 + $0x300] sm:$0xf]
        %v534 = vld [vmem:[%s309 + $0x304] sm:$0xf]
        %v535 = vld [vmem:[%s309 + $0x308] sm:$0xf]
        %v536 = vld [vmem:[%s309 + $0x30c] sm:$0xf]
        %v537 = vld [vmem:[%s309 + $0x310] sm:$0xf]
        %v538 = vld [vmem:[%s309 + $0x314] sm:$0xf]
        %v539 = vld [vmem:[%s309 + $0x318] sm:$0xf]
        %v540 = vld [vmem:[%s309 + $0x31c] sm:$0xf]
        %v541 = vld [vmem:[%s309 + $0x320] sm:$0xf]
        %v542 = vld [vmem:[%s309 + $0x324] sm:$0xf]
        %v543 = vld [vmem:[%s309 + $0x328] sm:$0xf]
        %v544 = vld [vmem:[%s309 + $0x32c] sm:$0xf]
        %v545 = vld [vmem:[%s309 + $0x330] sm:$0xf]
        %v546 = vld [vmem:[%s309 + $0x334] sm:$0xf]
        %v547 = vld [vmem:[%s309 + $0x338] sm:$0xf]
        %v548 = vld [vmem:[%s309 + $0x33c] sm:$0xf]
        %v549 = vld [vmem:[%s309 + $0x340] sm:$0xf]
        %v550 = vld [vmem:[%s309 + $0x344] sm:$0xf]
        %v551 = vld [vmem:[%s309 + $0x348] sm:$0xf]
        %v552 = vld [vmem:[%s309 + $0x34c] sm:$0xf]
        %v553 = vld [vmem:[%s309 + $0x350] sm:$0xf]
        %v554 = vld [vmem:[%s309 + $0x354] sm:$0xf]
        %v555 = vld [vmem:[%s309 + $0x358] sm:$0xf]
        %v556 = vld [vmem:[%s309 + $0x35c] sm:$0xf]
        %v557 = vld [vmem:[%s309 + $0x360] sm:$0xf]
        %v558 = vld [vmem:[%s309 + $0x364] sm:$0xf]
        %v559 = vld [vmem:[%s309 + $0x368] sm:$0xf]
        %v560 = vld [vmem:[%s309 + $0x36c] sm:$0xf]
        %v561 = vld [vmem:[%s309 + $0x370] sm:$0xf]
        %v562 = vld [vmem:[%s309 + $0x374] sm:$0xf]
        %v563 = vld [vmem:[%s309 + $0x378] sm:$0xf]
        %v564 = vld [vmem:[%s309 + $0x37c] sm:$0xf]
        %v565 = vld [vmem:[%s309 + $0x380] sm:$0xf]
        %v566 = vld [vmem:[%s309 + $0x384] sm:$0xf]
        %v567 = vld [vmem:[%s309 + $0x388] sm:$0xf]
        %v568 = vld [vmem:[%s309 + $0x38c] sm:$0xf]
        %v569 = vld [vmem:[%s309 + $0x390] sm:$0xf]
        %v570 = vld [vmem:[%s309 + $0x394] sm:$0xf]
        %v571 = vld [vmem:[%s309 + $0x398] sm:$0xf]
        %v572 = vld [vmem:[%s309 + $0x39c] sm:$0xf]
        %v573 = vld [vmem:[%s309 + $0x3a0] sm:$0xf]
        %v574 = vld [vmem:[%s309 + $0x3a4] sm:$0xf]
        %v575 = vld [vmem:[%s309 + $0x3a8] sm:$0xf]
        %v576 = vld [vmem:[%s309 + $0x3ac] sm:$0xf]
        %v577 = vld [vmem:[%s309 + $0x3b0] sm:$0xf]
        %v578 = vld [vmem:[%s309 + $0x3b4] sm:$0xf]
        %v579 = vld [vmem:[%s309 + $0x3b8] sm:$0xf]
        %v580 = vld [vmem:[%s309 + $0x3bc] sm:$0xf]
        %v581 = vld [vmem:[%s309 + $0x3c0] sm:$0xf]
        %v582 = vld [vmem:[%s309 + $0x3c4] sm:$0xf]
        %v583 = vld [vmem:[%s309 + $0x3c8] sm:$0xf]
        %v584 = vld [vmem:[%s309 + $0x3cc] sm:$0xf]
        %v585 = vld [vmem:[%s309 + $0x3d0] sm:$0xf]
        %v586 = vld [vmem:[%s309 + $0x3d4] sm:$0xf]
        %v587 = vld [vmem:[%s309 + $0x3d8] sm:$0xf]
        %v588 = vld [vmem:[%s309 + $0x3dc] sm:$0xf]
        %v589 = vld [vmem:[%s309 + $0x3e0] sm:$0xf]
        %v590 = vld [vmem:[%s309 + $0x3e4] sm:$0xf]
        %v591 = vld [vmem:[%s309 + $0x3e8] sm:$0xf]
        %v592 = vld [vmem:[%s309 + $0x3ec] sm:$0xf]
        %v593 = vld [vmem:[%s309 + $0x3f0] sm:$0xf]
        %v594 = vld [vmem:[%s309 + $0x3f4] sm:$0xf]
        %v595 = vld [vmem:[%s309 + $0x3f8] sm:$0xf]
        %v596 = vld [vmem:[%s309 + $0x3fc] sm:$0xf]
        %v613 = vunpack.c.l.b16 %v325
        %v614 = vunpack.c.h.b16 %v325
        %v615 = vunpack.c.l.b16 %v326
        %v616 = vunpack.c.h.b16 %v326
        %v617 = vunpack.c.l.b16 %v327
        %v618 = vunpack.c.h.b16 %v327
        %v619 = vunpack.c.l.b16 %v328
        %v620 = vunpack.c.h.b16 %v328
        %v621 = vunpack.c.l.b16 %v329
        %v622 = vunpack.c.h.b16 %v329
        %v623 = vunpack.c.l.b16 %v330
        %v624 = vunpack.c.h.b16 %v330
        %v625 = vunpack.c.l.b16 %v331
        %v626 = vunpack.c.h.b16 %v331
        %v627 = vunpack.c.l.b16 %v332
        %v628 = vunpack.c.h.b16 %v332
        %v629 = vunpack.c.l.b16 %v333
        %v630 = vunpack.c.h.b16 %v333
        %v631 = vunpack.c.l.b16 %v334
        %v632 = vunpack.c.h.b16 %v334
        %v633 = vunpack.c.l.b16 %v335
        %v634 = vunpack.c.h.b16 %v335
        %v635 = vunpack.c.l.b16 %v336
        %v636 = vunpack.c.h.b16 %v336
        %v637 = vunpack.c.l.b16 %v337
        %v638 = vunpack.c.h.b16 %v337
        %v639 = vunpack.c.l.b16 %v338
        %v640 = vunpack.c.h.b16 %v338
        %v641 = vunpack.c.l.b16 %v339
        %v642 = vunpack.c.h.b16 %v339
        %v643 = vunpack.c.l.b16 %v340
        %v644 = vunpack.c.h.b16 %v340
        %v645 = vpack.c.b16 %v629, %v613
        %v646 = vpack.c.b16 %v630, %v614
        %v647 = vpack.c.b16 %v631, %v615
        %v648 = vpack.c.b16 %v632, %v616
        %v649 = vpack.c.b16 %v633, %v617
        %v650 = vpack.c.b16 %v634, %v618
        %v651 = vpack.c.b16 %v635, %v619
        %v652 = vpack.c.b16 %v636, %v620
        %v653 = vpack.c.b16 %v637, %v621
        %v654 = vpack.c.b16 %v638, %v622
        %v655 = vpack.c.b16 %v639, %v623
        %v656 = vpack.c.b16 %v640, %v624
        %v657 = vpack.c.b16 %v641, %v625
        %v658 = vpack.c.b16 %v642, %v626
        %v659 = vpack.c.b16 %v643, %v627
        %v660 = vpack.c.b16 %v644, %v628
        %v933 = vunpack.c.l.b16 %v341
        %v934 = vunpack.c.l.b16 %v342
        %v935 = vunpack.c.l.b16 %v343
        %v936 = vunpack.c.l.b16 %v344
        %v937 = vunpack.c.l.b16 %v345
        %v938 = vunpack.c.l.b16 %v346
        %v939 = vunpack.c.l.b16 %v347
        %v940 = vunpack.c.l.b16 %v348
        %v941 = vunpack.c.l.b16 %v349
        %v942 = vunpack.c.l.b16 %v350
        %v943 = vunpack.c.l.b16 %v351
        %v944 = vunpack.c.l.b16 %v352
        %v945 = vunpack.c.l.b16 %v353
        %v946 = vunpack.c.l.b16 %v354
        %v947 = vunpack.c.l.b16 %v355
        %v948 = vunpack.c.l.b16 %v356
        %v949 = vunpack.c.l.b16 %v357
        %v950 = vunpack.c.l.b16 %v358
        %v951 = vunpack.c.l.b16 %v359
        %v952 = vunpack.c.l.b16 %v360
        %v953 = vunpack.c.l.b16 %v361
        %v954 = vunpack.c.l.b16 %v362
        %v955 = vunpack.c.l.b16 %v363
        %v956 = vunpack.c.l.b16 %v364
        %v957 = vunpack.c.l.b16 %v365
        %v958 = vunpack.c.l.b16 %v366
        %v959 = vunpack.c.l.b16 %v367
        %v960 = vunpack.c.l.b16 %v368
        %v961 = vunpack.c.l.b16 %v369
        %v962 = vunpack.c.l.b16 %v370
        %v963 = vunpack.c.l.b16 %v371
        %v964 = vunpack.c.l.b16 %v372
        %v965 = vunpack.c.l.b16 %v373
        %v966 = vunpack.c.l.b16 %v374
        %v967 = vunpack.c.l.b16 %v375
        %v968 = vunpack.c.l.b16 %v376
        %v969 = vunpack.c.l.b16 %v377
        %v970 = vunpack.c.l.b16 %v378
        %v971 = vunpack.c.l.b16 %v379
        %v972 = vunpack.c.l.b16 %v380
        %v973 = vunpack.c.l.b16 %v381
        %v974 = vunpack.c.l.b16 %v382
        %v975 = vunpack.c.l.b16 %v383
        %v976 = vunpack.c.l.b16 %v384
        %v977 = vunpack.c.l.b16 %v385
        %v978 = vunpack.c.l.b16 %v386
        %v979 = vunpack.c.l.b16 %v387
        %v980 = vunpack.c.l.b16 %v388
        %v981 = vunpack.c.l.b16 %v389
        %v982 = vunpack.c.l.b16 %v390
        %v983 = vunpack.c.l.b16 %v391
        %v984 = vunpack.c.l.b16 %v392
        %v985 = vunpack.c.l.b16 %v393
        %v986 = vunpack.c.l.b16 %v394
        %v987 = vunpack.c.l.b16 %v395
        %v988 = vunpack.c.l.b16 %v396
        %v989 = vunpack.c.l.b16 %v397
        %v990 = vunpack.c.l.b16 %v398
        %v991 = vunpack.c.l.b16 %v399
        %v992 = vunpack.c.l.b16 %v400
        %v993 = vunpack.c.l.b16 %v401
        %v994 = vunpack.c.l.b16 %v402
        %v995 = vunpack.c.l.b16 %v403
        %v996 = vunpack.c.l.b16 %v404
        %v997 = vunpack.c.l.b16 %v405
        %v998 = vunpack.c.l.b16 %v406
        %v999 = vunpack.c.l.b16 %v407
        %v1000 = vunpack.c.l.b16 %v408
        %v1001 = vunpack.c.l.b16 %v409
        %v1002 = vunpack.c.l.b16 %v410
        %v1003 = vunpack.c.l.b16 %v411
        %v1004 = vunpack.c.l.b16 %v412
        %v1005 = vunpack.c.l.b16 %v413
        %v1006 = vunpack.c.l.b16 %v414
        %v1007 = vunpack.c.l.b16 %v415
        %v1008 = vunpack.c.l.b16 %v416
        %v1009 = vunpack.c.l.b16 %v417
        %v1010 = vunpack.c.l.b16 %v418
        %v1011 = vunpack.c.l.b16 %v419
        %v1012 = vunpack.c.l.b16 %v420
        %v1013 = vunpack.c.l.b16 %v421
        %v1014 = vunpack.c.l.b16 %v422
        %v1015 = vunpack.c.l.b16 %v423
        %v1016 = vunpack.c.l.b16 %v424
        %v1017 = vunpack.c.l.b16 %v425
        %v1018 = vunpack.c.l.b16 %v426
        %v1019 = vunpack.c.l.b16 %v427
        %v1020 = vunpack.c.l.b16 %v428
        %v1021 = vunpack.c.l.b16 %v429
        %v1022 = vunpack.c.l.b16 %v430
        %v1023 = vunpack.c.l.b16 %v431
        %v1024 = vunpack.c.l.b16 %v432
        %v1025 = vunpack.c.l.b16 %v433
        %v1026 = vunpack.c.l.b16 %v434
        %v1027 = vunpack.c.l.b16 %v435
        %v1028 = vunpack.c.l.b16 %v436
        %v1029 = vunpack.c.l.b16 %v437
        %v1030 = vunpack.c.l.b16 %v438
        %v1031 = vunpack.c.l.b16 %v439
        %v1032 = vunpack.c.l.b16 %v440
        %v1033 = vunpack.c.l.b16 %v441
        %v1034 = vunpack.c.l.b16 %v442
        %v1035 = vunpack.c.l.b16 %v443
        %v1036 = vunpack.c.l.b16 %v444
        %v1037 = vunpack.c.l.b16 %v445
        %v1038 = vunpack.c.l.b16 %v446
        %v1039 = vunpack.c.l.b16 %v447
        %v1040 = vunpack.c.l.b16 %v448
        %v1041 = vunpack.c.l.b16 %v449
        %v1042 = vunpack.c.l.b16 %v450
        %v1043 = vunpack.c.l.b16 %v451
        %v1044 = vunpack.c.l.b16 %v452
        %v1045 = vunpack.c.l.b16 %v453
        %v1046 = vunpack.c.l.b16 %v454
        %v1047 = vunpack.c.l.b16 %v455
        %v1048 = vunpack.c.l.b16 %v456
        %v1049 = vunpack.c.l.b16 %v457
        %v1050 = vunpack.c.l.b16 %v458
        %v1051 = vunpack.c.l.b16 %v459
        %v1052 = vunpack.c.l.b16 %v460
        %v1053 = vunpack.c.l.b16 %v461
        %v1054 = vunpack.c.l.b16 %v462
        %v1055 = vunpack.c.l.b16 %v463
        %v1056 = vunpack.c.l.b16 %v464
        %v1057 = vunpack.c.l.b16 %v465
        %v1058 = vunpack.c.l.b16 %v466
        %v1059 = vunpack.c.l.b16 %v467
        %v1060 = vunpack.c.l.b16 %v468
        %v1061 = vunpack.c.l.b16 %v469
        %v1062 = vunpack.c.l.b16 %v470
        %v1063 = vunpack.c.l.b16 %v471
        %v1064 = vunpack.c.l.b16 %v472
        %v1065 = vunpack.c.l.b16 %v473
        %v1066 = vunpack.c.l.b16 %v474
        %v1067 = vunpack.c.l.b16 %v475
        %v1068 = vunpack.c.l.b16 %v476
        %v1069 = vunpack.c.l.b16 %v477
        %v1070 = vunpack.c.l.b16 %v478
        %v1071 = vunpack.c.l.b16 %v479
        %v1072 = vunpack.c.l.b16 %v480
        %v1073 = vunpack.c.l.b16 %v481
        %v1074 = vunpack.c.l.b16 %v482
        %v1075 = vunpack.c.l.b16 %v483
        %v1076 = vunpack.c.l.b16 %v484
        %v1077 = vunpack.c.l.b16 %v485
        %v1078 = vunpack.c.l.b16 %v486
        %v1079 = vunpack.c.l.b16 %v487
        %v1080 = vunpack.c.l.b16 %v488
        %v1081 = vunpack.c.l.b16 %v489
        %v1082 = vunpack.c.l.b16 %v490
        %v1083 = vunpack.c.l.b16 %v491
        %v1084 = vunpack.c.l.b16 %v492
        %v1085 = vunpack.c.l.b16 %v493
        %v1086 = vunpack.c.l.b16 %v494
        %v1087 = vunpack.c.l.b16 %v495
        %v1088 = vunpack.c.l.b16 %v496
        %v1089 = vunpack.c.l.b16 %v497
        %v1090 = vunpack.c.l.b16 %v498
        %v1091 = vunpack.c.l.b16 %v499
        %v1092 = vunpack.c.l.b16 %v500
        %v1093 = vunpack.c.l.b16 %v501
        %v1094 = vunpack.c.l.b16 %v502
        %v1095 = vunpack.c.l.b16 %v503
        %v1096 = vunpack.c.l.b16 %v504
        %v1097 = vunpack.c.l.b16 %v505
        %v1098 = vunpack.c.l.b16 %v506
        %v1099 = vunpack.c.l.b16 %v507
        %v1100 = vunpack.c.l.b16 %v508
        %v1101 = vunpack.c.l.b16 %v509
        %v1102 = vunpack.c.l.b16 %v510
        %v1103 = vunpack.c.l.b16 %v511
        %v1104 = vunpack.c.l.b16 %v512
        %v1105 = vunpack.c.l.b16 %v513
        %v1106 = vunpack.c.l.b16 %v514
        %v1107 = vunpack.c.l.b16 %v515
        %v1108 = vunpack.c.l.b16 %v516
        %v1109 = vunpack.c.l.b16 %v517
        %v1110 = vunpack.c.l.b16 %v518
        %v1111 = vunpack.c.l.b16 %v519
        %v1112 = vunpack.c.l.b16 %v520
        %v1113 = vunpack.c.l.b16 %v521
        %v1114 = vunpack.c.l.b16 %v522
        %v1115 = vunpack.c.l.b16 %v523
        %v1116 = vunpack.c.l.b16 %v524
        %v1117 = vunpack.c.l.b16 %v525
        %v1118 = vunpack.c.l.b16 %v526
        %v1119 = vunpack.c.l.b16 %v527
        %v1120 = vunpack.c.l.b16 %v528
        %v1121 = vunpack.c.l.b16 %v529
        %v1122 = vunpack.c.l.b16 %v530
        %v1123 = vunpack.c.l.b16 %v531
        %v1124 = vunpack.c.l.b16 %v532
        %v1125 = vunpack.c.l.b16 %v533
        %v1126 = vunpack.c.l.b16 %v534
        %v1127 = vunpack.c.l.b16 %v535
        %v1128 = vunpack.c.l.b16 %v536
        %v1129 = vunpack.c.l.b16 %v537
        %v1130 = vunpack.c.l.b16 %v538
        %v1131 = vunpack.c.l.b16 %v539
        %v1132 = vunpack.c.l.b16 %v540
        %v1133 = vunpack.c.l.b16 %v541
        %v1134 = vunpack.c.l.b16 %v542
        %v1135 = vunpack.c.l.b16 %v543
        %v1136 = vunpack.c.l.b16 %v544
        %v1137 = vunpack.c.l.b16 %v545
        %v1138 = vunpack.c.l.b16 %v546
        %v1139 = vunpack.c.l.b16 %v547
        %v1140 = vunpack.c.l.b16 %v548
        %v1141 = vunpack.c.l.b16 %v549
        %v1142 = vunpack.c.l.b16 %v550
        %v1143 = vunpack.c.l.b16 %v551
        %v1144 = vunpack.c.l.b16 %v552
        %v1145 = vunpack.c.l.b16 %v553
        %v1146 = vunpack.c.l.b16 %v554
        %v1147 = vunpack.c.l.b16 %v555
        %v1148 = vunpack.c.l.b16 %v556
        %v1149 = vunpack.c.l.b16 %v557
        %v1150 = vunpack.c.l.b16 %v558
        %v1151 = vunpack.c.l.b16 %v559
        %v1152 = vunpack.c.l.b16 %v560
        %v1153 = vunpack.c.l.b16 %v561
        %v1154 = vunpack.c.l.b16 %v562
        %v1155 = vunpack.c.l.b16 %v563
        %v1156 = vunpack.c.l.b16 %v564
        %v1157 = vunpack.c.l.b16 %v565
        %v1158 = vunpack.c.l.b16 %v566
        %v1159 = vunpack.c.l.b16 %v567
        %v1160 = vunpack.c.l.b16 %v568
        %v1161 = vunpack.c.l.b16 %v569
        %v1162 = vunpack.c.l.b16 %v570
        %v1163 = vunpack.c.l.b16 %v571
        %v1164 = vunpack.c.l.b16 %v572
        %v1165 = vunpack.c.l.b16 %v573
        %v1166 = vunpack.c.l.b16 %v574
        %v1167 = vunpack.c.l.b16 %v575
        %v1168 = vunpack.c.l.b16 %v576
        %v1169 = vunpack.c.l.b16 %v577
        %v1170 = vunpack.c.l.b16 %v578
        %v1171 = vunpack.c.l.b16 %v579
        %v1172 = vunpack.c.l.b16 %v580
        %v1173 = vunpack.c.l.b16 %v581
        %v1174 = vunpack.c.l.b16 %v582
        %v1175 = vunpack.c.l.b16 %v583
        %v1176 = vunpack.c.l.b16 %v584
        %v1177 = vunpack.c.l.b16 %v585
        %v1178 = vunpack.c.l.b16 %v586
        %v1179 = vunpack.c.l.b16 %v587
        %v1180 = vunpack.c.l.b16 %v588
        %v1181 = vunpack.c.l.b16 %v589
        %v1182 = vunpack.c.l.b16 %v590
        %v1183 = vunpack.c.l.b16 %v591
        %v1184 = vunpack.c.l.b16 %v592
        %v1185 = vunpack.c.l.b16 %v593
        %v1186 = vunpack.c.l.b16 %v594
        %v1187 = vunpack.c.l.b16 %v595
        %v1188 = vunpack.c.l.b16 %v596
        %v1189 = vpack.c.b16 %v934, %v933
        %v1190 = vpack.c.b16 %v936, %v935
        %v1191 = vpack.c.b16 %v938, %v937
        %v1192 = vpack.c.b16 %v940, %v939
        %v1193 = vpack.c.b16 %v942, %v941
        %v1194 = vpack.c.b16 %v944, %v943
        %v1195 = vpack.c.b16 %v946, %v945
        %v1196 = vpack.c.b16 %v948, %v947
        %v1197 = vpack.c.b16 %v950, %v949
        %v1198 = vpack.c.b16 %v952, %v951
        %v1199 = vpack.c.b16 %v954, %v953
        %v1200 = vpack.c.b16 %v956, %v955
        %v1201 = vpack.c.b16 %v958, %v957
        %v1202 = vpack.c.b16 %v960, %v959
        %v1203 = vpack.c.b16 %v962, %v961
        %v1204 = vpack.c.b16 %v964, %v963
        %v1205 = vpack.c.b16 %v966, %v965
        %v1206 = vpack.c.b16 %v968, %v967
        %v1207 = vpack.c.b16 %v970, %v969
        %v1208 = vpack.c.b16 %v972, %v971
        %v1209 = vpack.c.b16 %v974, %v973
        %v1210 = vpack.c.b16 %v976, %v975
        %v1211 = vpack.c.b16 %v978, %v977
        %v1212 = vpack.c.b16 %v980, %v979
        %v1213 = vpack.c.b16 %v982, %v981
        %v1214 = vpack.c.b16 %v984, %v983
        %v1215 = vpack.c.b16 %v986, %v985
        %v1216 = vpack.c.b16 %v988, %v987
        %v1217 = vpack.c.b16 %v990, %v989
        %v1218 = vpack.c.b16 %v992, %v991
        %v1219 = vpack.c.b16 %v994, %v993
        %v1220 = vpack.c.b16 %v996, %v995
        %v1221 = vpack.c.b16 %v998, %v997
        %v1222 = vpack.c.b16 %v1000, %v999
        %v1223 = vpack.c.b16 %v1002, %v1001
        %v1224 = vpack.c.b16 %v1004, %v1003
        %v1225 = vpack.c.b16 %v1006, %v1005
        %v1226 = vpack.c.b16 %v1008, %v1007
        %v1227 = vpack.c.b16 %v1010, %v1009
        %v1228 = vpack.c.b16 %v1012, %v1011
        %v1229 = vpack.c.b16 %v1014, %v1013
        %v1230 = vpack.c.b16 %v1016, %v1015
        %v1231 = vpack.c.b16 %v1018, %v1017
        %v1232 = vpack.c.b16 %v1020, %v1019
        %v1233 = vpack.c.b16 %v1022, %v1021
        %v1234 = vpack.c.b16 %v1024, %v1023
        %v1235 = vpack.c.b16 %v1026, %v1025
        %v1236 = vpack.c.b16 %v1028, %v1027
        %v1237 = vpack.c.b16 %v1030, %v1029
        %v1238 = vpack.c.b16 %v1032, %v1031
        %v1239 = vpack.c.b16 %v1034, %v1033
        %v1240 = vpack.c.b16 %v1036, %v1035
        %v1241 = vpack.c.b16 %v1038, %v1037
        %v1242 = vpack.c.b16 %v1040, %v1039
        %v1243 = vpack.c.b16 %v1042, %v1041
        %v1244 = vpack.c.b16 %v1044, %v1043
        %v1245 = vpack.c.b16 %v1046, %v1045
        %v1246 = vpack.c.b16 %v1048, %v1047
        %v1247 = vpack.c.b16 %v1050, %v1049
        %v1248 = vpack.c.b16 %v1052, %v1051
        %v1249 = vpack.c.b16 %v1054, %v1053
        %v1250 = vpack.c.b16 %v1056, %v1055
        %v1251 = vpack.c.b16 %v1058, %v1057
        %v1252 = vpack.c.b16 %v1060, %v1059
        %v1253 = vpack.c.b16 %v1062, %v1061
        %v1254 = vpack.c.b16 %v1064, %v1063
        %v1255 = vpack.c.b16 %v1066, %v1065
        %v1256 = vpack.c.b16 %v1068, %v1067
        %v1257 = vpack.c.b16 %v1070, %v1069
        %v1258 = vpack.c.b16 %v1072, %v1071
        %v1259 = vpack.c.b16 %v1074, %v1073
        %v1260 = vpack.c.b16 %v1076, %v1075
        %v1261 = vpack.c.b16 %v1078, %v1077
        %v1262 = vpack.c.b16 %v1080, %v1079
        %v1263 = vpack.c.b16 %v1082, %v1081
        %v1264 = vpack.c.b16 %v1084, %v1083
        %v1265 = vpack.c.b16 %v1086, %v1085
        %v1266 = vpack.c.b16 %v1088, %v1087
        %v1267 = vpack.c.b16 %v1090, %v1089
        %v1268 = vpack.c.b16 %v1092, %v1091
        %v1269 = vpack.c.b16 %v1094, %v1093
        %v1270 = vpack.c.b16 %v1096, %v1095
        %v1271 = vpack.c.b16 %v1098, %v1097
        %v1272 = vpack.c.b16 %v1100, %v1099
        %v1273 = vpack.c.b16 %v1102, %v1101
        %v1274 = vpack.c.b16 %v1104, %v1103
        %v1275 = vpack.c.b16 %v1106, %v1105
        %v1276 = vpack.c.b16 %v1108, %v1107
        %v1277 = vpack.c.b16 %v1110, %v1109
        %v1278 = vpack.c.b16 %v1112, %v1111
        %v1279 = vpack.c.b16 %v1114, %v1113
        %v1280 = vpack.c.b16 %v1116, %v1115
        %v1281 = vpack.c.b16 %v1118, %v1117
        %v1282 = vpack.c.b16 %v1120, %v1119
        %v1283 = vpack.c.b16 %v1122, %v1121
        %v1284 = vpack.c.b16 %v1124, %v1123
        %v1285 = vpack.c.b16 %v1126, %v1125
        %v1286 = vpack.c.b16 %v1128, %v1127
        %v1287 = vpack.c.b16 %v1130, %v1129
        %v1288 = vpack.c.b16 %v1132, %v1131
        %v1289 = vpack.c.b16 %v1134, %v1133
        %v1290 = vpack.c.b16 %v1136, %v1135
        %v1291 = vpack.c.b16 %v1138, %v1137
        %v1292 = vpack.c.b16 %v1140, %v1139
        %v1293 = vpack.c.b16 %v1142, %v1141
        %v1294 = vpack.c.b16 %v1144, %v1143
        %v1295 = vpack.c.b16 %v1146, %v1145
        %v1296 = vpack.c.b16 %v1148, %v1147
        %v1297 = vpack.c.b16 %v1150, %v1149
        %v1298 = vpack.c.b16 %v1152, %v1151
        %v1299 = vpack.c.b16 %v1154, %v1153
        %v1300 = vpack.c.b16 %v1156, %v1155
        %v1301 = vpack.c.b16 %v1158, %v1157
        %v1302 = vpack.c.b16 %v1160, %v1159
        %v1303 = vpack.c.b16 %v1162, %v1161
        %v1304 = vpack.c.b16 %v1164, %v1163
        %v1305 = vpack.c.b16 %v1166, %v1165
        %v1306 = vpack.c.b16 %v1168, %v1167
        %v1307 = vpack.c.b16 %v1170, %v1169
        %v1308 = vpack.c.b16 %v1172, %v1171
        %v1309 = vpack.c.b16 %v1174, %v1173
        %v1310 = vpack.c.b16 %v1176, %v1175
        %v1311 = vpack.c.b16 %v1178, %v1177
        %v1312 = vpack.c.b16 %v1180, %v1179
        %v1313 = vpack.c.b16 %v1182, %v1181
        %v1314 = vpack.c.b16 %v1184, %v1183
        %v1315 = vpack.c.b16 %v1186, %v1185
        %v1316 = vpack.c.b16 %v1188, %v1187
        %1445 = vmatpush.bf16.msra.mxu0 %v1196
        %1446 = vmatpush.bf16.msra.mxu0 %v1195
        %1447 = vmatpush.bf16.msra.mxu0 %v1194
        %1448 = vmatpush.bf16.msra.mxu0 %v1193
        %1449 = vmatpush.bf16.msra.mxu0 %v1192
        %1450 = vmatpush.bf16.msra.mxu0 %v1191
        %1451 = vmatpush.bf16.msra.mxu0 %v1190
        %1452 = vmatpush.bf16.msra.mxu0 %v1189
        %1453 = vmatmul.bf16.gmra.mxu0 %v645
        %v1454 = vpop.f32.mrf.mxu0
        %v1455 = vadd.f32 0.0, %v1454
        %v1456 = vpop.f32.mrf.mxu0
        %v1457 = vadd.f32 0.0, %v1456
        %1458 = vdwg.mxu0
        %1459 = vmatpush.bf16.msra.mxu0 %v1204
        %1460 = vmatpush.bf16.msra.mxu0 %v1203
        %1461 = vmatpush.bf16.msra.mxu0 %v1202
        %1462 = vmatpush.bf16.msra.mxu0 %v1201
        %1463 = vmatpush.bf16.msra.mxu0 %v1200
        %1464 = vmatpush.bf16.msra.mxu0 %v1199
        %1465 = vmatpush.bf16.msra.mxu0 %v1198
        %1466 = vmatpush.bf16.msra.mxu0 %v1197
        %1467 = vmatmul.bf16.gmra.mxu0 %v646
        %v1468 = vpop.f32.mrf.mxu0
        %v1469 = vadd.f32 %v1455, %v1468
        %v1470 = vpop.f32.mrf.mxu0
        %v1471 = vadd.f32 %v1457, %v1470
        %1472 = vdwg.mxu0
        %1473 = vmatpush.bf16.msra.mxu0 %v1212
        %1474 = vmatpush.bf16.msra.mxu0 %v1211
        %1475 = vmatpush.bf16.msra.mxu0 %v1210
        %1476 = vmatpush.bf16.msra.mxu0 %v1209
        %1477 = vmatpush.bf16.msra.mxu0 %v1208
        %1478 = vmatpush.bf16.msra.mxu0 %v1207
        %1479 = vmatpush.bf16.msra.mxu0 %v1206
        %1480 = vmatpush.bf16.msra.mxu0 %v1205
        %1481 = vmatmul.bf16.gmra.mxu0 %v647
        %v1482 = vpop.f32.mrf.mxu0
        %v1483 = vadd.f32 %v1469, %v1482
        %v1484 = vpop.f32.mrf.mxu0
        %v1485 = vadd.f32 %v1471, %v1484
        %1486 = vdwg.mxu0
        %1487 = vmatpush.bf16.msra.mxu0 %v1220
        %1488 = vmatpush.bf16.msra.mxu0 %v1219
        %1489 = vmatpush.bf16.msra.mxu0 %v1218
        %1490 = vmatpush.bf16.msra.mxu0 %v1217
        %1491 = vmatpush.bf16.msra.mxu0 %v1216
        %1492 = vmatpush.bf16.msra.mxu0 %v1215
        %1493 = vmatpush.bf16.msra.mxu0 %v1214
        %1494 = vmatpush.bf16.msra.mxu0 %v1213
        %1495 = vmatmul.bf16.gmra.mxu0 %v648
        %v1496 = vpop.f32.mrf.mxu0
        %v1497 = vadd.f32 %v1483, %v1496
        %v1498 = vpop.f32.mrf.mxu0
        %v1499 = vadd.f32 %v1485, %v1498
        %1500 = vdwg.mxu0
        %1501 = vmatpush.bf16.msra.mxu0 %v1228
        %1502 = vmatpush.bf16.msra.mxu0 %v1227
        %1503 = vmatpush.bf16.msra.mxu0 %v1226
        %1504 = vmatpush.bf16.msra.mxu0 %v1225
        %1505 = vmatpush.bf16.msra.mxu0 %v1224
        %1506 = vmatpush.bf16.msra.mxu0 %v1223
        %1507 = vmatpush.bf16.msra.mxu0 %v1222
        %1508 = vmatpush.bf16.msra.mxu0 %v1221
        %1509 = vmatmul.bf16.gmra.mxu0 %v649
        %v1510 = vpop.f32.mrf.mxu0
        %v1511 = vadd.f32 %v1497, %v1510
        %v1512 = vpop.f32.mrf.mxu0
        %v1513 = vadd.f32 %v1499, %v1512
        %1514 = vdwg.mxu0
        %1515 = vmatpush.bf16.msra.mxu0 %v1236
        %1516 = vmatpush.bf16.msra.mxu0 %v1235
        %1517 = vmatpush.bf16.msra.mxu0 %v1234
        %1518 = vmatpush.bf16.msra.mxu0 %v1233
        %1519 = vmatpush.bf16.msra.mxu0 %v1232
        %1520 = vmatpush.bf16.msra.mxu0 %v1231
        %1521 = vmatpush.bf16.msra.mxu0 %v1230
        %1522 = vmatpush.bf16.msra.mxu0 %v1229
        %1523 = vmatmul.bf16.gmra.mxu0 %v650
        %v1524 = vpop.f32.mrf.mxu0
        %v1525 = vadd.f32 %v1511, %v1524
        %v1526 = vpop.f32.mrf.mxu0
        %v1527 = vadd.f32 %v1513, %v1526
        %1528 = vdwg.mxu0
        %1529 = vmatpush.bf16.msra.mxu0 %v1244
        %1530 = vmatpush.bf16.msra.mxu0 %v1243
        %1531 = vmatpush.bf16.msra.mxu0 %v1242
        %1532 = vmatpush.bf16.msra.mxu0 %v1241
        %1533 = vmatpush.bf16.msra.mxu0 %v1240
        %1534 = vmatpush.bf16.msra.mxu0 %v1239
        %1535 = vmatpush.bf16.msra.mxu0 %v1238
        %1536 = vmatpush.bf16.msra.mxu0 %v1237
        %1537 = vmatmul.bf16.gmra.mxu0 %v651
        %v1538 = vpop.f32.mrf.mxu0
        %v1539 = vadd.f32 %v1525, %v1538
        %v1540 = vpop.f32.mrf.mxu0
        %v1541 = vadd.f32 %v1527, %v1540
        %1542 = vdwg.mxu0
        %1543 = vmatpush.bf16.msra.mxu0 %v1252
        %1544 = vmatpush.bf16.msra.mxu0 %v1251
        %1545 = vmatpush.bf16.msra.mxu0 %v1250
        %1546 = vmatpush.bf16.msra.mxu0 %v1249
        %1547 = vmatpush.bf16.msra.mxu0 %v1248
        %1548 = vmatpush.bf16.msra.mxu0 %v1247
        %1549 = vmatpush.bf16.msra.mxu0 %v1246
        %1550 = vmatpush.bf16.msra.mxu0 %v1245
        %1551 = vmatmul.bf16.gmra.mxu0 %v652
        %v1552 = vpop.f32.mrf.mxu0
        %v1553 = vadd.f32 %v1539, %v1552
        %v1554 = vpop.f32.mrf.mxu0
        %v1555 = vadd.f32 %v1541, %v1554
        %1556 = vdwg.mxu0
        %1557 = vmatpush.bf16.msra.mxu0 %v1260
        %1558 = vmatpush.bf16.msra.mxu0 %v1259
        %1559 = vmatpush.bf16.msra.mxu0 %v1258
        %1560 = vmatpush.bf16.msra.mxu0 %v1257
        %1561 = vmatpush.bf16.msra.mxu0 %v1256
        %1562 = vmatpush.bf16.msra.mxu0 %v1255
        %1563 = vmatpush.bf16.msra.mxu0 %v1254
        %1564 = vmatpush.bf16.msra.mxu0 %v1253
        %1565 = vmatmul.bf16.gmra.mxu0 %v653
        %v1566 = vpop.f32.mrf.mxu0
        %v1567 = vadd.f32 %v1553, %v1566
        %v1568 = vpop.f32.mrf.mxu0
        %v1569 = vadd.f32 %v1555, %v1568
        %1570 = vdwg.mxu0
        %1571 = vmatpush.bf16.msra.mxu0 %v1268
        %1572 = vmatpush.bf16.msra.mxu0 %v1267
        %1573 = vmatpush.bf16.msra.mxu0 %v1266
        %1574 = vmatpush.bf16.msra.mxu0 %v1265
        %1575 = vmatpush.bf16.msra.mxu0 %v1264
        %1576 = vmatpush.bf16.msra.mxu0 %v1263
        %1577 = vmatpush.bf16.msra.mxu0 %v1262
        %1578 = vmatpush.bf16.msra.mxu0 %v1261
        %1579 = vmatmul.bf16.gmra.mxu0 %v654
        %v1580 = vpop.f32.mrf.mxu0
        %v1581 = vadd.f32 %v1567, %v1580
        %v1582 = vpop.f32.mrf.mxu0
        %v1583 = vadd.f32 %v1569, %v1582
        %1584 = vdwg.mxu0
        %1585 = vmatpush.bf16.msra.mxu0 %v1276
        %1586 = vmatpush.bf16.msra.mxu0 %v1275
        %1587 = vmatpush.bf16.msra.mxu0 %v1274
        %1588 = vmatpush.bf16.msra.mxu0 %v1273
        %1589 = vmatpush.bf16.msra.mxu0 %v1272
        %1590 = vmatpush.bf16.msra.mxu0 %v1271
        %1591 = vmatpush.bf16.msra.mxu0 %v1270
        %1592 = vmatpush.bf16.msra.mxu0 %v1269
        %1593 = vmatmul.bf16.gmra.mxu0 %v655
        %v1594 = vpop.f32.mrf.mxu0
        %v1595 = vadd.f32 %v1581, %v1594
        %v1596 = vpop.f32.mrf.mxu0
        %v1597 = vadd.f32 %v1583, %v1596
        %1598 = vdwg.mxu0
        %1599 = vmatpush.bf16.msra.mxu0 %v1284
        %1600 = vmatpush.bf16.msra.mxu0 %v1283
        %1601 = vmatpush.bf16.msra.mxu0 %v1282
        %1602 = vmatpush.bf16.msra.mxu0 %v1281
        %1603 = vmatpush.bf16.msra.mxu0 %v1280
        %1604 = vmatpush.bf16.msra.mxu0 %v1279
        %1605 = vmatpush.bf16.msra.mxu0 %v1278
        %1606 = vmatpush.bf16.msra.mxu0 %v1277
        %1607 = vmatmul.bf16.gmra.mxu0 %v656
        %v1608 = vpop.f32.mrf.mxu0
        %v1609 = vadd.f32 %v1595, %v1608
        %v1610 = vpop.f32.mrf.mxu0
        %v1611 = vadd.f32 %v1597, %v1610
        %1612 = vdwg.mxu0
        %1613 = vmatpush.bf16.msra.mxu0 %v1292
        %1614 = vmatpush.bf16.msra.mxu0 %v1291
        %1615 = vmatpush.bf16.msra.mxu0 %v1290
        %1616 = vmatpush.bf16.msra.mxu0 %v1289
        %1617 = vmatpush.bf16.msra.mxu0 %v1288
        %1618 = vmatpush.bf16.msra.mxu0 %v1287
        %1619 = vmatpush.bf16.msra.mxu0 %v1286
        %1620 = vmatpush.bf16.msra.mxu0 %v1285
        %1621 = vmatmul.bf16.gmra.mxu0 %v657
        %v1622 = vpop.f32.mrf.mxu0
        %v1623 = vadd.f32 %v1609, %v1622
        %v1624 = vpop.f32.mrf.mxu0
        %v1625 = vadd.f32 %v1611, %v1624
        %1626 = vdwg.mxu0
        %1627 = vmatpush.bf16.msra.mxu0 %v1300
        %1628 = vmatpush.bf16.msra.mxu0 %v1299
        %1629 = vmatpush.bf16.msra.mxu0 %v1298
        %1630 = vmatpush.bf16.msra.mxu0 %v1297
        %1631 = vmatpush.bf16.msra.mxu0 %v1296
        %1632 = vmatpush.bf16.msra.mxu0 %v1295
        %1633 = vmatpush.bf16.msra.mxu0 %v1294
        %1634 = vmatpush.bf16.msra.mxu0 %v1293
        %1635 = vmatmul.bf16.gmra.mxu0 %v658
        %v1636 = vpop.f32.mrf.mxu0
        %v1637 = vadd.f32 %v1623, %v1636
        %v1638 = vpop.f32.mrf.mxu0
        %v1639 = vadd.f32 %v1625, %v1638
        %1640 = vdwg.mxu0
        %1641 = vmatpush.bf16.msra.mxu0 %v1308
        %1642 = vmatpush.bf16.msra.mxu0 %v1307
        %1643 = vmatpush.bf16.msra.mxu0 %v1306
        %1644 = vmatpush.bf16.msra.mxu0 %v1305
        %1645 = vmatpush.bf16.msra.mxu0 %v1304
        %1646 = vmatpush.bf16.msra.mxu0 %v1303
        %1647 = vmatpush.bf16.msra.mxu0 %v1302
        %1648 = vmatpush.bf16.msra.mxu0 %v1301
        %1649 = vmatmul.bf16.gmra.mxu0 %v659
        %v1650 = vpop.f32.mrf.mxu0
        %v1651 = vadd.f32 %v1637, %v1650
        %v1652 = vpop.f32.mrf.mxu0
        %v1653 = vadd.f32 %v1639, %v1652
        %1654 = vdwg.mxu0
        %1655 = vmatpush.bf16.msra.mxu0 %v1316
        %1656 = vmatpush.bf16.msra.mxu0 %v1315
        %1657 = vmatpush.bf16.msra.mxu0 %v1314
        %1658 = vmatpush.bf16.msra.mxu0 %v1313
        %1659 = vmatpush.bf16.msra.mxu0 %v1312
        %1660 = vmatpush.bf16.msra.mxu0 %v1311
        %1661 = vmatpush.bf16.msra.mxu0 %v1310
        %1662 = vmatpush.bf16.msra.mxu0 %v1309
        %1663 = vmatmul.bf16.gmra.mxu0 %v660
        %v1664 = vpop.f32.mrf.mxu0
        %v1665 = vadd.f32 %v1651, %v1664
        %v1666 = vpop.f32.mrf.mxu0
        %v1667 = vadd.f32 %v1653, %v1666
        %1668 = vdwg.mxu0
        %v1669 = vadd.f32 %v323, %v1665
        %v1670 = vadd.f32 %v324, %v1667
        %1671 = vst [vmem:[#allocation2] sm:$0xff] %v1669
        %1672 = vst [vmem:[#allocation2 + $0x8] sm:$0xff] %v1670
        %p1673 = scmp.eq.s32.totalorder %s21, 5
        // Predicated region
        $region68: #{classifier_c_forward.3} parent=58 // pred_check
          %p1674 = pneg %p1673
        $region69: #{classifier_c_forward.3} parent=58 // pred_check_branch
          %1676 = sbr.rel (%p1674) target = $region71
        $region70: #{classifier_c_forward.3} parent=58 // pred_region
          %v1677 = vld [vmem:[#allocation2] sm:$0xff]
          %v1678 = vld [vmem:[#allocation2 + $0x8] sm:$0xff]
          %v1679 = vld [vmem:[%s2] sm:$0x1]
          %v1681 = vperm.slane %v1679, 0
          %v1683 = vadd.f32 %v1677, %v1681
          %v1684 = vadd.f32 %v1678, %v1681
          %v1685 = vmax.f32 %v1683, 0.0
          %v1686 = vmax.f32 %v1684, 0.0
          %v1687 = vld [vmem:[%s3] sm:$0xff]
          %v1688 = vld [vmem:[%s3 + $0x8] sm:$0xff]
          %v1689 = vld [vmem:[%s3 + $0x10] sm:$0xff]
          %v1690 = vld [vmem:[%s3 + $0x18] sm:$0xff]
          %v1691 = vld [vmem:[%s3 + $0x20] sm:$0xff]
          %v1692 = vld [vmem:[%s3 + $0x28] sm:$0xff]
          %v1693 = vld [vmem:[%s3 + $0x30] sm:$0xff]
          %v1694 = vld [vmem:[%s3 + $0x38] sm:$0xff]
          %v1695 = vld [vmem:[%s3 + $0x40] sm:$0xff]
          %v1696 = vld [vmem:[%s3 + $0x48] sm:$0xff]
          %v1697 = vld [vmem:[%s3 + $0x50] sm:$0xff]
          %v1698 = vld [vmem:[%s3 + $0x58] sm:$0xff]
          %v1699 = vld [vmem:[%s3 + $0x60] sm:$0xff]
          %v1700 = vld [vmem:[%s3 + $0x68] sm:$0xff]
          %v1701 = vld [vmem:[%s3 + $0x70] sm:$0xff]
          %v1702 = vld [vmem:[%s3 + $0x78] sm:$0xff]
          %v1703 = vld [vmem:[%s4] sm:$0x1]
          %v1705 = vperm.slane %v1703, 0
          %1707 = vmatpush.msra.mxu0 %v1702
          %1708 = vmatpush.msra.mxu0 %v1701
          %1709 = vmatpush.msra.mxu0 %v1700
          %1710 = vmatpush.msra.mxu0 %v1699
          %1711 = vmatpush.msra.mxu0 %v1698
          %1712 = vmatpush.msra.mxu0 %v1697
          %1713 = vmatpush.msra.mxu0 %v1696
          %1714 = vmatpush.msra.mxu0 %v1695
          %1715 = vmatpush.msra.mxu0 %v1694
          %1716 = vmatpush.msra.mxu0 %v1693
          %1717 = vmatpush.msra.mxu0 %v1692
          %1718 = vmatpush.msra.mxu0 %v1691
          %1719 = vmatpush.msra.mxu0 %v1690
          %1720 = vmatpush.msra.mxu0 %v1689
          %1721 = vmatpush.msra.mxu0 %v1688
          %1722 = vmatpush.msra.mxu0 %v1687
          %1723 = vmatmul.f32.gmra.mxu0 %v1685
          %v1724 = vpop.f32.mrf.mxu0
          %v1725 = vadd.f32 %v1705, %v1724
          %1726 = vmatmul.f32.gmra.mxu0 %v1686
          %v1727 = vpop.f32.mrf.mxu0
          %v1728 = vadd.f32 %v1705, %v1727
          %1729 = vdwg.mxu0
          %vm1730 = vcmask 80896
          %1731 = vst.msk [vmem:[%s315] sm:$0xff] %vm1730, %v1725
          %1732 = vst.msk [vmem:[%s315 + $0x8] sm:$0xff] %vm1730, %v1728
        $region71: #{classifier_c_forward.3} parent=58 // pred_fallthru
          _
        %s1733 = smul.u32 2, %s20
        %p1734 = scmp.lt.s32.totalorder %s1733, 1
        %s1735 = scalar_select %p1734, %s1733, 1
        %s1736 = smul.addr %s1735, 8
        %s1737 = scalar_lea.vmem %s5, %s1736
        // Predicated region
        $region72: #{classifier_c_forward.3} parent=58 // pred_check
          %p1738 = pneg %p163
        $region73: #{classifier_c_forward.3} parent=58 // pred_check_branch
          %1740 = sbr.rel (%p1738) target = $region75
        $region74: #{classifier_c_forward.3} parent=58 // pred_region
          %s1741 = smul.u32 2, %s20
        $region75: #{classifier_c_forward.3} parent=58 // pred_fallthru
          _
        // Predicated region
        $region76: #{classifier_c_forward.3} parent=58 // pred_check
          %p1742 = pneg %p163
        $region77: #{classifier_c_forward.3} parent=58 // pred_check_branch
          %1744 = sbr.rel (%p1742) target = $region79
        $region78: #{classifier_c_forward.3} parent=58 // pred_region
          %s1745 = smul.u32 2, %s20
          %p1746 = scmp.lt.s32.totalorder %s1745, 1
          %s1747 = scalar_select %p1746, %s1745, 1
          %s1748 = smul.addr %s1747, 8
          %s1749 = scalar_lea.vmem %s5, %s1748
        $region79: #{classifier_c_forward.3} parent=58 // pred_fallthru
          _
      $region59: #{classifier_c_forward.3} parent=5 // pred_fallthru
        _
      %p1750 = scmp.le.s32.totalorder 2, %s11
      // Predicated region
      $region80: #{classifier_c_forward.3} parent=5 // pred_check
        %p1751 = pneg %p1750
      $region81: #{classifier_c_forward.3} parent=5 // pred_check_branch
        %1753 = sbr.rel (%p1751) target = $region83
      $region82: #{classifier_c_forward.3} parent=5 // pred_region
        %s1754 = ssub.s32 %s11, 2
      $region83: #{classifier_c_forward.3} parent=5 // pred_fallthru
        _
    $region6: #{classifier_c_forward.3} parent=1 // loop_footer
      %s15 = sadd.s32 1, %s11
    $region7: #{classifier_c_forward.3} parent=1 // loop_footer_branch
      %10 = sbr.rel target = $region3
    $region8: #{classifier_c_forward.3} parent=1 // loop_exit
      _

// kernel: classifier_c_forward.2
$region0: #{classifier_c_forward.2}
  #allocation0 [shape = 'u32[]', space=smem, size = 0x4, offset = 0x4, fixed_abs, tag = 'smem constant byte address 0x4 - core index']
  #allocation1 [shape = 'u32[72,128]{1,0:T(1,128)}', space=vmem, size = 0x9000, scoped, tag = 'internal scratch']
  #allocation2 [shape = 'bf16[2,2,196,128]{3,2,1,0:T(8,128)(2,1)}', space=vmem, size = 0x32000, scoped, tag = 'scratch operand']
  %s0 = inlined_call_operand.vmem [shape: bf16[2,2,2,196,9], index: 0, kind: input, shape index: {}]
  %s1 = inlined_call_operand.vmem [shape: bf16[9,128], index: 1, kind: input, shape index: {}]
  %s2 = inlined_call_operand.vmem [shape: f32[1,128], index: 2, kind: input, shape index: {}]
  %s3 = inlined_call_operand.vmem [shape: bf16[9,128,64], index: 3, kind: input, shape index: {}]
  %s4 = inlined_call_operand.vmem [shape: f32[1,64], index: 4, kind: input, shape index: {}]
  %s5 = inlined_call_operand.vmem [shape: bf16[2,192,64], index: 5, kind: output, shape index: {}]
  %s6 = sld [smem:[#allocation0]]
  $region53: #{classifier_c_forward.2} parent=0
    _
  %s8 = ssub.s32 1, %s6
  %s9 = scalar_select 0, %s8, %s6
  loop: start=0, step=1, limit=4
  $region2: #{classifier_c_forward.2} parent=0 // loop_pre_header
    _
  $region3: #{classifier_c_forward.2} parent=0 // loop_header
    %s11 = sphi 0, %s15
    %p12 = scmp.ge.s32.totalorder %s11, 4
    %s21 = sphi 0, %s23
    %s24 = sphi 0, %s21
    %s25 = sphi 0, %s24
    %s41 = sphi 0, %s25
    %s45 = sphi 0, %s45
    %s47 = sphi 0, %s45
    %s48 = sphi 0, %s47
    %s62 = sphi 0, %s48
    %s66 = sphi 0, %s66
    %s68 = sphi 0, %s66
    %s69 = sphi 0, %s68
    %s83 = sphi 0, %s69
    %s87 = sphi 0, %s87
    %s89 = sphi 0, %s87
    %s90 = sphi 0, %s89
    %s104 = sphi 0, %s90
    %s108 = sphi 0, %s108
    %s110 = sphi 0, %s108
    %s111 = sphi 0, %s110
    %s125 = sphi 0, %s111
    %s131 = sphi 0, %s133
    %s134 = sphi 0, %s131
    %s135 = sphi 0, %s134
    %s151 = sphi 0, %s135
  $region4: #{classifier_c_forward.2} parent=0 // loop_header_branch
    %14 = sbr.rel (%p12) target = $region8
  $region5: #{classifier_c_forward.2} parent=0 // loop_body
    %s16 = ssub.s32 %s11, 1
    %s17 = ssub.s32 %s11, 2
    %s18 = sadd.s32 %s11, 1
    %s19 = ssub.s32 %s11, %s18
    %p20 = scmp.eq.s32.totalorder %s19, 0
    %s22 = sadd.s32 %s21, 1
    %s23 = scalar_select %p20, %s21, %s22
    %p26 = pneg %p20
    %p27 = scmp.eq.s32.totalorder %s11, 1
    %p28 = por %p26, %p27
    %p29 = scmp.ne.s32.totalorder %s21, %s24
    %p30 = scmp.eq.s32.totalorder %s11, 0
    %p31 = por %p29, %p30
    %p32 = scmp.ne.s32.totalorder %s21, %s24
    %p33 = scmp.eq.s32.totalorder %s16, 1
    %p34 = por %p32, %p33
    %p35 = scmp.ne.s32.totalorder %s24, %s25
    %p36 = scmp.eq.s32.totalorder %s16, 0
    %p37 = por %p35, %p36
    %p38 = scmp.ne.s32.totalorder %s24, %s25
    %p39 = scmp.eq.s32.totalorder %s17, 1
    %p40 = por %p38, %p39
    %p42 = scmp.ne.s32.totalorder %s25, %s41
    %p43 = scmp.eq.s32.totalorder %s17, 0
    %p44 = por %p42, %p43
    %s46 = sadd.s32 %s45, 1
    %p49 = scmp.eq.s32.totalorder %s11, 1
    %p50 = scmp.ne.s32.totalorder %s45, %s47
    %p51 = scmp.eq.s32.totalorder %s11, 0
    %p52 = por %p50, %p51
    %p53 = scmp.ne.s32.totalorder %s45, %s47
    %p54 = scmp.eq.s32.totalorder %s16, 1
    %p55 = por %p53, %p54
    %p56 = scmp.ne.s32.totalorder %s47, %s48
    %p57 = scmp.eq.s32.totalorder %s16, 0
    %p58 = por %p56, %p57
    %p59 = scmp.ne.s32.totalorder %s47, %s48
    %p60 = scmp.eq.s32.totalorder %s17, 1
    %p61 = por %p59, %p60
    %p63 = scmp.ne.s32.totalorder %s48, %s62
    %p64 = scmp.eq.s32.totalorder %s17, 0
    %p65 = por %p63, %p64
    %s67 = sadd.s32 %s66, 1
    %p70 = scmp.eq.s32.totalorder %s11, 1
    %p71 = scmp.ne.s32.totalorder %s66, %s68
    %p72 = scmp.eq.s32.totalorder %s11, 0
    %p73 = por %p71, %p72
    %p74 = scmp.ne.s32.totalorder %s66, %s68
    %p75 = scmp.eq.s32.totalorder %s16, 1
    %p76 = por %p74, %p75
    %p77 = scmp.ne.s32.totalorder %s68, %s69
    %p78 = scmp.eq.s32.totalorder %s16, 0
    %p79 = por %p77, %p78
    %p80 = scmp.ne.s32.totalorder %s68, %s69
    %p81 = scmp.eq.s32.totalorder %s17, 1
    %p82 = por %p80, %p81
    %p84 = scmp.ne.s32.totalorder %s69, %s83
    %p85 = scmp.eq.s32.totalorder %s17, 0
    %p86 = por %p84, %p85
    %s88 = sadd.s32 %s87, 1
    %p91 = scmp.eq.s32.totalorder %s11, 1
    %p92 = scmp.ne.s32.totalorder %s87, %s89
    %p93 = scmp.eq.s32.totalorder %s11, 0
    %p94 = por %p92, %p93
    %p95 = scmp.ne.s32.totalorder %s87, %s89
    %p96 = scmp.eq.s32.totalorder %s16, 1
    %p97 = por %p95, %p96
    %p98 = scmp.ne.s32.totalorder %s89, %s90
    %p99 = scmp.eq.s32.totalorder %s16, 0
    %p100 = por %p98, %p99
    %p101 = scmp.ne.s32.totalorder %s89, %s90
    %p102 = scmp.eq.s32.totalorder %s17, 1
    %p103 = por %p101, %p102
    %p105 = scmp.ne.s32.totalorder %s90, %s104
    %p106 = scmp.eq.s32.totalorder %s17, 0
    %p107 = por %p105, %p106
    %s109 = sadd.s32 %s108, 1
    %p112 = scmp.eq.s32.totalorder %s11, 1
    %p113 = scmp.ne.s32.totalorder %s108, %s110
    %p114 = scmp.eq.s32.totalorder %s11, 0
    %p115 = por %p113, %p114
    %p116 = scmp.ne.s32.totalorder %s108, %s110
    %p117 = scmp.eq.s32.totalorder %s16, 1
    %p118 = por %p116, %p117
    %p119 = scmp.ne.s32.totalorder %s110, %s111
    %p120 = scmp.eq.s32.totalorder %s16, 0
    %p121 = por %p119, %p120
    %p122 = scmp.ne.s32.totalorder %s110, %s111
    %p123 = scmp.eq.s32.totalorder %s17, 1
    %p124 = por %p122, %p123
    %p126 = scmp.ne.s32.totalorder %s111, %s125
    %p127 = scmp.eq.s32.totalorder %s17, 0
    %p128 = por %p126, %p127
    %s129 = ssub.s32 %s11, %s18
    %p130 = scmp.eq.s32.totalorder %s129, 0
    %s132 = sadd.s32 %s131, 1
    %s133 = scalar_select %p130, %s131, %s132
    %p136 = pneg %p130
    %p137 = scmp.eq.s32.totalorder %s11, 1
    %p138 = por %p136, %p137
    %p139 = scmp.ne.s32.totalorder %s131, %s134
    %p140 = scmp.eq.s32.totalorder %s11, 0
    %p141 = por %p139, %p140
    %p142 = scmp.ne.s32.totalorder %s131, %s134
    %p143 = scmp.eq.s32.totalorder %s16, 1
    %p144 = por %p142, %p143
    %p145 = scmp.ne.s32.totalorder %s134, %s135
    %p146 = scmp.eq.s32.totalorder %s16, 0
    %p147 = por %p145, %p146
    %p148 = scmp.ne.s32.totalorder %s134, %s135
    %p149 = scmp.eq.s32.totalorder %s17, 1
    %p150 = por %p148, %p149
    %p152 = scmp.ne.s32.totalorder %s135, %s151
    %p153 = scmp.eq.s32.totalorder %s17, 0
    %p154 = por %p152, %p153
    %p155 = scmp.le.s32.totalorder 1, %s11
    %p156 = scmp.lt.s32.totalorder %s11, 3
    %p157 = pnand %p155, %p156
    %p158 = pneg %p157
    // Predicated region
    $region9: #{classifier_c_forward.2} parent=5 // pred_check
      _
    $region10: #{classifier_c_forward.2} parent=5 // pred_check_branch
      %160 = sbr.rel (%p157) target = $region12
    $region11: #{classifier_c_forward.2} parent=5 // pred_region
      %s161 = ssub.s32 %s11, 1
      // Predicated region
      $region13: #{classifier_c_forward.2} parent=11 // pred_check
        %p162 = pneg %p58
      $region14: #{classifier_c_forward.2} parent=11 // pred_check_branch
        %164 = sbr.rel (%p162) target = $region16
      $region15: #{classifier_c_forward.2} parent=11 // pred_region
        _
      $region16: #{classifier_c_forward.2} parent=11 // pred_fallthru
        _
      // Predicated region
      $region17: #{classifier_c_forward.2} parent=11 // pred_check
        %p165 = pneg %p79
      $region18: #{classifier_c_forward.2} parent=11 // pred_check_branch
        %167 = sbr.rel (%p165) target = $region20
      $region19: #{classifier_c_forward.2} parent=11 // pred_region
        _
      $region20: #{classifier_c_forward.2} parent=11 // pred_fallthru
        _
      // Predicated region
      $region21: #{classifier_c_forward.2} parent=11 // pred_check
        %p168 = pneg %p100
      $region22: #{classifier_c_forward.2} parent=11 // pred_check_branch
        %170 = sbr.rel (%p168) target = $region24
      $region23: #{classifier_c_forward.2} parent=11 // pred_region
        _
      $region24: #{classifier_c_forward.2} parent=11 // pred_fallthru
        _
      // Predicated region
      $region25: #{classifier_c_forward.2} parent=11 // pred_check
        %p171 = pneg %p121
      $region26: #{classifier_c_forward.2} parent=11 // pred_check_branch
        %173 = sbr.rel (%p171) target = $region28
      $region27: #{classifier_c_forward.2} parent=11 // pred_region
        _
      $region28: #{classifier_c_forward.2} parent=11 // pred_fallthru
        _
    $region12: #{classifier_c_forward.2} parent=5 // pred_fallthru
      _
    %p174 = scmp.lt.s32.totalorder %s11, 2
    // Predicated region
    $region29: #{classifier_c_forward.2} parent=5 // pred_check
      %p175 = pneg %p174
    $region30: #{classifier_c_forward.2} parent=5 // pred_check_branch
      %177 = sbr.rel (%p175) target = $region32
    $region31: #{classifier_c_forward.2} parent=5 // pred_region
      // Predicated region
      $region33: #{classifier_c_forward.2} parent=31 // pred_check
        %p178 = pneg %p31
      $region34: #{classifier_c_forward.2} parent=31 // pred_check_branch
        %180 = sbr.rel (%p178) target = $region36
      $region35: #{classifier_c_forward.2} parent=31 // pred_region
        %p181 = scmp.lt.s32.totalorder %s11, 1
        %s182 = scalar_select %p181, %s11, 1
        %s183 = smul.addr %s182, 100
        %s184 = smul.addr %s183, 4
        %s185 = scalar_lea.vmem %s0, %s184
      $region36: #{classifier_c_forward.2} parent=31 // pred_fallthru
        _
    $region32: #{classifier_c_forward.2} parent=5 // pred_fallthru
      _
    %p186 = scmp.le.s32.totalorder 1, %s11
    %p187 = scmp.lt.s32.totalorder %s11, 3
    %p188 = pnand %p186, %p187
    %p189 = pneg %p188
    // Predicated region
    $region37: #{classifier_c_forward.2} parent=5 // pred_check
      _
    $region38: #{classifier_c_forward.2} parent=5 // pred_check_branch
      %191 = sbr.rel (%p188) target = $region40
    $region39: #{classifier_c_forward.2} parent=5 // pred_region
      %s192 = ssub.s32 %s11, 1
      %p193 = scmp.lt.s32.totalorder %s16, 1
      %s194 = scalar_select %p193, %s16, 1
      %s195 = smul.addr %s194, 100
      %s196 = smul.addr %s195, 4
      %s197 = scalar_lea.vmem %s0, %s196
      %p198 = pneg %p37
      %p199 = pneg %p34
      %p200 = pneg %p58
      %p201 = pneg %p55
      %p202 = pneg %p79
      %p203 = pneg %p76
      %p204 = pneg %p100
      %p205 = pneg %p97
      %p206 = pneg %p121
      %p207 = pneg %p118
      %p208 = pneg %p147
      %p209 = pneg %p144
      %p210 = scmp.lt.s32.totalorder %s16, 1
      %s211 = scalar_select %p210, %s16, 1
      %s212 = smul.addr %s211, 24
      %s213 = smul.addr %s212, 4
      %s214 = scalar_lea.vmem %s5, %s213
      %p215 = scmp.lt.s32.totalorder %s16, 1
      %s216 = scalar_select %p215, %s16, 1
      %s217 = smul.addr %s216, 100
      %s218 = smul.addr %s217, 4
      %s219 = scalar_lea.vmem %s0, %s218
      %p220 = scmp.lt.s32.totalorder %s16, 1
      %s221 = scalar_select %p220, %s16, 1
      %s222 = smul.addr %s221, 24
      %s223 = smul.addr %s222, 4
      %s224 = scalar_lea.vmem %s5, %s223
      %v226 = vld [vmem:[%s219] sm:$0xf]
      %v227 = vld [vmem:[%s219 + $0x4] sm:$0xf]
      %v228 = vld [vmem:[%s219 + $0x8] sm:$0xf]
      %v229 = vld [vmem:[%s219 + $0xc] sm:$0xf]
      %v230 = vld [vmem:[%s219 + $0x10] sm:$0xf]
      %v231 = vld [vmem:[%s219 + $0x14] sm:$0xf]
      %v232 = vld [vmem:[%s219 + $0x18] sm:$0xf]
      %v233 = vld [vmem:[%s219 + $0x1c] sm:$0xf]
      %v234 = vld [vmem:[%s219 + $0x20] sm:$0xf]
      %v235 = vld [vmem:[%s219 + $0x24] sm:$0xf]
      %v236 = vld [vmem:[%s219 + $0x28] sm:$0xf]
      %v237 = vld [vmem:[%s219 + $0x2c] sm:$0xf]
      %v238 = vld [vmem:[%s219 + $0x30] sm:$0xf]
      %v239 = vld [vmem:[%s219 + $0x34] sm:$0xf]
      %v240 = vld [vmem:[%s219 + $0x38] sm:$0xf]
      %v241 = vld [vmem:[%s219 + $0x3c] sm:$0xf]
      %v242 = vld [vmem:[%s219 + $0x40] sm:$0xf]
      %v243 = vld [vmem:[%s219 + $0x44] sm:$0xf]
      %v244 = vld [vmem:[%s219 + $0x48] sm:$0xf]
      %v245 = vld [vmem:[%s219 + $0x4c] sm:$0xf]
      %v246 = vld [vmem:[%s219 + $0x50] sm:$0xf]
      %v247 = vld [vmem:[%s219 + $0x54] sm:$0xf]
      %v248 = vld [vmem:[%s219 + $0x58] sm:$0xf]
      %v249 = vld [vmem:[%s219 + $0x5c] sm:$0xf]
      %v250 = vld [vmem:[%s219 + $0x60] sm:$0x3]
      %v251 = vld [vmem:[%s1] sm:$0xf]
      %v252 = vld [vmem:[%s1 + $0x4] sm:$0x1]
      %v253 = vld [vmem:[%s2] sm:$0x1]
      %v255 = vperm.slane %v253, 0
      %v282 = vunpack.c.l.b16 %v226
      %v283 = vunpack.c.l.b16 %v227
      %v284 = vunpack.c.l.b16 %v228
      %v285 = vunpack.c.l.b16 %v229
      %v286 = vunpack.c.l.b16 %v230
      %v287 = vunpack.c.l.b16 %v231
      %v288 = vunpack.c.l.b16 %v232
      %v289 = vunpack.c.l.b16 %v233
      %v290 = vunpack.c.l.b16 %v234
      %v291 = vunpack.c.l.b16 %v235
      %v292 = vunpack.c.l.b16 %v236
      %v293 = vunpack.c.l.b16 %v237
      %v294 = vunpack.c.l.b16 %v238
      %v295 = vunpack.c.l.b16 %v239
      %v296 = vunpack.c.l.b16 %v240
      %v297 = vunpack.c.l.b16 %v241
      %v298 = vunpack.c.l.b16 %v242
      %v299 = vunpack.c.l.b16 %v243
      %v300 = vunpack.c.l.b16 %v244
      %v301 = vunpack.c.l.b16 %v245
      %v302 = vunpack.c.l.b16 %v246
      %v303 = vunpack.c.l.b16 %v247
      %v304 = vunpack.c.l.b16 %v248
      %v305 = vunpack.c.l.b16 %v249
      %v306 = vunpack.c.l.b16 %v250
      %v307 = vpack.c.b16 %v283, %v282
      %v308 = vpack.c.b16 %v285, %v284
      %v309 = vpack.c.b16 %v287, %v286
      %v310 = vpack.c.b16 %v289, %v288
      %v311 = vpack.c.b16 %v291, %v290
      %v312 = vpack.c.b16 %v293, %v292
      %v313 = vpack.c.b16 %v295, %v294
      %v314 = vpack.c.b16 %v297, %v296
      %v315 = vpack.c.b16 %v299, %v298
      %v316 = vpack.c.b16 %v301, %v300
      %v317 = vpack.c.b16 %v303, %v302
      %v318 = vpack.c.b16 %v305, %v304
      %v319 = vpack.c.b16 %v306, %v306
      %v322 = vunpack.c.l.b16 %v251
      %v323 = vunpack.c.l.b16 %v252
      %v324 = vpack.c.b16 %v323, %v322
      %vm325 = vcmask 72704
      %v327 = vsel %vm325, %v307, 0
      %v330 = vsel %vm325, %v308, 0
      %v333 = vsel %vm325, %v309, 0
      %v336 = vsel %vm325, %v310, 0
      %v339 = vsel %vm325, %v311, 0
      %v342 = vsel %vm325, %v312, 0
      %v345 = vsel %vm325, %v313, 0
      %v348 = vsel %vm325, %v314, 0
      %v351 = vsel %vm325, %v315, 0
      %v354 = vsel %vm325, %v316, 0
      %v357 = vsel %vm325, %v317, 0
      %v360 = vsel %vm325, %v318, 0
      %v363 = vsel %vm325, %v319, 0
      %vm365 = vcmask 1043456
      %vm366 = vcmask 1044480
      %v367 = vsel %vm365, 4294967295, 65535
      %v368 = vsel %vm366, %v367, 0
      %v370 = vand.u32 %v324, %v368
      %372 = vmatpush.bf16.msra.mxu0 0
      %373 = vmatpush.bf16.msra.mxu0 0
      %374 = vmatpush.bf16.msra.mxu0 0
      %375 = vmatpush.bf16.msra.mxu0 0
      %376 = vmatpush.bf16.msra.mxu0 0
      %377 = vmatpush.bf16.msra.mxu0 0
      %378 = vmatpush.bf16.msra.mxu0 0
      %379 = vmatpush.bf16.msra.mxu0 %v370
      %380 = vmatmul.bf16.gmra.mxu0 %v327
      %v381 = vpop.f32.mrf.mxu0
      %v382 = vadd.f32 %v255, %v381
      %v383 = vpop.f32.mrf.mxu0
      %v384 = vadd.f32 %v255, %v383
      %385 = vmatmul.bf16.gmra.mxu0 %v330
      %v386 = vpop.f32.mrf.mxu0
      %v387 = vadd.f32 %v255, %v386
      %v388 = vpop.f32.mrf.mxu0
      %v389 = vadd.f32 %v255, %v388
      %390 = vmatmul.bf16.gmra.mxu0 %v333
      %v391 = vpop.f32.mrf.mxu0
      %v392 = vadd.f32 %v255, %v391
      %v393 = vpop.f32.mrf.mxu0
      %v394 = vadd.f32 %v255, %v393
      %395 = vmatmul.bf16.gmra.mxu0 %v336
      %v396 = vpop.f32.mrf.mxu0
      %v397 = vadd.f32 %v255, %v396
      %v398 = vpop.f32.mrf.mxu0
      %v399 = vadd.f32 %v255, %v398
      %400 = vmatmul.bf16.gmra.mxu0 %v339
      %v401 = vpop.f32.mrf.mxu0
      %v402 = vadd.f32 %v255, %v401
      %v403 = vpop.f32.mrf.mxu0
      %v404 = vadd.f32 %v255, %v403
      %405 = vmatmul.bf16.gmra.mxu0 %v342
      %v406 = vpop.f32.mrf.mxu0
      %v407 = vadd.f32 %v255, %v406
      %v408 = vpop.f32.mrf.mxu0
      %v409 = vadd.f32 %v255, %v408
      %410 = vmatmul.bf16.gmra.mxu0 %v345
      %v411 = vpop.f32.mrf.mxu0
      %v412 = vadd.f32 %v255, %v411
      %v413 = vpop.f32.mrf.mxu0
      %v414 = vadd.f32 %v255, %v413
      %415 = vmatmul.bf16.gmra.mxu0 %v348
      %v416 = vpop.f32.mrf.mxu0
      %v417 = vadd.f32 %v255, %v416
      %v418 = vpop.f32.mrf.mxu0
      %v419 = vadd.f32 %v255, %v418
      %420 = vmatmul.bf16.gmra.mxu0 %v351
      %v421 = vpop.f32.mrf.mxu0
      %v422 = vadd.f32 %v255, %v421
      %v423 = vpop.f32.mrf.mxu0
      %v424 = vadd.f32 %v255, %v423
      %425 = vmatmul.bf16.gmra.mxu0 %v354
      %v426 = vpop.f32.mrf.mxu0
      %v427 = vadd.f32 %v255, %v426
      %v428 = vpop.f32.mrf.mxu0
      %v429 = vadd.f32 %v255, %v428
      %430 = vmatmul.bf16.gmra.mxu0 %v357
      %v431 = vpop.f32.mrf.mxu0
      %v432 = vadd.f32 %v255, %v431
      %v433 = vpop.f32.mrf.mxu0
      %v434 = vadd.f32 %v255, %v433
      %435 = vmatmul.bf16.gmra.mxu0 %v360
      %v436 = vpop.f32.mrf.mxu0
      %v437 = vadd.f32 %v255, %v436
      %v438 = vpop.f32.mrf.mxu0
      %v439 = vadd.f32 %v255, %v438
      %440 = vmatmul.bf16.gmra.mxu0 %v363
      %v441 = vpop.f32.mrf.mxu0
      %v442 = vadd.f32 %v255, %v441
      %v443 = vpop.f32.mrf.mxu0
      %444 = vdwg.mxu0
      %v445 = vmax.f32 %v382, 0.0
      %v446 = vmax.f32 %v384, 0.0
      %v447 = vmax.f32 %v387, 0.0
      %v448 = vmax.f32 %v389, 0.0
      %v449 = vmax.f32 %v392, 0.0
      %v450 = vmax.f32 %v394, 0.0
      %v451 = vmax.f32 %v397, 0.0
      %v452 = vmax.f32 %v399, 0.0
      %v453 = vmax.f32 %v402, 0.0
      %v454 = vmax.f32 %v404, 0.0
      %v455 = vmax.f32 %v407, 0.0
      %v456 = vmax.f32 %v409, 0.0
      %v457 = vmax.f32 %v412, 0.0
      %v458 = vmax.f32 %v414, 0.0
      %v459 = vmax.f32 %v417, 0.0
      %v460 = vmax.f32 %v419, 0.0
      %v461 = vmax.f32 %v422, 0.0
      %v462 = vmax.f32 %v424, 0.0
      %v463 = vmax.f32 %v427, 0.0
      %v464 = vmax.f32 %v429, 0.0
      %v465 = vmax.f32 %v432, 0.0
      %v466 = vmax.f32 %v434, 0.0
      %v467 = vmax.f32 %v437, 0.0
      %v468 = vmax.f32 %v439, 0.0
      %v469 = vmax.f32 %v442, 0.0
      %v470 = vpack.c.bf16 %v445, %v445
      %v471 = vpack.c.bf16 %v446, %v446
      %v472 = vpack.c.bf16 %v447, %v447
      %v473 = vpack.c.bf16 %v448, %v448
      %v474 = vpack.c.bf16 %v449, %v449
      %v475 = vpack.c.bf16 %v450, %v450
      %v476 = vpack.c.bf16 %v451, %v451
      %v477 = vpack.c.bf16 %v452, %v452
      %v478 = vpack.c.bf16 %v453, %v453
      %v479 = vpack.c.bf16 %v454, %v454
      %v480 = vpack.c.bf16 %v455, %v455
      %v481 = vpack.c.bf16 %v456, %v456
      %v482 = vpack.c.bf16 %v457, %v457
      %v483 = vpack.c.bf16 %v458, %v458
      %v484 = vpack.c.bf16 %v459, %v459
      %v485 = vpack.c.bf16 %v460, %v460
      %v486 = vpack.c.bf16 %v461, %v461
      %v487 = vpack.c.bf16 %v462, %v462
      %v488 = vpack.c.bf16 %v463, %v463
      %v489 = vpack.c.bf16 %v464, %v464
      %v490 = vpack.c.bf16 %v465, %v465
      %v491 = vpack.c.bf16 %v466, %v466
      %v492 = vpack.c.bf16 %v467, %v467
      %v493 = vpack.c.bf16 %v468, %v468
      %v494 = vpack.c.bf16 %v469, %v469
      %495 = vst [vmem:[#allocation2] sm:$0xf] %v470
      %496 = vst [vmem:[#allocation2 + $0x4] sm:$0xf] %v471
      %497 = vst [vmem:[#allocation2 + $0x8] sm:$0xf] %v472
      %498 = vst [vmem:[#allocation2 + $0xc] sm:$0xf] %v473
      %499 = vst [vmem:[#allocation2 + $0x10] sm:$0xf] %v474
      %500 = vst [vmem:[#allocation2 + $0x14] sm:$0xf] %v475
      %501 = vst [vmem:[#allocation2 + $0x18] sm:$0xf] %v476
      %502 = vst [vmem:[#allocation2 + $0x1c] sm:$0xf] %v477
      %503 = vst [vmem:[#allocation2 + $0x20] sm:$0xf] %v478
      %504 = vst [vmem:[#allocation2 + $0x24] sm:$0xf] %v479
      %505 = vst [vmem:[#allocation2 + $0x28] sm:$0xf] %v480
      %506 = vst [vmem:[#allocation2 + $0x2c] sm:$0xf] %v481
      %507 = vst [vmem:[#allocation2 + $0x30] sm:$0xf] %v482
      %508 = vst [vmem:[#allocation2 + $0x34] sm:$0xf] %v483
      %509 = vst [vmem:[#allocation2 + $0x38] sm:$0xf] %v484
      %510 = vst [vmem:[#allocation2 + $0x3c] sm:$0xf] %v485
      %511 = vst [vmem:[#allocation2 + $0x40] sm:$0xf] %v486
      %512 = vst [vmem:[#allocation2 + $0x44] sm:$0xf] %v487
      %513 = vst [vmem:[#allocation2 + $0x48] sm:$0xf] %v488
      %514 = vst [vmem:[#allocation2 + $0x4c] sm:$0xf] %v489
      %515 = vst [vmem:[#allocation2 + $0x50] sm:$0xf] %v490
      %516 = vst [vmem:[#allocation2 + $0x54] sm:$0xf] %v491
      %517 = vst [vmem:[#allocation2 + $0x58] sm:$0xf] %v492
      %518 = vst [vmem:[#allocation2 + $0x5c] sm:$0xf] %v493
      %519 = vst [vmem:[#allocation2 + $0x60] sm:$0x3] %v494
      %s520 = scalar_lea.vmem %s219, 100
      %v521 = vld [vmem:[%s520] sm:$0xf]
      %v522 = vld [vmem:[%s520 + $0x4] sm:$0xf]
      %v523 = vld [vmem:[%s520 + $0x8] sm:$0xf]
      %v524 = vld [vmem:[%s520 + $0xc] sm:$0xf]
      %v525 = vld [vmem:[%s520 + $0x10] sm:$0xf]
      %v526 = vld [vmem:[%s520 + $0x14] sm:$0xf]
      %v527 = vld [vmem:[%s520 + $0x18] sm:$0xf]
      %v528 = vld [vmem:[%s520 + $0x1c] sm:$0xf]
      %v529 = vld [vmem:[%s520 + $0x20] sm:$0xf]
      %v530 = vld [vmem:[%s520 + $0x24] sm:$0xf]
      %v531 = vld [vmem:[%s520 + $0x28] sm:$0xf]
      %v532 = vld [vmem:[%s520 + $0x2c] sm:$0xf]
      %v533 = vld [vmem:[%s520 + $0x30] sm:$0xf]
      %v534 = vld [vmem:[%s520 + $0x34] sm:$0xf]
      %v535 = vld [vmem:[%s520 + $0x38] sm:$0xf]
      %v536 = vld [vmem:[%s520 + $0x3c] sm:$0xf]
      %v537 = vld [vmem:[%s520 + $0x40] sm:$0xf]
      %v538 = vld [vmem:[%s520 + $0x44] sm:$0xf]
      %v539 = vld [vmem:[%s520 + $0x48] sm:$0xf]
      %v540 = vld [vmem:[%s520 + $0x4c] sm:$0xf]
      %v541 = vld [vmem:[%s520 + $0x50] sm:$0xf]
      %v542 = vld [vmem:[%s520 + $0x54] sm:$0xf]
      %v543 = vld [vmem:[%s520 + $0x58] sm:$0xf]
      %v544 = vld [vmem:[%s520 + $0x5c] sm:$0xf]
      %v545 = vld [vmem:[%s520 + $0x60] sm:$0x3]
      %v546 = vld [vmem:[%s1] sm:$0xf]
      %v547 = vld [vmem:[%s1 + $0x4] sm:$0x1]
      %v548 = vld [vmem:[%s2] sm:$0x1]
      %v550 = vperm.slane %v548, 0
      %v577 = vunpack.c.l.b16 %v521
      %v578 = vunpack.c.l.b16 %v522
      %v579 = vunpack.c.l.b16 %v523
      %v580 = vunpack.c.l.b16 %v524
      %v581 = vunpack.c.l.b16 %v525
      %v582 = vunpack.c.l.b16 %v526
      %v583 = vunpack.c.l.b16 %v527
      %v584 = vunpack.c.l.b16 %v528
      %v585 = vunpack.c.l.b16 %v529
      %v586 = vunpack.c.l.b16 %v530
      %v587 = vunpack.c.l.b16 %v531
      %v588 = vunpack.c.l.b16 %v532
      %v589 = vunpack.c.l.b16 %v533
      %v590 = vunpack.c.l.b16 %v534
      %v591 = vunpack.c.l.b16 %v535
      %v592 = vunpack.c.l.b16 %v536
      %v593 = vunpack.c.l.b16 %v537
      %v594 = vunpack.c.l.b16 %v538
      %v595 = vunpack.c.l.b16 %v539
      %v596 = vunpack.c.l.b16 %v540
      %v597 = vunpack.c.l.b16 %v541
      %v598 = vunpack.c.l.b16 %v542
      %v599 = vunpack.c.l.b16 %v543
      %v600 = vunpack.c.l.b16 %v544
      %v601 = vunpack.c.l.b16 %v545
      %v602 = vpack.c.b16 %v578, %v577
      %v603 = vpack.c.b16 %v580, %v579
      %v604 = vpack.c.b16 %v582, %v581
      %v605 = vpack.c.b16 %v584, %v583
      %v606 = vpack.c.b16 %v586, %v585
      %v607 = vpack.c.b16 %v588, %v587
      %v608 = vpack.c.b16 %v590, %v589
      %v609 = vpack.c.b16 %v592, %v591
      %v610 = vpack.c.b16 %v594, %v593
      %v611 = vpack.c.b16 %v596, %v595
      %v612 = vpack.c.b16 %v598, %v597
      %v613 = vpack.c.b16 %v600, %v599
      %v614 = vpack.c.b16 %v601, %v601
      %v617 = vunpack.c.l.b16 %v546
      %v618 = vunpack.c.l.b16 %v547
      %v619 = vpack.c.b16 %v618, %v617
      %v621 = vsel %vm325, %v602, 0
      %v624 = vsel %vm325, %v603, 0
      %v627 = vsel %vm325, %v604, 0
      %v630 = vsel %vm325, %v605, 0
      %v633 = vsel %vm325, %v606, 0
      %v636 = vsel %vm325, %v607, 0
      %v639 = vsel %vm325, %v608, 0
      %v642 = vsel %vm325, %v609, 0
      %v645 = vsel %vm325, %v610, 0
      %v648 = vsel %vm325, %v611, 0
      %v651 = vsel %vm325, %v612, 0
      %v654 = vsel %vm325, %v613, 0
      %v657 = vsel %vm325, %v614, 0
      %v660 = vand.u32 %v619, %v368
      %662 = vmatpush.bf16.msra.mxu0 0
      %663 = vmatpush.bf16.msra.mxu0 0
      %664 = vmatpush.bf16.msra.mxu0 0
      %665 = vmatpush.bf16.msra.mxu0 0
      %666 = vmatpush.bf16.msra.mxu0 0
      %667 = vmatpush.bf16.msra.mxu0 0
      %668 = vmatpush.bf16.msra.mxu0 0
      %669 = vmatpush.bf16.msra.mxu0 %v660
      %670 = vmatmul.bf16.gmra.mxu0 %v621
      %v671 = vpop.f32.mrf.mxu0
      %v672 = vadd.f32 %v550, %v671
      %v673 = vpop.f32.mrf.mxu0
      %v674 = vadd.f32 %v550, %v673
      %675 = vmatmul.bf16.gmra.mxu0 %v624
      %v676 = vpop.f32.mrf.mxu0
      %v677 = vadd.f32 %v550, %v676
      %v678 = vpop.f32.mrf.mxu0
      %v679 = vadd.f32 %v550, %v678
      %680 = vmatmul.bf16.gmra.mxu0 %v627
      %v681 = vpop.f32.mrf.mxu0
      %v682 = vadd.f32 %v550, %v681
      %v683 = vpop.f32.mrf.mxu0
      %v684 = vadd.f32 %v550, %v683
      %685 = vmatmul.bf16.gmra.mxu0 %v630
      %v686 = vpop.f32.mrf.mxu0
      %v687 = vadd.f32 %v550, %v686
      %v688 = vpop.f32.mrf.mxu0
      %v689 = vadd.f32 %v550, %v688
      %690 = vmatmul.bf16.gmra.mxu0 %v633
      %v691 = vpop.f32.mrf.mxu0
      %v692 = vadd.f32 %v550, %v691
      %v693 = vpop.f32.mrf.mxu0
      %v694 = vadd.f32 %v550, %v693
      %695 = vmatmul.bf16.gmra.mxu0 %v636
      %v696 = vpop.f32.mrf.mxu0
      %v697 = vadd.f32 %v550, %v696
      %v698 = vpop.f32.mrf.mxu0
      %v699 = vadd.f32 %v550, %v698
      %700 = vmatmul.bf16.gmra.mxu0 %v639
      %v701 = vpop.f32.mrf.mxu0
      %v702 = vadd.f32 %v550, %v701
      %v703 = vpop.f32.mrf.mxu0
      %v704 = vadd.f32 %v550, %v703
      %705 = vmatmul.bf16.gmra.mxu0 %v642
      %v706 = vpop.f32.mrf.mxu0
      %v707 = vadd.f32 %v550, %v706
      %v708 = vpop.f32.mrf.mxu0
      %v709 = vadd.f32 %v550, %v708
      %710 = vmatmul.bf16.gmra.mxu0 %v645
      %v711 = vpop.f32.mrf.mxu0
      %v712 = vadd.f32 %v550, %v711
      %v713 = vpop.f32.mrf.mxu0
      %v714 = vadd.f32 %v550, %v713
      %715 = vmatmul.bf16.gmra.mxu0 %v648
      %v716 = vpop.f32.mrf.mxu0
      %v717 = vadd.f32 %v550, %v716
      %v718 = vpop.f32.mrf.mxu0
      %v719 = vadd.f32 %v550, %v718
      %720 = vmatmul.bf16.gmra.mxu0 %v651
      %v721 = vpop.f32.mrf.mxu0
      %v722 = vadd.f32 %v550, %v721
      %v723 = vpop.f32.mrf.mxu0
      %v724 = vadd.f32 %v550, %v723
      %725 = vmatmul.bf16.gmra.mxu0 %v654
      %v726 = vpop.f32.mrf.mxu0
      %v727 = vadd.f32 %v550, %v726
      %v728 = vpop.f32.mrf.mxu0
      %v729 = vadd.f32 %v550, %v728
      %730 = vmatmul.bf16.gmra.mxu0 %v657
      %v731 = vpop.f32.mrf.mxu0
      %v732 = vadd.f32 %v550, %v731
      %v733 = vpop.f32.mrf.mxu0
      %734 = vdwg.mxu0
      %v735 = vmax.f32 %v672, 0.0
      %v736 = vmax.f32 %v674, 0.0
      %v737 = vmax.f32 %v677, 0.0
      %v738 = vmax.f32 %v679, 0.0
      %v739 = vmax.f32 %v682, 0.0
      %v740 = vmax.f32 %v684, 0.0
      %v741 = vmax.f32 %v687, 0.0
      %v742 = vmax.f32 %v689, 0.0
      %v743 = vmax.f32 %v692, 0.0
      %v744 = vmax.f32 %v694, 0.0
      %v745 = vmax.f32 %v697, 0.0
      %v746 = vmax.f32 %v699, 0.0
      %v747 = vmax.f32 %v702, 0.0
      %v748 = vmax.f32 %v704, 0.0
      %v749 = vmax.f32 %v707, 0.0
      %v750 = vmax.f32 %v709, 0.0
      %v751 = vmax.f32 %v712, 0.0
      %v752 = vmax.f32 %v714, 0.0
      %v753 = vmax.f32 %v717, 0.0
      %v754 = vmax.f32 %v719, 0.0
      %v755 = vmax.f32 %v722, 0.0
      %v756 = vmax.f32 %v724, 0.0
      %v757 = vmax.f32 %v727, 0.0
      %v758 = vmax.f32 %v729, 0.0
      %v759 = vmax.f32 %v732, 0.0
      %v760 = vpack.c.bf16 %v735, %v735
      %v761 = vpack.c.bf16 %v736, %v736
      %v762 = vpack.c.bf16 %v737, %v737
      %v763 = vpack.c.bf16 %v738, %v738
      %v764 = vpack.c.bf16 %v739, %v739
      %v765 = vpack.c.bf16 %v740, %v740
      %v766 = vpack.c.bf16 %v741, %v741
      %v767 = vpack.c.bf16 %v742, %v742
      %v768 = vpack.c.bf16 %v743, %v743
      %v769 = vpack.c.bf16 %v744, %v744
      %v770 = vpack.c.bf16 %v745, %v745
      %v771 = vpack.c.bf16 %v746, %v746
      %v772 = vpack.c.bf16 %v747, %v747
      %v773 = vpack.c.bf16 %v748, %v748
      %v774 = vpack.c.bf16 %v749, %v749
      %v775 = vpack.c.bf16 %v750, %v750
      %v776 = vpack.c.bf16 %v751, %v751
      %v777 = vpack.c.bf16 %v752, %v752
      %v778 = vpack.c.bf16 %v753, %v753
      %v779 = vpack.c.bf16 %v754, %v754
      %v780 = vpack.c.bf16 %v755, %v755
      %v781 = vpack.c.bf16 %v756, %v756
      %v782 = vpack.c.bf16 %v757, %v757
      %v783 = vpack.c.bf16 %v758, %v758
      %v784 = vpack.c.bf16 %v759, %v759
      %s785 = scalar_lea.vmem [#allocation2], 100
      %786 = vst [vmem:[%s785] sm:$0xf] %v760
      %787 = vst [vmem:[%s785 + $0x4] sm:$0xf] %v761
      %788 = vst [vmem:[%s785 + $0x8] sm:$0xf] %v762
      %789 = vst [vmem:[%s785 + $0xc] sm:$0xf] %v763
      %790 = vst [vmem:[%s785 + $0x10] sm:$0xf] %v764
      %791 = vst [vmem:[%s785 + $0x14] sm:$0xf] %v765
      %792 = vst [vmem:[%s785 + $0x18] sm:$0xf] %v766
      %793 = vst [vmem:[%s785 + $0x1c] sm:$0xf] %v767
      %794 = vst [vmem:[%s785 + $0x20] sm:$0xf] %v768
      %795 = vst [vmem:[%s785 + $0x24] sm:$0xf] %v769
      %796 = vst [vmem:[%s785 + $0x28] sm:$0xf] %v770
      %797 = vst [vmem:[%s785 + $0x2c] sm:$0xf] %v771
      %798 = vst [vmem:[%s785 + $0x30] sm:$0xf] %v772
      %799 = vst [vmem:[%s785 + $0x34] sm:$0xf] %v773
      %800 = vst [vmem:[%s785 + $0x38] sm:$0xf] %v774
      %801 = vst [vmem:[%s785 + $0x3c] sm:$0xf] %v775
      %802 = vst [vmem:[%s785 + $0x40] sm:$0xf] %v776
      %803 = vst [vmem:[%s785 + $0x44] sm:$0xf] %v777
      %804 = vst [vmem:[%s785 + $0x48] sm:$0xf] %v778
      %805 = vst [vmem:[%s785 + $0x4c] sm:$0xf] %v779
      %806 = vst [vmem:[%s785 + $0x50] sm:$0xf] %v780
      %807 = vst [vmem:[%s785 + $0x54] sm:$0xf] %v781
      %808 = vst [vmem:[%s785 + $0x58] sm:$0xf] %v782
      %809 = vst [vmem:[%s785 + $0x5c] sm:$0xf] %v783
      %810 = vst [vmem:[%s785 + $0x60] sm:$0x3] %v784
      %s811 = scalar_lea.vmem %s219, 200
      %v812 = vld [vmem:[%s811] sm:$0xf]
      %v813 = vld [vmem:[%s811 + $0x4] sm:$0xf]
      %v814 = vld [vmem:[%s811 + $0x8] sm:$0xf]
      %v815 = vld [vmem:[%s811 + $0xc] sm:$0xf]
      %v816 = vld [vmem:[%s811 + $0x10] sm:$0xf]
      %v817 = vld [vmem:[%s811 + $0x14] sm:$0xf]
      %v818 = vld [vmem:[%s811 + $0x18] sm:$0xf]
      %v819 = vld [vmem:[%s811 + $0x1c] sm:$0xf]
      %v820 = vld [vmem:[%s811 + $0x20] sm:$0xf]
      %v821 = vld [vmem:[%s811 + $0x24] sm:$0xf]
      %v822 = vld [vmem:[%s811 + $0x28] sm:$0xf]
      %v823 = vld [vmem:[%s811 + $0x2c] sm:$0xf]
      %v824 = vld [vmem:[%s811 + $0x30] sm:$0xf]
      %v825 = vld [vmem:[%s811 + $0x34] sm:$0xf]
      %v826 = vld [vmem:[%s811 + $0x38] sm:$0xf]
      %v827 = vld [vmem:[%s811 + $0x3c] sm:$0xf]
      %v828 = vld [vmem:[%s811 + $0x40] sm:$0xf]
      %v829 = vld [vmem:[%s811 + $0x44] sm:$0xf]
      %v830 = vld [vmem:[%s811 + $0x48] sm:$0xf]
      %v831 = vld [vmem:[%s811 + $0x4c] sm:$0xf]
      %v832 = vld [vmem:[%s811 + $0x50] sm:$0xf]
      %v833 = vld [vmem:[%s811 + $0x54] sm:$0xf]
      %v834 = vld [vmem:[%s811 + $0x58] sm:$0xf]
      %v835 = vld [vmem:[%s811 + $0x5c] sm:$0xf]
      %v836 = vld [vmem:[%s811 + $0x60] sm:$0x3]
      %v837 = vld [vmem:[%s1] sm:$0xf]
      %v838 = vld [vmem:[%s1 + $0x4] sm:$0x1]
      %v839 = vld [vmem:[%s2] sm:$0x1]
      %v841 = vperm.slane %v839, 0
      %v868 = vunpack.c.l.b16 %v812
      %v869 = vunpack.c.l.b16 %v813
      %v870 = vunpack.c.l.b16 %v814
      %v871 = vunpack.c.l.b16 %v815
      %v872 = vunpack.c.l.b16 %v816
      %v873 = vunpack.c.l.b16 %v817
      %v874 = vunpack.c.l.b16 %v818
      %v875 = vunpack.c.l.b16 %v819
      %v876 = vunpack.c.l.b16 %v820
      %v877 = vunpack.c.l.b16 %v821
      %v878 = vunpack.c.l.b16 %v822
      %v879 = vunpack.c.l.b16 %v823
      %v880 = vunpack.c.l.b16 %v824
      %v881 = vunpack.c.l.b16 %v825
      %v882 = vunpack.c.l.b16 %v826
      %v883 = vunpack.c.l.b16 %v827
      %v884 = vunpack.c.l.b16 %v828
      %v885 = vunpack.c.l.b16 %v829
      %v886 = vunpack.c.l.b16 %v830
      %v887 = vunpack.c.l.b16 %v831
      %v888 = vunpack.c.l.b16 %v832
      %v889 = vunpack.c.l.b16 %v833
      %v890 = vunpack.c.l.b16 %v834
      %v891 = vunpack.c.l.b16 %v835
      %v892 = vunpack.c.l.b16 %v836
      %v893 = vpack.c.b16 %v869, %v868
      %v894 = vpack.c.b16 %v871, %v870
      %v895 = vpack.c.b16 %v873, %v872
      %v896 = vpack.c.b16 %v875, %v874
      %v897 = vpack.c.b16 %v877, %v876
      %v898 = vpack.c.b16 %v879, %v878
      %v899 = vpack.c.b16 %v881, %v880
      %v900 = vpack.c.b16 %v883, %v882
      %v901 = vpack.c.b16 %v885, %v884
      %v902 = vpack.c.b16 %v887, %v886
      %v903 = vpack.c.b16 %v889, %v888
      %v904 = vpack.c.b16 %v891, %v890
      %v905 = vpack.c.b16 %v892, %v892
      %v908 = vunpack.c.l.b16 %v837
      %v909 = vunpack.c.l.b16 %v838
      %v910 = vpack.c.b16 %v909, %v908
      %v912 = vsel %vm325, %v893, 0
      %v915 = vsel %vm325, %v894, 0
      %v918 = vsel %vm325, %v895, 0
      %v921 = vsel %vm325, %v896, 0
      %v924 = vsel %vm325, %v897, 0
      %v927 = vsel %vm325, %v898, 0
      %v930 = vsel %vm325, %v899, 0
      %v933 = vsel %vm325, %v900, 0
      %v936 = vsel %vm325, %v901, 0
      %v939 = vsel %vm325, %v902, 0
      %v942 = vsel %vm325, %v903, 0
      %v945 = vsel %vm325, %v904, 0
      %v948 = vsel %vm325, %v905, 0
      %v951 = vand.u32 %v910, %v368
      %953 = vmatpush.bf16.msra.mxu0 0
      %954 = vmatpush.bf16.msra.mxu0 0
      %955 = vmatpush.bf16.msra.mxu0 0
      %956 = vmatpush.bf16.msra.mxu0 0
      %957 = vmatpush.bf16.msra.mxu0 0
      %958 = vmatpush.bf16.msra.mxu0 0
      %959 = vmatpush.bf16.msra.mxu0 0
      %960 = vmatpush.bf16.msra.mxu0 %v951
      %961 = vmatmul.bf16.gmra.mxu0 %v912
      %v962 = vpop.f32.mrf.mxu0
      %v963 = vadd.f32 %v841, %v962
      %v964 = vpop.f32.mrf.mxu0
      %v965 = vadd.f32 %v841, %v964
      %966 = vmatmul.bf16.gmra.mxu0 %v915
      %v967 = vpop.f32.mrf.mxu0
      %v968 = vadd.f32 %v841, %v967
      %v969 = vpop.f32.mrf.mxu0
      %v970 = vadd.f32 %v841, %v969
      %971 = vmatmul.bf16.gmra.mxu0 %v918
      %v972 = vpop.f32.mrf.mxu0
      %v973 = vadd.f32 %v841, %v972
      %v974 = vpop.f32.mrf.mxu0
      %v975 = vadd.f32 %v841, %v974
      %976 = vmatmul.bf16.gmra.mxu0 %v921
      %v977 = vpop.f32.mrf.mxu0
      %v978 = vadd.f32 %v841, %v977
      %v979 = vpop.f32.mrf.mxu0
      %v980 = vadd.f32 %v841, %v979
      %981 = vmatmul.bf16.gmra.mxu0 %v924
      %v982 = vpop.f32.mrf.mxu0
      %v983 = vadd.f32 %v841, %v982
      %v984 = vpop.f32.mrf.mxu0
      %v985 = vadd.f32 %v841, %v984
      %986 = vmatmul.bf16.gmra.mxu0 %v927
      %v987 = vpop.f32.mrf.mxu0
      %v988 = vadd.f32 %v841, %v987
      %v989 = vpop.f32.mrf.mxu0
      %v990 = vadd.f32 %v841, %v989
      %991 = vmatmul.bf16.gmra.mxu0 %v930
      %v992 = vpop.f32.mrf.mxu0
      %v993 = vadd.f32 %v841, %v992
      %v994 = vpop.f32.mrf.mxu0
      %v995 = vadd.f32 %v841, %v994
      %996 = vmatmul.bf16.gmra.mxu0 %v933
      %v997 = vpop.f32.mrf.mxu0
      %v998 = vadd.f32 %v841, %v997
      %v999 = vpop.f32.mrf.mxu0
      %v1000 = vadd.f32 %v841, %v999
      %1001 = vmatmul.bf16.gmra.mxu0 %v936
      %v1002 = vpop.f32.mrf.mxu0
      %v1003 = vadd.f32 %v841, %v1002
      %v1004 = vpop.f32.mrf.mxu0
      %v1005 = vadd.f32 %v841, %v1004
      %1006 = vmatmul.bf16.gmra.mxu0 %v939
      %v1007 = vpop.f32.mrf.mxu0
      %v1008 = vadd.f32 %v841, %v1007
      %v1009 = vpop.f32.mrf.mxu0
      %v1010 = vadd.f32 %v841, %v1009
      %1011 = vmatmul.bf16.gmra.mxu0 %v942
      %v1012 = vpop.f32.mrf.mxu0
      %v1013 = vadd.f32 %v841, %v1012
      %v1014 = vpop.f32.mrf.mxu0
      %v1015 = vadd.f32 %v841, %v1014
      %1016 = vmatmul.bf16.gmra.mxu0 %v945
      %v1017 = vpop.f32.mrf.mxu0
      %v1018 = vadd.f32 %v841, %v1017
      %v1019 = vpop.f32.mrf.mxu0
      %v1020 = vadd.f32 %v841, %v1019
      %1021 = vmatmul.bf16.gmra.mxu0 %v948
      %v1022 = vpop.f32.mrf.mxu0
      %v1023 = vadd.f32 %v841, %v1022
      %v1024 = vpop.f32.mrf.mxu0
      %1025 = vdwg.mxu0
      %v1026 = vmax.f32 %v963, 0.0
      %v1027 = vmax.f32 %v965, 0.0
      %v1028 = vmax.f32 %v968, 0.0
      %v1029 = vmax.f32 %v970, 0.0
      %v1030 = vmax.f32 %v973, 0.0
      %v1031 = vmax.f32 %v975, 0.0
      %v1032 = vmax.f32 %v978, 0.0
      %v1033 = vmax.f32 %v980, 0.0
      %v1034 = vmax.f32 %v983, 0.0
      %v1035 = vmax.f32 %v985, 0.0
      %v1036 = vmax.f32 %v988, 0.0
      %v1037 = vmax.f32 %v990, 0.0
      %v1038 = vmax.f32 %v993, 0.0
      %v1039 = vmax.f32 %v995, 0.0
      %v1040 = vmax.f32 %v998, 0.0
      %v1041 = vmax.f32 %v1000, 0.0
      %v1042 = vmax.f32 %v1003, 0.0
      %v1043 = vmax.f32 %v1005, 0.0
      %v1044 = vmax.f32 %v1008, 0.0
      %v1045 = vmax.f32 %v1010, 0.0
      %v1046 = vmax.f32 %v1013, 0.0
      %v1047 = vmax.f32 %v1015, 0.0
      %v1048 = vmax.f32 %v1018, 0.0
      %v1049 = vmax.f32 %v1020, 0.0
      %v1050 = vmax.f32 %v1023, 0.0
      %v1051 = vpack.c.bf16 %v1026, %v1026
      %v1052 = vpack.c.bf16 %v1027, %v1027
      %v1053 = vpack.c.bf16 %v1028, %v1028
      %v1054 = vpack.c.bf16 %v1029, %v1029
      %v1055 = vpack.c.bf16 %v1030, %v1030
      %v1056 = vpack.c.bf16 %v1031, %v1031
      %v1057 = vpack.c.bf16 %v1032, %v1032
      %v1058 = vpack.c.bf16 %v1033, %v1033
      %v1059 = vpack.c.bf16 %v1034, %v1034
      %v1060 = vpack.c.bf16 %v1035, %v1035
      %v1061 = vpack.c.bf16 %v1036, %v1036
      %v1062 = vpack.c.bf16 %v1037, %v1037
      %v1063 = vpack.c.bf16 %v1038, %v1038
      %v1064 = vpack.c.bf16 %v1039, %v1039
      %v1065 = vpack.c.bf16 %v1040, %v1040
      %v1066 = vpack.c.bf16 %v1041, %v1041
      %v1067 = vpack.c.bf16 %v1042, %v1042
      %v1068 = vpack.c.bf16 %v1043, %v1043
      %v1069 = vpack.c.bf16 %v1044, %v1044
      %v1070 = vpack.c.bf16 %v1045, %v1045
      %v1071 = vpack.c.bf16 %v1046, %v1046
      %v1072 = vpack.c.bf16 %v1047, %v1047
      %v1073 = vpack.c.bf16 %v1048, %v1048
      %v1074 = vpack.c.bf16 %v1049, %v1049
      %v1075 = vpack.c.bf16 %v1050, %v1050
      %s1076 = scalar_lea.vmem [#allocation2], 200
      %1077 = vst [vmem:[%s1076] sm:$0xf] %v1051
      %1078 = vst [vmem:[%s1076 + $0x4] sm:$0xf] %v1052
      %1079 = vst [vmem:[%s1076 + $0x8] sm:$0xf] %v1053
      %1080 = vst [vmem:[%s1076 + $0xc] sm:$0xf] %v1054
      %1081 = vst [vmem:[%s1076 + $0x10] sm:$0xf] %v1055
      %1082 = vst [vmem:[%s1076 + $0x14] sm:$0xf] %v1056
      %1083 = vst [vmem:[%s1076 + $0x18] sm:$0xf] %v1057
      %1084 = vst [vmem:[%s1076 + $0x1c] sm:$0xf] %v1058
      %1085 = vst [vmem:[%s1076 + $0x20] sm:$0xf] %v1059
      %1086 = vst [vmem:[%s1076 + $0x24] sm:$0xf] %v1060
      %1087 = vst [vmem:[%s1076 + $0x28] sm:$0xf] %v1061
      %1088 = vst [vmem:[%s1076 + $0x2c] sm:$0xf] %v1062
      %1089 = vst [vmem:[%s1076 + $0x30] sm:$0xf] %v1063
      %1090 = vst [vmem:[%s1076 + $0x34] sm:$0xf] %v1064
      %1091 = vst [vmem:[%s1076 + $0x38] sm:$0xf] %v1065
      %1092 = vst [vmem:[%s1076 + $0x3c] sm:$0xf] %v1066
      %1093 = vst [vmem:[%s1076 + $0x40] sm:$0xf] %v1067
      %1094 = vst [vmem:[%s1076 + $0x44] sm:$0xf] %v1068
      %1095 = vst [vmem:[%s1076 + $0x48] sm:$0xf] %v1069
      %1096 = vst [vmem:[%s1076 + $0x4c] sm:$0xf] %v1070
      %1097 = vst [vmem:[%s1076 + $0x50] sm:$0xf] %v1071
      %1098 = vst [vmem:[%s1076 + $0x54] sm:$0xf] %v1072
      %1099 = vst [vmem:[%s1076 + $0x58] sm:$0xf] %v1073
      %1100 = vst [vmem:[%s1076 + $0x5c] sm:$0xf] %v1074
      %1101 = vst [vmem:[%s1076 + $0x60] sm:$0x3] %v1075
      %s1102 = scalar_lea.vmem %s219, 300
      %v1103 = vld [vmem:[%s1102] sm:$0xf]
      %v1104 = vld [vmem:[%s1102 + $0x4] sm:$0xf]
      %v1105 = vld [vmem:[%s1102 + $0x8] sm:$0xf]
      %v1106 = vld [vmem:[%s1102 + $0xc] sm:$0xf]
      %v1107 = vld [vmem:[%s1102 + $0x10] sm:$0xf]
      %v1108 = vld [vmem:[%s1102 + $0x14] sm:$0xf]
      %v1109 = vld [vmem:[%s1102 + $0x18] sm:$0xf]
      %v1110 = vld [vmem:[%s1102 + $0x1c] sm:$0xf]
      %v1111 = vld [vmem:[%s1102 + $0x20] sm:$0xf]
      %v1112 = vld [vmem:[%s1102 + $0x24] sm:$0xf]
      %v1113 = vld [vmem:[%s1102 + $0x28] sm:$0xf]
      %v1114 = vld [vmem:[%s1102 + $0x2c] sm:$0xf]
      %v1115 = vld [vmem:[%s1102 + $0x30] sm:$0xf]
      %v1116 = vld [vmem:[%s1102 + $0x34] sm:$0xf]
      %v1117 = vld [vmem:[%s1102 + $0x38] sm:$0xf]
      %v1118 = vld [vmem:[%s1102 + $0x3c] sm:$0xf]
      %v1119 = vld [vmem:[%s1102 + $0x40] sm:$0xf]
      %v1120 = vld [vmem:[%s1102 + $0x44] sm:$0xf]
      %v1121 = vld [vmem:[%s1102 + $0x48] sm:$0xf]
      %v1122 = vld [vmem:[%s1102 + $0x4c] sm:$0xf]
      %v1123 = vld [vmem:[%s1102 + $0x50] sm:$0xf]
      %v1124 = vld [vmem:[%s1102 + $0x54] sm:$0xf]
      %v1125 = vld [vmem:[%s1102 + $0x58] sm:$0xf]
      %v1126 = vld [vmem:[%s1102 + $0x5c] sm:$0xf]
      %v1127 = vld [vmem:[%s1102 + $0x60] sm:$0x3]
      %v1128 = vld [vmem:[%s1] sm:$0xf]
      %v1129 = vld [vmem:[%s1 + $0x4] sm:$0x1]
      %v1130 = vld [vmem:[%s2] sm:$0x1]
      %v1132 = vperm.slane %v1130, 0
      %v1159 = vunpack.c.l.b16 %v1103
      %v1160 = vunpack.c.l.b16 %v1104
      %v1161 = vunpack.c.l.b16 %v1105
      %v1162 = vunpack.c.l.b16 %v1106
      %v1163 = vunpack.c.l.b16 %v1107
      %v1164 = vunpack.c.l.b16 %v1108
      %v1165 = vunpack.c.l.b16 %v1109
      %v1166 = vunpack.c.l.b16 %v1110
      %v1167 = vunpack.c.l.b16 %v1111
      %v1168 = vunpack.c.l.b16 %v1112
      %v1169 = vunpack.c.l.b16 %v1113
      %v1170 = vunpack.c.l.b16 %v1114
      %v1171 = vunpack.c.l.b16 %v1115
      %v1172 = vunpack.c.l.b16 %v1116
      %v1173 = vunpack.c.l.b16 %v1117
      %v1174 = vunpack.c.l.b16 %v1118
      %v1175 = vunpack.c.l.b16 %v1119
      %v1176 = vunpack.c.l.b16 %v1120
      %v1177 = vunpack.c.l.b16 %v1121
      %v1178 = vunpack.c.l.b16 %v1122
      %v1179 = vunpack.c.l.b16 %v1123
      %v1180 = vunpack.c.l.b16 %v1124
      %v1181 = vunpack.c.l.b16 %v1125
      %v1182 = vunpack.c.l.b16 %v1126
      %v1183 = vunpack.c.l.b16 %v1127
      %v1184 = vpack.c.b16 %v1160, %v1159
      %v1185 = vpack.c.b16 %v1162, %v1161
      %v1186 = vpack.c.b16 %v1164, %v1163
      %v1187 = vpack.c.b16 %v1166, %v1165
      %v1188 = vpack.c.b16 %v1168, %v1167
      %v1189 = vpack.c.b16 %v1170, %v1169
      %v1190 = vpack.c.b16 %v1172, %v1171
      %v1191 = vpack.c.b16 %v1174, %v1173
      %v1192 = vpack.c.b16 %v1176, %v1175
      %v1193 = vpack.c.b16 %v1178, %v1177
      %v1194 = vpack.c.b16 %v1180, %v1179
      %v1195 = vpack.c.b16 %v1182, %v1181
      %v1196 = vpack.c.b16 %v1183, %v1183
      %v1199 = vunpack.c.l.b16 %v1128
      %v1200 = vunpack.c.l.b16 %v1129
      %v1201 = vpack.c.b16 %v1200, %v1199
      %v1203 = vsel %vm325, %v1184, 0
      %v1206 = vsel %vm325, %v1185, 0
      %v1209 = vsel %vm325, %v1186, 0
      %v1212 = vsel %vm325, %v1187, 0
      %v1215 = vsel %vm325, %v1188, 0
      %v1218 = vsel %vm325, %v1189, 0
      %v1221 = vsel %vm325, %v1190, 0
      %v1224 = vsel %vm325, %v1191, 0
      %v1227 = vsel %vm325, %v1192, 0
      %v1230 = vsel %vm325, %v1193, 0
      %v1233 = vsel %vm325, %v1194, 0
      %v1236 = vsel %vm325, %v1195, 0
      %v1239 = vsel %vm325, %v1196, 0
      %v1242 = vand.u32 %v1201, %v368
      %1244 = vmatpush.bf16.msra.mxu0 0
      %1245 = vmatpush.bf16.msra.mxu0 0
      %1246 = vmatpush.bf16.msra.mxu0 0
      %1247 = vmatpush.bf16.msra.mxu0 0
      %1248 = vmatpush.bf16.msra.mxu0 0
      %1249 = vmatpush.bf16.msra.mxu0 0
      %1250 = vmatpush.bf16.msra.mxu0 0
      %1251 = vmatpush.bf16.msra.mxu0 %v1242
      %1252 = vmatmul.bf16.gmra.mxu0 %v1203
      %v1253 = vpop.f32.mrf.mxu0
      %v1254 = vadd.f32 %v1132, %v1253
      %v1255 = vpop.f32.mrf.mxu0
      %v1256 = vadd.f32 %v1132, %v1255
      %1257 = vmatmul.bf16.gmra.mxu0 %v1206
      %v1258 = vpop.f32.mrf.mxu0
      %v1259 = vadd.f32 %v1132, %v1258
      %v1260 = vpop.f32.mrf.mxu0
      %v1261 = vadd.f32 %v1132, %v1260
      %1262 = vmatmul.bf16.gmra.mxu0 %v1209
      %v1263 = vpop.f32.mrf.mxu0
      %v1264 = vadd.f32 %v1132, %v1263
      %v1265 = vpop.f32.mrf.mxu0
      %v1266 = vadd.f32 %v1132, %v1265
      %1267 = vmatmul.bf16.gmra.mxu0 %v1212
      %v1268 = vpop.f32.mrf.mxu0
      %v1269 = vadd.f32 %v1132, %v1268
      %v1270 = vpop.f32.mrf.mxu0
      %v1271 = vadd.f32 %v1132, %v1270
      %1272 = vmatmul.bf16.gmra.mxu0 %v1215
      %v1273 = vpop.f32.mrf.mxu0
      %v1274 = vadd.f32 %v1132, %v1273
      %v1275 = vpop.f32.mrf.mxu0
      %v1276 = vadd.f32 %v1132, %v1275
      %1277 = vmatmul.bf16.gmra.mxu0 %v1218
      %v1278 = vpop.f32.mrf.mxu0
      %v1279 = vadd.f32 %v1132, %v1278
      %v1280 = vpop.f32.mrf.mxu0
      %v1281 = vadd.f32 %v1132, %v1280
      %1282 = vmatmul.bf16.gmra.mxu0 %v1221
      %v1283 = vpop.f32.mrf.mxu0
      %v1284 = vadd.f32 %v1132, %v1283
      %v1285 = vpop.f32.mrf.mxu0
      %v1286 = vadd.f32 %v1132, %v1285
      %1287 = vmatmul.bf16.gmra.mxu0 %v1224
      %v1288 = vpop.f32.mrf.mxu0
      %v1289 = vadd.f32 %v1132, %v1288
      %v1290 = vpop.f32.mrf.mxu0
      %v1291 = vadd.f32 %v1132, %v1290
      %1292 = vmatmul.bf16.gmra.mxu0 %v1227
      %v1293 = vpop.f32.mrf.mxu0
      %v1294 = vadd.f32 %v1132, %v1293
      %v1295 = vpop.f32.mrf.mxu0
      %v1296 = vadd.f32 %v1132, %v1295
      %1297 = vmatmul.bf16.gmra.mxu0 %v1230
      %v1298 = vpop.f32.mrf.mxu0
      %v1299 = vadd.f32 %v1132, %v1298
      %v1300 = vpop.f32.mrf.mxu0
      %v1301 = vadd.f32 %v1132, %v1300
      %1302 = vmatmul.bf16.gmra.mxu0 %v1233
      %v1303 = vpop.f32.mrf.mxu0
      %v1304 = vadd.f32 %v1132, %v1303
      %v1305 = vpop.f32.mrf.mxu0
      %v1306 = vadd.f32 %v1132, %v1305
      %1307 = vmatmul.bf16.gmra.mxu0 %v1236
      %v1308 = vpop.f32.mrf.mxu0
      %v1309 = vadd.f32 %v1132, %v1308
      %v1310 = vpop.f32.mrf.mxu0
      %v1311 = vadd.f32 %v1132, %v1310
      %1312 = vmatmul.bf16.gmra.mxu0 %v1239
      %v1313 = vpop.f32.mrf.mxu0
      %v1314 = vadd.f32 %v1132, %v1313
      %v1315 = vpop.f32.mrf.mxu0
      %1316 = vdwg.mxu0
      %v1317 = vmax.f32 %v1254, 0.0
      %v1318 = vmax.f32 %v1256, 0.0
      %v1319 = vmax.f32 %v1259, 0.0
      %v1320 = vmax.f32 %v1261, 0.0
      %v1321 = vmax.f32 %v1264, 0.0
      %v1322 = vmax.f32 %v1266, 0.0
      %v1323 = vmax.f32 %v1269, 0.0
      %v1324 = vmax.f32 %v1271, 0.0
      %v1325 = vmax.f32 %v1274, 0.0
      %v1326 = vmax.f32 %v1276, 0.0
      %v1327 = vmax.f32 %v1279, 0.0
      %v1328 = vmax.f32 %v1281, 0.0
      %v1329 = vmax.f32 %v1284, 0.0
      %v1330 = vmax.f32 %v1286, 0.0
      %v1331 = vmax.f32 %v1289, 0.0
      %v1332 = vmax.f32 %v1291, 0.0
      %v1333 = vmax.f32 %v1294, 0.0
      %v1334 = vmax.f32 %v1296, 0.0
      %v1335 = vmax.f32 %v1299, 0.0
      %v1336 = vmax.f32 %v1301, 0.0
      %v1337 = vmax.f32 %v1304, 0.0
      %v1338 = vmax.f32 %v1306, 0.0
      %v1339 = vmax.f32 %v1309, 0.0
      %v1340 = vmax.f32 %v1311, 0.0
      %v1341 = vmax.f32 %v1314, 0.0
      %v1342 = vpack.c.bf16 %v1317, %v1317
      %v1343 = vpack.c.bf16 %v1318, %v1318
      %v1344 = vpack.c.bf16 %v1319, %v1319
      %v1345 = vpack.c.bf16 %v1320, %v1320
      %v1346 = vpack.c.bf16 %v1321, %v1321
      %v1347 = vpack.c.bf16 %v1322, %v1322
      %v1348 = vpack.c.bf16 %v1323, %v1323
      %v1349 = vpack.c.bf16 %v1324, %v1324
      %v1350 = vpack.c.bf16 %v1325, %v1325
      %v1351 = vpack.c.bf16 %v1326, %v1326
      %v1352 = vpack.c.bf16 %v1327, %v1327
      %v1353 = vpack.c.bf16 %v1328, %v1328
      %v1354 = vpack.c.bf16 %v1329, %v1329
      %v1355 = vpack.c.bf16 %v1330, %v1330
      %v1356 = vpack.c.bf16 %v1331, %v1331
      %v1357 = vpack.c.bf16 %v1332, %v1332
      %v1358 = vpack.c.bf16 %v1333, %v1333
      %v1359 = vpack.c.bf16 %v1334, %v1334
      %v1360 = vpack.c.bf16 %v1335, %v1335
      %v1361 = vpack.c.bf16 %v1336, %v1336
      %v1362 = vpack.c.bf16 %v1337, %v1337
      %v1363 = vpack.c.bf16 %v1338, %v1338
      %v1364 = vpack.c.bf16 %v1339, %v1339
      %v1365 = vpack.c.bf16 %v1340, %v1340
      %v1366 = vpack.c.bf16 %v1341, %v1341
      %s1367 = scalar_lea.vmem [#allocation2], 300
      %1368 = vst [vmem:[%s1367] sm:$0xf] %v1342
      %1369 = vst [vmem:[%s1367 + $0x4] sm:$0xf] %v1343
      %1370 = vst [vmem:[%s1367 + $0x8] sm:$0xf] %v1344
      %1371 = vst [vmem:[%s1367 + $0xc] sm:$0xf] %v1345
      %1372 = vst [vmem:[%s1367 + $0x10] sm:$0xf] %v1346
      %1373 = vst [vmem:[%s1367 + $0x14] sm:$0xf] %v1347
      %1374 = vst [vmem:[%s1367 + $0x18] sm:$0xf] %v1348
      %1375 = vst [vmem:[%s1367 + $0x1c] sm:$0xf] %v1349
      %1376 = vst [vmem:[%s1367 + $0x20] sm:$0xf] %v1350
      %1377 = vst [vmem:[%s1367 + $0x24] sm:$0xf] %v1351
      %1378 = vst [vmem:[%s1367 + $0x28] sm:$0xf] %v1352
      %1379 = vst [vmem:[%s1367 + $0x2c] sm:$0xf] %v1353
      %1380 = vst [vmem:[%s1367 + $0x30] sm:$0xf] %v1354
      %1381 = vst [vmem:[%s1367 + $0x34] sm:$0xf] %v1355
      %1382 = vst [vmem:[%s1367 + $0x38] sm:$0xf] %v1356
      %1383 = vst [vmem:[%s1367 + $0x3c] sm:$0xf] %v1357
      %1384 = vst [vmem:[%s1367 + $0x40] sm:$0xf] %v1358
      %1385 = vst [vmem:[%s1367 + $0x44] sm:$0xf] %v1359
      %1386 = vst [vmem:[%s1367 + $0x48] sm:$0xf] %v1360
      %1387 = vst [vmem:[%s1367 + $0x4c] sm:$0xf] %v1361
      %1388 = vst [vmem:[%s1367 + $0x50] sm:$0xf] %v1362
      %1389 = vst [vmem:[%s1367 + $0x54] sm:$0xf] %v1363
      %1390 = vst [vmem:[%s1367 + $0x58] sm:$0xf] %v1364
      %1391 = vst [vmem:[%s1367 + $0x5c] sm:$0xf] %v1365
      %1392 = vst [vmem:[%s1367 + $0x60] sm:$0x3] %v1366
      %v1393 = vld [vmem:[#allocation2] sm:$0xf]
      %v1394 = vld [vmem:[#allocation2 + $0x4] sm:$0xf]
      %v1395 = vld [vmem:[#allocation2 + $0x8] sm:$0xf]
      %v1396 = vld [vmem:[#allocation2 + $0xc] sm:$0xf]
      %v1397 = vld [vmem:[#allocation2 + $0x10] sm:$0xf]
      %v1398 = vld [vmem:[#allocation2 + $0x14] sm:$0xf]
      %v1399 = vld [vmem:[#allocation2 + $0x18] sm:$0xf]
      %v1400 = vld [vmem:[#allocation2 + $0x1c] sm:$0xf]
      %v1401 = vld [vmem:[#allocation2 + $0x20] sm:$0xf]
      %v1402 = vld [vmem:[#allocation2 + $0x24] sm:$0xf]
      %v1403 = vld [vmem:[#allocation2 + $0x28] sm:$0xf]
      %v1404 = vld [vmem:[#allocation2 + $0x2c] sm:$0xf]
      %v1405 = vld [vmem:[#allocation2 + $0x30] sm:$0xf]
      %v1406 = vld [vmem:[#allocation2 + $0x34] sm:$0xf]
      %v1407 = vld [vmem:[#allocation2 + $0x38] sm:$0xf]
      %v1408 = vld [vmem:[#allocation2 + $0x3c] sm:$0xf]
      %v1409 = vld [vmem:[#allocation2 + $0x40] sm:$0xf]
      %v1410 = vld [vmem:[#allocation2 + $0x44] sm:$0xf]
      %v1411 = vld [vmem:[#allocation2 + $0x48] sm:$0xf]
      %v1412 = vld [vmem:[#allocation2 + $0x4c] sm:$0xf]
      %v1413 = vld [vmem:[#allocation2 + $0x50] sm:$0xf]
      %v1414 = vld [vmem:[#allocation2 + $0x54] sm:$0xf]
      %v1415 = vld [vmem:[#allocation2 + $0x58] sm:$0x7]
      %v1416 = vld [vmem:[%s3] sm:$0xf]
      %v1417 = vld [vmem:[%s3 + $0x4] sm:$0xf]
      %v1418 = vld [vmem:[%s3 + $0x8] sm:$0xf]
      %v1419 = vld [vmem:[%s3 + $0xc] sm:$0xf]
      %v1420 = vld [vmem:[%s3 + $0x10] sm:$0xf]
      %v1421 = vld [vmem:[%s3 + $0x14] sm:$0xf]
      %v1422 = vld [vmem:[%s3 + $0x18] sm:$0xf]
      %v1423 = vld [vmem:[%s3 + $0x1c] sm:$0xf]
      %v1424 = vld [vmem:[%s3 + $0x20] sm:$0xf]
      %v1425 = vld [vmem:[%s3 + $0x24] sm:$0xf]
      %v1426 = vld [vmem:[%s3 + $0x28] sm:$0xf]
      %v1427 = vld [vmem:[%s3 + $0x2c] sm:$0xf]
      %v1428 = vld [vmem:[%s3 + $0x30] sm:$0xf]
      %v1429 = vld [vmem:[%s3 + $0x34] sm:$0xf]
      %v1430 = vld [vmem:[%s3 + $0x38] sm:$0xf]
      %v1431 = vld [vmem:[%s3 + $0x3c] sm:$0xf]
      %v1432 = vld [vmem:[%s785] sm:$0xf]
      %v1433 = vld [vmem:[%s785 + $0x4] sm:$0xf]
      %v1434 = vld [vmem:[%s785 + $0x8] sm:$0xf]
      %v1435 = vld [vmem:[%s785 + $0xc] sm:$0xf]
      %v1436 = vld [vmem:[%s785 + $0x10] sm:$0xf]
      %v1437 = vld [vmem:[%s785 + $0x14] sm:$0xf]
      %v1438 = vld [vmem:[%s785 + $0x18] sm:$0xf]
      %v1439 = vld [vmem:[%s785 + $0x1c] sm:$0xf]
      %v1440 = vld [vmem:[%s785 + $0x20] sm:$0xf]
      %v1441 = vld [vmem:[%s785 + $0x24] sm:$0xf]
      %v1442 = vld [vmem:[%s785 + $0x28] sm:$0xf]
      %v1443 = vld [vmem:[%s785 + $0x2c] sm:$0xf]
      %v1444 = vld [vmem:[%s785 + $0x30] sm:$0xf]
      %v1445 = vld [vmem:[%s785 + $0x34] sm:$0xf]
      %v1446 = vld [vmem:[%s785 + $0x38] sm:$0xf]
      %v1447 = vld [vmem:[%s785 + $0x3c] sm:$0xf]
      %v1448 = vld [vmem:[%s785 + $0x40] sm:$0xf]
      %v1449 = vld [vmem:[%s785 + $0x44] sm:$0xf]
      %v1450 = vld [vmem:[%s785 + $0x48] sm:$0xf]
      %v1451 = vld [vmem:[%s785 + $0x4c] sm:$0xf]
      %v1452 = vld [vmem:[%s785 + $0x50] sm:$0xf]
      %v1453 = vld [vmem:[%s785 + $0x54] sm:$0xf]
      %v1454 = vld [vmem:[%s785 + $0x58] sm:$0x7]
      %s1455 = scalar_lea.vmem %s3, 64
      %v1456 = vld [vmem:[%s1455] sm:$0xf]
      %v1457 = vld [vmem:[%s1455 + $0x4] sm:$0xf]
      %v1458 = vld [vmem:[%s1455 + $0x8] sm:$0xf]
      %v1459 = vld [vmem:[%s1455 + $0xc] sm:$0xf]
      %v1460 = vld [vmem:[%s1455 + $0x10] sm:$0xf]
      %v1461 = vld [vmem:[%s1455 + $0x14] sm:$0xf]
      %v1462 = vld [vmem:[%s1455 + $0x18] sm:$0xf]
      %v1463 = vld [vmem:[%s1455 + $0x1c] sm:$0xf]
      %v1464 = vld [vmem:[%s1455 + $0x20] sm:$0xf]
      %v1465 = vld [vmem:[%s1455 + $0x24] sm:$0xf]
      %v1466 = vld [vmem:[%s1455 + $0x28] sm:$0xf]
      %v1467 = vld [vmem:[%s1455 + $0x2c] sm:$0xf]
      %v1468 = vld [vmem:[%s1455 + $0x30] sm:$0xf]
      %v1469 = vld [vmem:[%s1455 + $0x34] sm:$0xf]
      %v1470 = vld [vmem:[%s1455 + $0x38] sm:$0xf]
      %v1471 = vld [vmem:[%s1455 + $0x3c] sm:$0xf]
      %v1495 = vunpack.c.l.b16 %v1432
      %v1496 = vunpack.c.l.b16 %v1433
      %v1497 = vunpack.c.l.b16 %v1434
      %v1498 = vunpack.c.l.b16 %v1435
      %v1499 = vunpack.c.l.b16 %v1436
      %v1500 = vunpack.c.l.b16 %v1437
      %v1501 = vunpack.c.l.b16 %v1438
      %v1502 = vunpack.c.l.b16 %v1439
      %v1503 = vunpack.c.l.b16 %v1440
      %v1504 = vunpack.c.l.b16 %v1441
      %v1505 = vunpack.c.l.b16 %v1442
      %v1506 = vunpack.c.l.b16 %v1443
      %v1507 = vunpack.c.l.b16 %v1444
      %v1508 = vunpack.c.l.b16 %v1445
      %v1509 = vunpack.c.l.b16 %v1446
      %v1510 = vunpack.c.l.b16 %v1447
      %v1511 = vunpack.c.l.b16 %v1448
      %v1512 = vunpack.c.l.b16 %v1449
      %v1513 = vunpack.c.l.b16 %v1450
      %v1514 = vunpack.c.l.b16 %v1451
      %v1515 = vunpack.c.l.b16 %v1452
      %v1516 = vunpack.c.l.b16 %v1453
      %v1517 = vunpack.c.l.b16 %v1454
      %v1518 = vpack.c.b16 %v1496, %v1495
      %v1519 = vpack.c.b16 %v1498, %v1497
      %v1520 = vpack.c.b16 %v1500, %v1499
      %v1521 = vpack.c.b16 %v1502, %v1501
      %v1522 = vpack.c.b16 %v1504, %v1503
      %v1523 = vpack.c.b16 %v1506, %v1505
      %v1524 = vpack.c.b16 %v1508, %v1507
      %v1525 = vpack.c.b16 %v1510, %v1509
      %v1526 = vpack.c.b16 %v1512, %v1511
      %v1527 = vpack.c.b16 %v1514, %v1513
      %v1528 = vpack.c.b16 %v1516, %v1515
      %v1529 = vpack.c.b16 %v1517, %v1517
      %v1558 = vunpack.c.l.b16 %v1456
      %v1559 = vunpack.c.l.b16 %v1457
      %v1560 = vunpack.c.l.b16 %v1458
      %v1561 = vunpack.c.l.b16 %v1459
      %v1562 = vunpack.c.l.b16 %v1460
      %v1563 = vunpack.c.l.b16 %v1461
      %v1564 = vunpack.c.l.b16 %v1462
      %v1565 = vunpack.c.l.b16 %v1463
      %v1566 = vunpack.c.l.b16 %v1464
      %v1567 = vunpack.c.l.b16 %v1465
      %v1568 = vunpack.c.l.b16 %v1466
      %v1569 = vunpack.c.l.b16 %v1467
      %v1570 = vunpack.c.l.b16 %v1468
      %v1571 = vunpack.c.l.b16 %v1469
      %v1572 = vunpack.c.l.b16 %v1470
      %v1573 = vunpack.c.l.b16 %v1471
      %v1574 = vpack.c.b16 %v1559, %v1558
      %v1575 = vpack.c.b16 %v1561, %v1560
      %v1576 = vpack.c.b16 %v1563, %v1562
      %v1577 = vpack.c.b16 %v1565, %v1564
      %v1578 = vpack.c.b16 %v1567, %v1566
      %v1579 = vpack.c.b16 %v1569, %v1568
      %v1580 = vpack.c.b16 %v1571, %v1570
      %v1581 = vpack.c.b16 %v1573, %v1572
      %1590 = vmatpush.bf16.msra.mxu0 %v1581
      %1591 = vmatpush.bf16.msra.mxu0 %v1580
      %1592 = vmatpush.bf16.msra.mxu0 %v1579
      %1593 = vmatpush.bf16.msra.mxu0 %v1578
      %1594 = vmatpush.bf16.msra.mxu0 %v1577
      %1595 = vmatpush.bf16.msra.mxu0 %v1576
      %1596 = vmatpush.bf16.msra.mxu0 %v1575
      %1597 = vmatpush.bf16.msra.mxu0 %v1574
      %1598 = vmatmul.bf16.gmra.mxu0 %v1518
      %v1599 = vpop.f32.mrf.mxu0
      %v1600 = vadd.f32 0.0, %v1599
      %v1601 = vpop.f32.mrf.mxu0
      %v1602 = vadd.f32 0.0, %v1601
      %1603 = vmatmul.bf16.gmra.mxu0 %v1519
      %v1604 = vpop.f32.mrf.mxu0
      %v1605 = vadd.f32 0.0, %v1604
      %v1606 = vpop.f32.mrf.mxu0
      %v1607 = vadd.f32 0.0, %v1606
      %1608 = vmatmul.bf16.gmra.mxu0 %v1520
      %v1609 = vpop.f32.mrf.mxu0
      %v1610 = vadd.f32 0.0, %v1609
      %v1611 = vpop.f32.mrf.mxu0
      %v1612 = vadd.f32 0.0, %v1611
      %1613 = vmatmul.bf16.gmra.mxu0 %v1521
      %v1614 = vpop.f32.mrf.mxu0
      %v1615 = vadd.f32 0.0, %v1614
      %v1616 = vpop.f32.mrf.mxu0
      %v1617 = vadd.f32 0.0, %v1616
      %1618 = vmatmul.bf16.gmra.mxu0 %v1522
      %v1619 = vpop.f32.mrf.mxu0
      %v1620 = vadd.f32 0.0, %v1619
      %v1621 = vpop.f32.mrf.mxu0
      %v1622 = vadd.f32 0.0, %v1621
      %1623 = vmatmul.bf16.gmra.mxu0 %v1523
      %v1624 = vpop.f32.mrf.mxu0
      %v1625 = vadd.f32 0.0, %v1624
      %v1626 = vpop.f32.mrf.mxu0
      %v1627 = vadd.f32 0.0, %v1626
      %1628 = vmatmul.bf16.gmra.mxu0 %v1524
      %v1629 = vpop.f32.mrf.mxu0
      %v1630 = vadd.f32 0.0, %v1629
      %v1631 = vpop.f32.mrf.mxu0
      %v1632 = vadd.f32 0.0, %v1631
      %1633 = vmatmul.bf16.gmra.mxu0 %v1525
      %v1634 = vpop.f32.mrf.mxu0
      %v1635 = vadd.f32 0.0, %v1634
      %v1636 = vpop.f32.mrf.mxu0
      %v1637 = vadd.f32 0.0, %v1636
      %1638 = vmatmul.bf16.gmra.mxu0 %v1526
      %v1639 = vpop.f32.mrf.mxu0
      %v1640 = vadd.f32 0.0, %v1639
      %v1641 = vpop.f32.mrf.mxu0
      %v1642 = vadd.f32 0.0, %v1641
      %1643 = vmatmul.bf16.gmra.mxu0 %v1527
      %v1644 = vpop.f32.mrf.mxu0
      %v1645 = vadd.f32 0.0, %v1644
      %v1646 = vpop.f32.mrf.mxu0
      %v1647 = vadd.f32 0.0, %v1646
      %1648 = vmatmul.bf16.gmra.mxu0 %v1528
      %v1649 = vpop.f32.mrf.mxu0
      %v1650 = vadd.f32 0.0, %v1649
      %v1651 = vpop.f32.mrf.mxu0
      %v1652 = vadd.f32 0.0, %v1651
      %1653 = vmatmul.bf16.gmra.mxu0 %v1529
      %v1654 = vpop.f32.mrf.mxu0
      %v1655 = vadd.f32 0.0, %v1654
      %v1656 = vpop.f32.mrf.mxu0
      %1657 = vdwg.mxu0
      %v1681 = vunpack.c.l.b16 %v1393
      %v1682 = vunpack.c.l.b16 %v1394
      %v1683 = vunpack.c.l.b16 %v1395
      %v1684 = vunpack.c.l.b16 %v1396
      %v1685 = vunpack.c.l.b16 %v1397
      %v1686 = vunpack.c.l.b16 %v1398
      %v1687 = vunpack.c.l.b16 %v1399
      %v1688 = vunpack.c.l.b16 %v1400
      %v1689 = vunpack.c.l.b16 %v1401
      %v1690 = vunpack.c.l.b16 %v1402
      %v1691 = vunpack.c.l.b16 %v1403
      %v1692 = vunpack.c.l.b16 %v1404
      %v1693 = vunpack.c.l.b16 %v1405
      %v1694 = vunpack.c.l.b16 %v1406
      %v1695 = vunpack.c.l.b16 %v1407
      %v1696 = vunpack.c.l.b16 %v1408
      %v1697 = vunpack.c.l.b16 %v1409
      %v1698 = vunpack.c.l.b16 %v1410
      %v1699 = vunpack.c.l.b16 %v1411
      %v1700 = vunpack.c.l.b16 %v1412
      %v1701 = vunpack.c.l.b16 %v1413
      %v1702 = vunpack.c.l.b16 %v1414
      %v1703 = vunpack.c.l.b16 %v1415
      %v1704 = vpack.c.b16 %v1682, %v1681
      %v1705 = vpack.c.b16 %v1684, %v1683
      %v1706 = vpack.c.b16 %v1686, %v1685
      %v1707 = vpack.c.b16 %v1688, %v1687
      %v1708 = vpack.c.b16 %v1690, %v1689
      %v1709 = vpack.c.b16 %v1692, %v1691
      %v1710 = vpack.c.b16 %v1694, %v1693
      %v1711 = vpack.c.b16 %v1696, %v1695
      %v1712 = vpack.c.b16 %v1698, %v1697
      %v1713 = vpack.c.b16 %v1700, %v1699
      %v1714 = vpack.c.b16 %v1702, %v1701
      %v1715 = vpack.c.b16 %v1703, %v1703
      %v1744 = vunpack.c.l.b16 %v1416
      %v1745 = vunpack.c.l.b16 %v1417
      %v1746 = vunpack.c.l.b16 %v1418
      %v1747 = vunpack.c.l.b16 %v1419
      %v1748 = vunpack.c.l.b16 %v1420
      %v1749 = vunpack.c.l.b16 %v1421
      %v1750 = vunpack.c.l.b16 %v1422
      %v1751 = vunpack.c.l.b16 %v1423
      %v1752 = vunpack.c.l.b16 %v1424
      %v1753 = vunpack.c.l.b16 %v1425
      %v1754 = vunpack.c.l.b16 %v1426
      %v1755 = vunpack.c.l.b16 %v1427
      %v1756 = vunpack.c.l.b16 %v1428
      %v1757 = vunpack.c.l.b16 %v1429
      %v1758 = vunpack.c.l.b16 %v1430
      %v1759 = vunpack.c.l.b16 %v1431
      %v1760 = vpack.c.b16 %v1745, %v1744
      %v1761 = vpack.c.b16 %v1747, %v1746
      %v1762 = vpack.c.b16 %v1749, %v1748
      %v1763 = vpack.c.b16 %v1751, %v1750
      %v1764 = vpack.c.b16 %v1753, %v1752
      %v1765 = vpack.c.b16 %v1755, %v1754
      %v1766 = vpack.c.b16 %v1757, %v1756
      %v1767 = vpack.c.b16 %v1759, %v1758
      %1776 = vmatpush.bf16.msra.mxu0 %v1767
      %1777 = vmatpush.bf16.msra.mxu0 %v1766
      %1778 = vmatpush.bf16.msra.mxu0 %v1765
      %1779 = vmatpush.bf16.msra.mxu0 %v1764
      %1780 = vmatpush.bf16.msra.mxu0 %v1763
      %1781 = vmatpush.bf16.msra.mxu0 %v1762
      %1782 = vmatpush.bf16.msra.mxu0 %v1761
      %1783 = vmatpush.bf16.msra.mxu0 %v1760
      %1784 = vmatmul.bf16.gmra.mxu0 %v1704
      %v1785 = vpop.f32.mrf.mxu0
      %v1786 = vadd.f32 %v1600, %v1785
      %v1787 = vpop.f32.mrf.mxu0
      %v1788 = vadd.f32 %v1602, %v1787
      %1789 = vmatmul.bf16.gmra.mxu0 %v1705
      %v1790 = vpop.f32.mrf.mxu0
      %v1791 = vadd.f32 %v1605, %v1790
      %v1792 = vpop.f32.mrf.mxu0
      %v1793 = vadd.f32 %v1607, %v1792
      %1794 = vmatmul.bf16.gmra.mxu0 %v1706
      %v1795 = vpop.f32.mrf.mxu0
      %v1796 = vadd.f32 %v1610, %v1795
      %v1797 = vpop.f32.mrf.mxu0
      %v1798 = vadd.f32 %v1612, %v1797
      %1799 = vmatmul.bf16.gmra.mxu0 %v1707
      %v1800 = vpop.f32.mrf.mxu0
      %v1801 = vadd.f32 %v1615, %v1800
      %v1802 = vpop.f32.mrf.mxu0
      %v1803 = vadd.f32 %v1617, %v1802
      %1804 = vmatmul.bf16.gmra.mxu0 %v1708
      %v1805 = vpop.f32.mrf.mxu0
      %v1806 = vadd.f32 %v1620, %v1805
      %v1807 = vpop.f32.mrf.mxu0
      %v1808 = vadd.f32 %v1622, %v1807
      %1809 = vmatmul.bf16.gmra.mxu0 %v1709
      %v1810 = vpop.f32.mrf.mxu0
      %v1811 = vadd.f32 %v1625, %v1810
      %v1812 = vpop.f32.mrf.mxu0
      %v1813 = vadd.f32 %v1627, %v1812
      %1814 = vmatmul.bf16.gmra.mxu0 %v1710
      %v1815 = vpop.f32.mrf.mxu0
      %v1816 = vadd.f32 %v1630, %v1815
      %v1817 = vpop.f32.mrf.mxu0
      %v1818 = vadd.f32 %v1632, %v1817
      %1819 = vmatmul.bf16.gmra.mxu0 %v1711
      %v1820 = vpop.f32.mrf.mxu0
      %v1821 = vadd.f32 %v1635, %v1820
      %v1822 = vpop.f32.mrf.mxu0
      %v1823 = vadd.f32 %v1637, %v1822
      %1824 = vmatmul.bf16.gmra.mxu0 %v1712
      %v1825 = vpop.f32.mrf.mxu0
      %v1826 = vadd.f32 %v1640, %v1825
      %v1827 = vpop.f32.mrf.mxu0
      %v1828 = vadd.f32 %v1642, %v1827
      %1829 = vmatmul.bf16.gmra.mxu0 %v1713
      %v1830 = vpop.f32.mrf.mxu0
      %v1831 = vadd.f32 %v1645, %v1830
      %v1832 = vpop.f32.mrf.mxu0
      %v1833 = vadd.f32 %v1647, %v1832
      %1834 = vmatmul.bf16.gmra.mxu0 %v1714
      %v1835 = vpop.f32.mrf.mxu0
      %v1836 = vadd.f32 %v1650, %v1835
      %v1837 = vpop.f32.mrf.mxu0
      %v1838 = vadd.f32 %v1652, %v1837
      %1839 = vmatmul.bf16.gmra.mxu0 %v1715
      %v1840 = vpop.f32.mrf.mxu0
      %v1841 = vadd.f32 %v1655, %v1840
      %v1842 = vpop.f32.mrf.mxu0
      %1843 = vdwg.mxu0
      %s1844 = scalar_lea.vmem %s3, 128
      %v1845 = vld [vmem:[%s1844] sm:$0xf]
      %v1846 = vld [vmem:[%s1844 + $0x4] sm:$0xf]
      %v1847 = vld [vmem:[%s1844 + $0x8] sm:$0xf]
      %v1848 = vld [vmem:[%s1844 + $0xc] sm:$0xf]
      %v1849 = vld [vmem:[%s1844 + $0x10] sm:$0xf]
      %v1850 = vld [vmem:[%s1844 + $0x14] sm:$0xf]
      %v1851 = vld [vmem:[%s1844 + $0x18] sm:$0xf]
      %v1852 = vld [vmem:[%s1844 + $0x1c] sm:$0xf]
      %v1853 = vld [vmem:[%s1844 + $0x20] sm:$0xf]
      %v1854 = vld [vmem:[%s1844 + $0x24] sm:$0xf]
      %v1855 = vld [vmem:[%s1844 + $0x28] sm:$0xf]
      %v1856 = vld [vmem:[%s1844 + $0x2c] sm:$0xf]
      %v1857 = vld [vmem:[%s1844 + $0x30] sm:$0xf]
      %v1858 = vld [vmem:[%s1844 + $0x34] sm:$0xf]
      %v1859 = vld [vmem:[%s1844 + $0x38] sm:$0xf]
      %v1860 = vld [vmem:[%s1844 + $0x3c] sm:$0xf]
      %vm1861 = vsmask.f32 7424
      %v1863 = vshrl.u32 %v1704, 16
      %v1865 = vshll.u32 %v1704, 16
      %v1867 = vrot.slane %v1865, 1
      %v1868 = vor.u32 %v1863, %v1867
      %v1870 = vshll.u32 %v1705, 16
      %v1872 = vrot.slane %v1870, 1
      %v1873 = vsel %vm1861, %v1868, %v1872
      %v1874 = vshrl.u32 %v1705, 16
      %v1876 = vor.u32 %v1874, %v1872
      %v1878 = vshll.u32 %v1706, 16
      %v1880 = vrot.slane %v1878, 1
      %v1881 = vsel %vm1861, %v1876, %v1880
      %v1882 = vshrl.u32 %v1706, 16
      %v1884 = vor.u32 %v1882, %v1880
      %v1886 = vshll.u32 %v1707, 16
      %v1888 = vrot.slane %v1886, 1
      %v1889 = vsel %vm1861, %v1884, %v1888
      %v1890 = vshrl.u32 %v1707, 16
      %v1892 = vor.u32 %v1890, %v1888
      %v1894 = vshll.u32 %v1708, 16
      %v1896 = vrot.slane %v1894, 1
      %v1897 = vsel %vm1861, %v1892, %v1896
      %v1898 = vshrl.u32 %v1708, 16
      %v1900 = vor.u32 %v1898, %v1896
      %v1902 = vshll.u32 %v1709, 16
      %v1904 = vrot.slane %v1902, 1
      %v1905 = vsel %vm1861, %v1900, %v1904
      %v1906 = vshrl.u32 %v1709, 16
      %v1908 = vor.u32 %v1906, %v1904
      %v1910 = vshll.u32 %v1710, 16
      %v1912 = vrot.slane %v1910, 1
      %v1913 = vsel %vm1861, %v1908, %v1912
      %v1914 = vshrl.u32 %v1710, 16
      %v1916 = vor.u32 %v1914, %v1912
      %v1918 = vshll.u32 %v1711, 16
      %v1920 = vrot.slane %v1918, 1
      %v1921 = vsel %vm1861, %v1916, %v1920
      %v1922 = vshrl.u32 %v1711, 16
      %v1924 = vor.u32 %v1922, %v1920
      %v1926 = vshll.u32 %v1712, 16
      %v1928 = vrot.slane %v1926, 1
      %v1929 = vsel %vm1861, %v1924, %v1928
      %v1930 = vshrl.u32 %v1712, 16
      %v1932 = vor.u32 %v1930, %v1928
      %v1934 = vshll.u32 %v1713, 16
      %v1936 = vrot.slane %v1934, 1
      %v1937 = vsel %vm1861, %v1932, %v1936
      %v1938 = vshrl.u32 %v1713, 16
      %v1940 = vor.u32 %v1938, %v1936
      %v1942 = vshll.u32 %v1714, 16
      %v1944 = vrot.slane %v1942, 1
      %v1945 = vsel %vm1861, %v1940, %v1944
      %v1946 = vshrl.u32 %v1714, 16
      %v1948 = vor.u32 %v1946, %v1944
      %v1950 = vshll.u32 %v1715, 16
      %v1952 = vrot.slane %v1950, 1
      %v1953 = vsel %vm1861, %v1948, %v1952
      %v1954 = vshrl.u32 %v1715, 16
      %v1956 = vor.u32 %v1954, %v1952
      %v1985 = vunpack.c.l.b16 %v1845
      %v1986 = vunpack.c.l.b16 %v1846
      %v1987 = vunpack.c.l.b16 %v1847
      %v1988 = vunpack.c.l.b16 %v1848
      %v1989 = vunpack.c.l.b16 %v1849
      %v1990 = vunpack.c.l.b16 %v1850
      %v1991 = vunpack.c.l.b16 %v1851
      %v1992 = vunpack.c.l.b16 %v1852
      %v1993 = vunpack.c.l.b16 %v1853
      %v1994 = vunpack.c.l.b16 %v1854
      %v1995 = vunpack.c.l.b16 %v1855
      %v1996 = vunpack.c.l.b16 %v1856
      %v1997 = vunpack.c.l.b16 %v1857
      %v1998 = vunpack.c.l.b16 %v1858
      %v1999 = vunpack.c.l.b16 %v1859
      %v2000 = vunpack.c.l.b16 %v1860
      %v2001 = vpack.c.b16 %v1986, %v1985
      %v2002 = vpack.c.b16 %v1988, %v1987
      %v2003 = vpack.c.b16 %v1990, %v1989
      %v2004 = vpack.c.b16 %v1992, %v1991
      %v2005 = vpack.c.b16 %v1994, %v1993
      %v2006 = vpack.c.b16 %v1996, %v1995
      %v2007 = vpack.c.b16 %v1998, %v1997
      %v2008 = vpack.c.b16 %v2000, %v1999
      %2017 = vmatpush.bf16.msra.mxu0 %v2008
      %2018 = vmatpush.bf16.msra.mxu0 %v2007
      %2019 = vmatpush.bf16.msra.mxu0 %v2006
      %2020 = vmatpush.bf16.msra.mxu0 %v2005
      %2021 = vmatpush.bf16.msra.mxu0 %v2004
      %2022 = vmatpush.bf16.msra.mxu0 %v2003
      %2023 = vmatpush.bf16.msra.mxu0 %v2002
      %2024 = vmatpush.bf16.msra.mxu0 %v2001
      %2025 = vmatmul.bf16.gmra.mxu0 %v1873
      %v2026 = vpop.f32.mrf.mxu0
      %v2027 = vadd.f32 0.0, %v2026
      %v2028 = vpop.f32.mrf.mxu0
      %v2029 = vadd.f32 0.0, %v2028
      %2030 = vmatmul.bf16.gmra.mxu0 %v1881
      %v2031 = vpop.f32.mrf.mxu0
      %v2032 = vadd.f32 0.0, %v2031
      %v2033 = vpop.f32.mrf.mxu0
      %v2034 = vadd.f32 0.0, %v2033
      %2035 = vmatmul.bf16.gmra.mxu0 %v1889
      %v2036 = vpop.f32.mrf.mxu0
      %v2037 = vadd.f32 0.0, %v2036
      %v2038 = vpop.f32.mrf.mxu0
      %v2039 = vadd.f32 0.0, %v2038
      %2040 = vmatmul.bf16.gmra.mxu0 %v1897
      %v2041 = vpop.f32.mrf.mxu0
      %v2042 = vadd.f32 0.0, %v2041
      %v2043 = vpop.f32.mrf.mxu0
      %v2044 = vadd.f32 0.0, %v2043
      %2045 = vmatmul.bf16.gmra.mxu0 %v1905
      %v2046 = vpop.f32.mrf.mxu0
      %v2047 = vadd.f32 0.0, %v2046
      %v2048 = vpop.f32.mrf.mxu0
      %v2049 = vadd.f32 0.0, %v2048
      %2050 = vmatmul.bf16.gmra.mxu0 %v1913
      %v2051 = vpop.f32.mrf.mxu0
      %v2052 = vadd.f32 0.0, %v2051
      %v2053 = vpop.f32.mrf.mxu0
      %v2054 = vadd.f32 0.0, %v2053
      %2055 = vmatmul.bf16.gmra.mxu0 %v1921
      %v2056 = vpop.f32.mrf.mxu0
      %v2057 = vadd.f32 0.0, %v2056
      %v2058 = vpop.f32.mrf.mxu0
      %v2059 = vadd.f32 0.0, %v2058
      %2060 = vmatmul.bf16.gmra.mxu0 %v1929
      %v2061 = vpop.f32.mrf.mxu0
      %v2062 = vadd.f32 0.0, %v2061
      %v2063 = vpop.f32.mrf.mxu0
      %v2064 = vadd.f32 0.0, %v2063
      %2065 = vmatmul.bf16.gmra.mxu0 %v1937
      %v2066 = vpop.f32.mrf.mxu0
      %v2067 = vadd.f32 0.0, %v2066
      %v2068 = vpop.f32.mrf.mxu0
      %v2069 = vadd.f32 0.0, %v2068
      %2070 = vmatmul.bf16.gmra.mxu0 %v1945
      %v2071 = vpop.f32.mrf.mxu0
      %v2072 = vadd.f32 0.0, %v2071
      %v2073 = vpop.f32.mrf.mxu0
      %v2074 = vadd.f32 0.0, %v2073
      %2075 = vmatmul.bf16.gmra.mxu0 %v1953
      %v2076 = vpop.f32.mrf.mxu0
      %v2077 = vadd.f32 0.0, %v2076
      %v2078 = vpop.f32.mrf.mxu0
      %v2079 = vadd.f32 0.0, %v2078
      %2080 = vmatmul.bf16.gmra.mxu0 %v1956
      %v2081 = vpop.f32.mrf.mxu0
      %v2082 = vadd.f32 0.0, %v2081
      %v2083 = vpop.f32.mrf.mxu0
      %2084 = vdwg.mxu0
      %v2085 = vadd.f32 %v1786, %v2027
      %v2086 = vadd.f32 %v1788, %v2029
      %v2087 = vadd.f32 %v1791, %v2032
      %v2088 = vadd.f32 %v1793, %v2034
      %v2089 = vadd.f32 %v1796, %v2037
      %v2090 = vadd.f32 %v1798, %v2039
      %v2091 = vadd.f32 %v1801, %v2042
      %v2092 = vadd.f32 %v1803, %v2044
      %v2093 = vadd.f32 %v1806, %v2047
      %v2094 = vadd.f32 %v1808, %v2049
      %v2095 = vadd.f32 %v1811, %v2052
      %v2096 = vadd.f32 %v1813, %v2054
      %v2097 = vadd.f32 %v1816, %v2057
      %v2098 = vadd.f32 %v1818, %v2059
      %v2099 = vadd.f32 %v1821, %v2062
      %v2100 = vadd.f32 %v1823, %v2064
      %v2101 = vadd.f32 %v1826, %v2067
      %v2102 = vadd.f32 %v1828, %v2069
      %v2103 = vadd.f32 %v1831, %v2072
      %v2104 = vadd.f32 %v1833, %v2074
      %v2105 = vadd.f32 %v1836, %v2077
      %v2106 = vadd.f32 %v1838, %v2079
      %v2107 = vadd.f32 %v1841, %v2082
      %v2108 = vld [vmem:[%s1076] sm:$0xf]
      %v2109 = vld [vmem:[%s1076 + $0x4] sm:$0xf]
      %v2110 = vld [vmem:[%s1076 + $0x8] sm:$0xf]
      %v2111 = vld [vmem:[%s1076 + $0xc] sm:$0xf]
      %v2112 = vld [vmem:[%s1076 + $0x10] sm:$0xf]
      %v2113 = vld [vmem:[%s1076 + $0x14] sm:$0xf]
      %v2114 = vld [vmem:[%s1076 + $0x18] sm:$0xf]
      %v2115 = vld [vmem:[%s1076 + $0x1c] sm:$0xf]
      %v2116 = vld [vmem:[%s1076 + $0x20] sm:$0xf]
      %v2117 = vld [vmem:[%s1076 + $0x24] sm:$0xf]
      %v2118 = vld [vmem:[%s1076 + $0x28] sm:$0xf]
      %v2119 = vld [vmem:[%s1076 + $0x2c] sm:$0xf]
      %v2120 = vld [vmem:[%s1076 + $0x30] sm:$0xf]
      %v2121 = vld [vmem:[%s1076 + $0x34] sm:$0xf]
      %v2122 = vld [vmem:[%s1076 + $0x38] sm:$0xf]
      %v2123 = vld [vmem:[%s1076 + $0x3c] sm:$0xf]
      %v2124 = vld [vmem:[%s1076 + $0x40] sm:$0xf]
      %v2125 = vld [vmem:[%s1076 + $0x44] sm:$0xf]
      %v2126 = vld [vmem:[%s1076 + $0x48] sm:$0xf]
      %v2127 = vld [vmem:[%s1076 + $0x4c] sm:$0xf]
      %v2128 = vld [vmem:[%s1076 + $0x50] sm:$0xf]
      %v2129 = vld [vmem:[%s1076 + $0x54] sm:$0xf]
      %v2130 = vld [vmem:[%s1076 + $0x58] sm:$0x7]
      %s2131 = scalar_lea.vmem %s3, 192
      %v2132 = vld [vmem:[%s2131] sm:$0xf]
      %v2133 = vld [vmem:[%s2131 + $0x4] sm:$0xf]
      %v2134 = vld [vmem:[%s2131 + $0x8] sm:$0xf]
      %v2135 = vld [vmem:[%s2131 + $0xc] sm:$0xf]
      %v2136 = vld [vmem:[%s2131 + $0x10] sm:$0xf]
      %v2137 = vld [vmem:[%s2131 + $0x14] sm:$0xf]
      %v2138 = vld [vmem:[%s2131 + $0x18] sm:$0xf]
      %v2139 = vld [vmem:[%s2131 + $0x1c] sm:$0xf]
      %v2140 = vld [vmem:[%s2131 + $0x20] sm:$0xf]
      %v2141 = vld [vmem:[%s2131 + $0x24] sm:$0xf]
      %v2142 = vld [vmem:[%s2131 + $0x28] sm:$0xf]
      %v2143 = vld [vmem:[%s2131 + $0x2c] sm:$0xf]
      %v2144 = vld [vmem:[%s2131 + $0x30] sm:$0xf]
      %v2145 = vld [vmem:[%s2131 + $0x34] sm:$0xf]
      %v2146 = vld [vmem:[%s2131 + $0x38] sm:$0xf]
      %v2147 = vld [vmem:[%s2131 + $0x3c] sm:$0xf]
      %v2171 = vunpack.c.l.b16 %v2108
      %v2172 = vunpack.c.l.b16 %v2109
      %v2173 = vunpack.c.l.b16 %v2110
      %v2174 = vunpack.c.l.b16 %v2111
      %v2175 = vunpack.c.l.b16 %v2112
      %v2176 = vunpack.c.l.b16 %v2113
      %v2177 = vunpack.c.l.b16 %v2114
      %v2178 = vunpack.c.l.b16 %v2115
      %v2179 = vunpack.c.l.b16 %v2116
      %v2180 = vunpack.c.l.b16 %v2117
      %v2181 = vunpack.c.l.b16 %v2118
      %v2182 = vunpack.c.l.b16 %v2119
      %v2183 = vunpack.c.l.b16 %v2120
      %v2184 = vunpack.c.l.b16 %v2121
      %v2185 = vunpack.c.l.b16 %v2122
      %v2186 = vunpack.c.l.b16 %v2123
      %v2187 = vunpack.c.l.b16 %v2124
      %v2188 = vunpack.c.l.b16 %v2125
      %v2189 = vunpack.c.l.b16 %v2126
      %v2190 = vunpack.c.l.b16 %v2127
      %v2191 = vunpack.c.l.b16 %v2128
      %v2192 = vunpack.c.l.b16 %v2129
      %v2193 = vunpack.c.l.b16 %v2130
      %v2194 = vpack.c.b16 %v2172, %v2171
      %v2195 = vpack.c.b16 %v2174, %v2173
      %v2196 = vpack.c.b16 %v2176, %v2175
      %v2197 = vpack.c.b16 %v2178, %v2177
      %v2198 = vpack.c.b16 %v2180, %v2179
      %v2199 = vpack.c.b16 %v2182, %v2181
      %v2200 = vpack.c.b16 %v2184, %v2183
      %v2201 = vpack.c.b16 %v2186, %v2185
      %v2202 = vpack.c.b16 %v2188, %v2187
      %v2203 = vpack.c.b16 %v2190, %v2189
      %v2204 = vpack.c.b16 %v2192, %v2191
      %v2205 = vpack.c.b16 %v2193, %v2193
      %v2234 = vunpack.c.l.b16 %v2132
      %v2235 = vunpack.c.l.b16 %v2133
      %v2236 = vunpack.c.l.b16 %v2134
      %v2237 = vunpack.c.l.b16 %v2135
      %v2238 = vunpack.c.l.b16 %v2136
      %v2239 = vunpack.c.l.b16 %v2137
      %v2240 = vunpack.c.l.b16 %v2138
      %v2241 = vunpack.c.l.b16 %v2139
      %v2242 = vunpack.c.l.b16 %v2140
      %v2243 = vunpack.c.l.b16 %v2141
      %v2244 = vunpack.c.l.b16 %v2142
      %v2245 = vunpack.c.l.b16 %v2143
      %v2246 = vunpack.c.l.b16 %v2144
      %v2247 = vunpack.c.l.b16 %v2145
      %v2248 = vunpack.c.l.b16 %v2146
      %v2249 = vunpack.c.l.b16 %v2147
      %v2250 = vpack.c.b16 %v2235, %v2234
      %v2251 = vpack.c.b16 %v2237, %v2236
      %v2252 = vpack.c.b16 %v2239, %v2238
      %v2253 = vpack.c.b16 %v2241, %v2240
      %v2254 = vpack.c.b16 %v2243, %v2242
      %v2255 = vpack.c.b16 %v2245, %v2244
      %v2256 = vpack.c.b16 %v2247, %v2246
      %v2257 = vpack.c.b16 %v2249, %v2248
      %2266 = vmatpush.bf16.msra.mxu0 %v2257
      %2267 = vmatpush.bf16.msra.mxu0 %v2256
      %2268 = vmatpush.bf16.msra.mxu0 %v2255
      %2269 = vmatpush.bf16.msra.mxu0 %v2254
      %2270 = vmatpush.bf16.msra.mxu0 %v2253
      %2271 = vmatpush.bf16.msra.mxu0 %v2252
      %2272 = vmatpush.bf16.msra.mxu0 %v2251
      %2273 = vmatpush.bf16.msra.mxu0 %v2250
      %2274 = vmatmul.bf16.gmra.mxu0 %v2194
      %v2275 = vpop.f32.mrf.mxu0
      %v2276 = vadd.f32 0.0, %v2275
      %v2277 = vpop.f32.mrf.mxu0
      %v2278 = vadd.f32 0.0, %v2277
      %2279 = vmatmul.bf16.gmra.mxu0 %v2195
      %v2280 = vpop.f32.mrf.mxu0
      %v2281 = vadd.f32 0.0, %v2280
      %v2282 = vpop.f32.mrf.mxu0
      %v2283 = vadd.f32 0.0, %v2282
      %2284 = vmatmul.bf16.gmra.mxu0 %v2196
      %v2285 = vpop.f32.mrf.mxu0
      %v2286 = vadd.f32 0.0, %v2285
      %v2287 = vpop.f32.mrf.mxu0
      %v2288 = vadd.f32 0.0, %v2287
      %2289 = vmatmul.bf16.gmra.mxu0 %v2197
      %v2290 = vpop.f32.mrf.mxu0
      %v2291 = vadd.f32 0.0, %v2290
      %v2292 = vpop.f32.mrf.mxu0
      %v2293 = vadd.f32 0.0, %v2292
      %2294 = vmatmul.bf16.gmra.mxu0 %v2198
      %v2295 = vpop.f32.mrf.mxu0
      %v2296 = vadd.f32 0.0, %v2295
      %v2297 = vpop.f32.mrf.mxu0
      %v2298 = vadd.f32 0.0, %v2297
      %2299 = vmatmul.bf16.gmra.mxu0 %v2199
      %v2300 = vpop.f32.mrf.mxu0
      %v2301 = vadd.f32 0.0, %v2300
      %v2302 = vpop.f32.mrf.mxu0
      %v2303 = vadd.f32 0.0, %v2302
      %2304 = vmatmul.bf16.gmra.mxu0 %v2200
      %v2305 = vpop.f32.mrf.mxu0
      %v2306 = vadd.f32 0.0, %v2305
      %v2307 = vpop.f32.mrf.mxu0
      %v2308 = vadd.f32 0.0, %v2307
      %2309 = vmatmul.bf16.gmra.mxu0 %v2201
      %v2310 = vpop.f32.mrf.mxu0
      %v2311 = vadd.f32 0.0, %v2310
      %v2312 = vpop.f32.mrf.mxu0
      %v2313 = vadd.f32 0.0, %v2312
      %2314 = vmatmul.bf16.gmra.mxu0 %v2202
      %v2315 = vpop.f32.mrf.mxu0
      %v2316 = vadd.f32 0.0, %v2315
      %v2317 = vpop.f32.mrf.mxu0
      %v2318 = vadd.f32 0.0, %v2317
      %2319 = vmatmul.bf16.gmra.mxu0 %v2203
      %v2320 = vpop.f32.mrf.mxu0
      %v2321 = vadd.f32 0.0, %v2320
      %v2322 = vpop.f32.mrf.mxu0
      %v2323 = vadd.f32 0.0, %v2322
      %2324 = vmatmul.bf16.gmra.mxu0 %v2204
      %v2325 = vpop.f32.mrf.mxu0
      %v2326 = vadd.f32 0.0, %v2325
      %v2327 = vpop.f32.mrf.mxu0
      %v2328 = vadd.f32 0.0, %v2327
      %2329 = vmatmul.bf16.gmra.mxu0 %v2205
      %v2330 = vpop.f32.mrf.mxu0
      %v2331 = vadd.f32 0.0, %v2330
      %v2332 = vpop.f32.mrf.mxu0
      %2333 = vdwg.mxu0
      %v2334 = vadd.f32 %v2085, %v2276
      %v2335 = vadd.f32 %v2086, %v2278
      %v2336 = vadd.f32 %v2087, %v2281
      %v2337 = vadd.f32 %v2088, %v2283
      %v2338 = vadd.f32 %v2089, %v2286
      %v2339 = vadd.f32 %v2090, %v2288
      %v2340 = vadd.f32 %v2091, %v2291
      %v2341 = vadd.f32 %v2092, %v2293
      %v2342 = vadd.f32 %v2093, %v2296
      %v2343 = vadd.f32 %v2094, %v2298
      %v2344 = vadd.f32 %v2095, %v2301
      %v2345 = vadd.f32 %v2096, %v2303
      %v2346 = vadd.f32 %v2097, %v2306
      %v2347 = vadd.f32 %v2098, %v2308
      %v2348 = vadd.f32 %v2099, %v2311
      %v2349 = vadd.f32 %v2100, %v2313
      %v2350 = vadd.f32 %v2101, %v2316
      %v2351 = vadd.f32 %v2102, %v2318
      %v2352 = vadd.f32 %v2103, %v2321
      %v2353 = vadd.f32 %v2104, %v2323
      %v2354 = vadd.f32 %v2105, %v2326
      %v2355 = vadd.f32 %v2106, %v2328
      %v2356 = vadd.f32 %v2107, %v2331
      %v2357 = vld [vmem:[%s1367] sm:$0xf]
      %v2358 = vld [vmem:[%s1367 + $0x4] sm:$0xf]
      %v2359 = vld [vmem:[%s1367 + $0x8] sm:$0xf]
      %v2360 = vld [vmem:[%s1367 + $0xc] sm:$0xf]
      %v2361 = vld [vmem:[%s1367 + $0x10] sm:$0xf]
      %v2362 = vld [vmem:[%s1367 + $0x14] sm:$0xf]
      %v2363 = vld [vmem:[%s1367 + $0x18] sm:$0xf]
      %v2364 = vld [vmem:[%s1367 + $0x1c] sm:$0xf]
      %v2365 = vld [vmem:[%s1367 + $0x20] sm:$0xf]
      %v2366 = vld [vmem:[%s1367 + $0x24] sm:$0xf]
      %v2367 = vld [vmem:[%s1367 + $0x28] sm:$0xf]
      %v2368 = vld [vmem:[%s1367 + $0x2c] sm:$0xf]
      %v2369 = vld [vmem:[%s1367 + $0x30] sm:$0xf]
      %v2370 = vld [vmem:[%s1367 + $0x34] sm:$0xf]
      %v2371 = vld [vmem:[%s1367 + $0x38] sm:$0xf]
      %v2372 = vld [vmem:[%s1367 + $0x3c] sm:$0xf]
      %v2373 = vld [vmem:[%s1367 + $0x40] sm:$0xf]
      %v2374 = vld [vmem:[%s1367 + $0x44] sm:$0xf]
      %v2375 = vld [vmem:[%s1367 + $0x48] sm:$0xf]
      %v2376 = vld [vmem:[%s1367 + $0x4c] sm:$0xf]
      %v2377 = vld [vmem:[%s1367 + $0x50] sm:$0xf]
      %v2378 = vld [vmem:[%s1367 + $0x54] sm:$0xf]
      %v2379 = vld [vmem:[%s1367 + $0x58] sm:$0x7]
      %s2380 = scalar_lea.vmem %s3, 256
      %v2381 = vld [vmem:[%s2380] sm:$0xf]
      %v2382 = vld [vmem:[%s2380 + $0x4] sm:$0xf]
      %v2383 = vld [vmem:[%s2380 + $0x8] sm:$0xf]
      %v2384 = vld [vmem:[%s2380 + $0xc] sm:$0xf]
      %v2385 = vld [vmem:[%s2380 + $0x10] sm:$0xf]
      %v2386 = vld [vmem:[%s2380 + $0x14] sm:$0xf]
      %v2387 = vld [vmem:[%s2380 + $0x18] sm:$0xf]
      %v2388 = vld [vmem:[%s2380 + $0x1c] sm:$0xf]
      %v2389 = vld [vmem:[%s2380 + $0x20] sm:$0xf]
      %v2390 = vld [vmem:[%s2380 + $0x24] sm:$0xf]
      %v2391 = vld [vmem:[%s2380 + $0x28] sm:$0xf]
      %v2392 = vld [vmem:[%s2380 + $0x2c] sm:$0xf]
      %v2393 = vld [vmem:[%s2380 + $0x30] sm:$0xf]
      %v2394 = vld [vmem:[%s2380 + $0x34] sm:$0xf]
      %v2395 = vld [vmem:[%s2380 + $0x38] sm:$0xf]
      %v2396 = vld [vmem:[%s2380 + $0x3c] sm:$0xf]
      %v2420 = vunpack.c.l.b16 %v2357
      %v2421 = vunpack.c.l.b16 %v2358
      %v2422 = vunpack.c.l.b16 %v2359
      %v2423 = vunpack.c.l.b16 %v2360
      %v2424 = vunpack.c.l.b16 %v2361
      %v2425 = vunpack.c.l.b16 %v2362
      %v2426 = vunpack.c.l.b16 %v2363
      %v2427 = vunpack.c.l.b16 %v2364
      %v2428 = vunpack.c.l.b16 %v2365
      %v2429 = vunpack.c.l.b16 %v2366
      %v2430 = vunpack.c.l.b16 %v2367
      %v2431 = vunpack.c.l.b16 %v2368
      %v2432 = vunpack.c.l.b16 %v2369
      %v2433 = vunpack.c.l.b16 %v2370
      %v2434 = vunpack.c.l.b16 %v2371
      %v2435 = vunpack.c.l.b16 %v2372
      %v2436 = vunpack.c.l.b16 %v2373
      %v2437 = vunpack.c.l.b16 %v2374
      %v2438 = vunpack.c.l.b16 %v2375
      %v2439 = vunpack.c.l.b16 %v2376
      %v2440 = vunpack.c.l.b16 %v2377
      %v2441 = vunpack.c.l.b16 %v2378
      %v2442 = vunpack.c.l.b16 %v2379
      %v2443 = vpack.c.b16 %v2421, %v2420
      %v2444 = vpack.c.b16 %v2423, %v2422
      %v2445 = vpack.c.b16 %v2425, %v2424
      %v2446 = vpack.c.b16 %v2427, %v2426
      %v2447 = vpack.c.b16 %v2429, %v2428
      %v2448 = vpack.c.b16 %v2431, %v2430
      %v2449 = vpack.c.b16 %v2433, %v2432
      %v2450 = vpack.c.b16 %v2435, %v2434
      %v2451 = vpack.c.b16 %v2437, %v2436
      %v2452 = vpack.c.b16 %v2439, %v2438
      %v2453 = vpack.c.b16 %v2441, %v2440
      %v2454 = vpack.c.b16 %v2442, %v2442
      %v2483 = vunpack.c.l.b16 %v2381
      %v2484 = vunpack.c.l.b16 %v2382
      %v2485 = vunpack.c.l.b16 %v2383
      %v2486 = vunpack.c.l.b16 %v2384
      %v2487 = vunpack.c.l.b16 %v2385
      %v2488 = vunpack.c.l.b16 %v2386
      %v2489 = vunpack.c.l.b16 %v2387
      %v2490 = vunpack.c.l.b16 %v2388
      %v2491 = vunpack.c.l.b16 %v2389
      %v2492 = vunpack.c.l.b16 %v2390
      %v2493 = vunpack.c.l.b16 %v2391
      %v2494 = vunpack.c.l.b16 %v2392
      %v2495 = vunpack.c.l.b16 %v2393
      %v2496 = vunpack.c.l.b16 %v2394
      %v2497 = vunpack.c.l.b16 %v2395
      %v2498 = vunpack.c.l.b16 %v2396
      %v2499 = vpack.c.b16 %v2484, %v2483
      %v2500 = vpack.c.b16 %v2486, %v2485
      %v2501 = vpack.c.b16 %v2488, %v2487
      %v2502 = vpack.c.b16 %v2490, %v2489
      %v2503 = vpack.c.b16 %v2492, %v2491
      %v2504 = vpack.c.b16 %v2494, %v2493
      %v2505 = vpack.c.b16 %v2496, %v2495
      %v2506 = vpack.c.b16 %v2498, %v2497
      %2515 = vmatpush.bf16.msra.mxu0 %v2506
      %2516 = vmatpush.bf16.msra.mxu0 %v2505
      %2517 = vmatpush.bf16.msra.mxu0 %v2504
      %2518 = vmatpush.bf16.msra.mxu0 %v2503
      %2519 = vmatpush.bf16.msra.mxu0 %v2502
      %2520 = vmatpush.bf16.msra.mxu0 %v2501
      %2521 = vmatpush.bf16.msra.mxu0 %v2500
      %2522 = vmatpush.bf16.msra.mxu0 %v2499
      %2523 = vmatmul.bf16.gmra.mxu0 %v2443
      %v2524 = vpop.f32.mrf.mxu0
      %v2525 = vadd.f32 0.0, %v2524
      %v2526 = vpop.f32.mrf.mxu0
      %v2527 = vadd.f32 0.0, %v2526
      %2528 = vmatmul.bf16.gmra.mxu0 %v2444
      %v2529 = vpop.f32.mrf.mxu0
      %v2530 = vadd.f32 0.0, %v2529
      %v2531 = vpop.f32.mrf.mxu0
      %v2532 = vadd.f32 0.0, %v2531
      %2533 = vmatmul.bf16.gmra.mxu0 %v2445
      %v2534 = vpop.f32.mrf.mxu0
      %v2535 = vadd.f32 0.0, %v2534
      %v2536 = vpop.f32.mrf.mxu0
      %v2537 = vadd.f32 0.0, %v2536
      %2538 = vmatmul.bf16.gmra.mxu0 %v2446
      %v2539 = vpop.f32.mrf.mxu0
      %v2540 = vadd.f32 0.0, %v2539
      %v2541 = vpop.f32.mrf.mxu0
      %v2542 = vadd.f32 0.0, %v2541
      %2543 = vmatmul.bf16.gmra.mxu0 %v2447
      %v2544 = vpop.f32.mrf.mxu0
      %v2545 = vadd.f32 0.0, %v2544
      %v2546 = vpop.f32.mrf.mxu0
      %v2547 = vadd.f32 0.0, %v2546
      %2548 = vmatmul.bf16.gmra.mxu0 %v2448
      %v2549 = vpop.f32.mrf.mxu0
      %v2550 = vadd.f32 0.0, %v2549
      %v2551 = vpop.f32.mrf.mxu0
      %v2552 = vadd.f32 0.0, %v2551
      %2553 = vmatmul.bf16.gmra.mxu0 %v2449
      %v2554 = vpop.f32.mrf.mxu0
      %v2555 = vadd.f32 0.0, %v2554
      %v2556 = vpop.f32.mrf.mxu0
      %v2557 = vadd.f32 0.0, %v2556
      %2558 = vmatmul.bf16.gmra.mxu0 %v2450
      %v2559 = vpop.f32.mrf.mxu0
      %v2560 = vadd.f32 0.0, %v2559
      %v2561 = vpop.f32.mrf.mxu0
      %v2562 = vadd.f32 0.0, %v2561
      %2563 = vmatmul.bf16.gmra.mxu0 %v2451
      %v2564 = vpop.f32.mrf.mxu0
      %v2565 = vadd.f32 0.0, %v2564
      %v2566 = vpop.f32.mrf.mxu0
      %v2567 = vadd.f32 0.0, %v2566
      %2568 = vmatmul.bf16.gmra.mxu0 %v2452
      %v2569 = vpop.f32.mrf.mxu0
      %v2570 = vadd.f32 0.0, %v2569
      %v2571 = vpop.f32.mrf.mxu0
      %v2572 = vadd.f32 0.0, %v2571
      %2573 = vmatmul.bf16.gmra.mxu0 %v2453
      %v2574 = vpop.f32.mrf.mxu0
      %v2575 = vadd.f32 0.0, %v2574
      %v2576 = vpop.f32.mrf.mxu0
      %v2577 = vadd.f32 0.0, %v2576
      %2578 = vmatmul.bf16.gmra.mxu0 %v2454
      %v2579 = vpop.f32.mrf.mxu0
      %v2580 = vadd.f32 0.0, %v2579
      %v2581 = vpop.f32.mrf.mxu0
      %2582 = vdwg.mxu0
      %v2583 = vadd.f32 %v2334, %v2525
      %v2584 = vadd.f32 %v2335, %v2527
      %v2585 = vadd.f32 %v2336, %v2530
      %v2586 = vadd.f32 %v2337, %v2532
      %v2587 = vadd.f32 %v2338, %v2535
      %v2588 = vadd.f32 %v2339, %v2537
      %v2589 = vadd.f32 %v2340, %v2540
      %v2590 = vadd.f32 %v2341, %v2542
      %v2591 = vadd.f32 %v2342, %v2545
      %v2592 = vadd.f32 %v2343, %v2547
      %v2593 = vadd.f32 %v2344, %v2550
      %v2594 = vadd.f32 %v2345, %v2552
      %v2595 = vadd.f32 %v2346, %v2555
      %v2596 = vadd.f32 %v2347, %v2557
      %v2597 = vadd.f32 %v2348, %v2560
      %v2598 = vadd.f32 %v2349, %v2562
      %v2599 = vadd.f32 %v2350, %v2565
      %v2600 = vadd.f32 %v2351, %v2567
      %v2601 = vadd.f32 %v2352, %v2570
      %v2602 = vadd.f32 %v2353, %v2572
      %v2603 = vadd.f32 %v2354, %v2575
      %v2604 = vadd.f32 %v2355, %v2577
      %v2605 = vadd.f32 %v2356, %v2580
      %s2606 = scalar_lea.vmem %s3, 320
      %v2607 = vld [vmem:[%s2606] sm:$0xf]
      %v2608 = vld [vmem:[%s2606 + $0x4] sm:$0xf]
      %v2609 = vld [vmem:[%s2606 + $0x8] sm:$0xf]
      %v2610 = vld [vmem:[%s2606 + $0xc] sm:$0xf]
      %v2611 = vld [vmem:[%s2606 + $0x10] sm:$0xf]
      %v2612 = vld [vmem:[%s2606 + $0x14] sm:$0xf]
      %v2613 = vld [vmem:[%s2606 + $0x18] sm:$0xf]
      %v2614 = vld [vmem:[%s2606 + $0x1c] sm:$0xf]
      %v2615 = vld [vmem:[%s2606 + $0x20] sm:$0xf]
      %v2616 = vld [vmem:[%s2606 + $0x24] sm:$0xf]
      %v2617 = vld [vmem:[%s2606 + $0x28] sm:$0xf]
      %v2618 = vld [vmem:[%s2606 + $0x2c] sm:$0xf]
      %v2619 = vld [vmem:[%s2606 + $0x30] sm:$0xf]
      %v2620 = vld [vmem:[%s2606 + $0x34] sm:$0xf]
      %v2621 = vld [vmem:[%s2606 + $0x38] sm:$0xf]
      %v2622 = vld [vmem:[%s2606 + $0x3c] sm:$0xf]
      %v2624 = vshrl.u32 %v2194, 16
      %v2626 = vshll.u32 %v2194, 16
      %v2628 = vrot.slane %v2626, 1
      %v2629 = vor.u32 %v2624, %v2628
      %v2631 = vshll.u32 %v2195, 16
      %v2633 = vrot.slane %v2631, 1
      %v2634 = vsel %vm1861, %v2629, %v2633
      %v2635 = vshrl.u32 %v2195, 16
      %v2637 = vor.u32 %v2635, %v2633
      %v2639 = vshll.u32 %v2196, 16
      %v2641 = vrot.slane %v2639, 1
      %v2642 = vsel %vm1861, %v2637, %v2641
      %v2643 = vshrl.u32 %v2196, 16
      %v2645 = vor.u32 %v2643, %v2641
      %v2647 = vshll.u32 %v2197, 16
      %v2649 = vrot.slane %v2647, 1
      %v2650 = vsel %vm1861, %v2645, %v2649
      %v2651 = vshrl.u32 %v2197, 16
      %v2653 = vor.u32 %v2651, %v2649
      %v2655 = vshll.u32 %v2198, 16
      %v2657 = vrot.slane %v2655, 1
      %v2658 = vsel %vm1861, %v2653, %v2657
      %v2659 = vshrl.u32 %v2198, 16
      %v2661 = vor.u32 %v2659, %v2657
      %v2663 = vshll.u32 %v2199, 16
      %v2665 = vrot.slane %v2663, 1
      %v2666 = vsel %vm1861, %v2661, %v2665
      %v2667 = vshrl.u32 %v2199, 16
      %v2669 = vor.u32 %v2667, %v2665
      %v2671 = vshll.u32 %v2200, 16
      %v2673 = vrot.slane %v2671, 1
      %v2674 = vsel %vm1861, %v2669, %v2673
      %v2675 = vshrl.u32 %v2200, 16
      %v2677 = vor.u32 %v2675, %v2673
      %v2679 = vshll.u32 %v2201, 16
      %v2681 = vrot.slane %v2679, 1
      %v2682 = vsel %vm1861, %v2677, %v2681
      %v2683 = vshrl.u32 %v2201, 16
      %v2685 = vor.u32 %v2683, %v2681
      %v2687 = vshll.u32 %v2202, 16
      %v2689 = vrot.slane %v2687, 1
      %v2690 = vsel %vm1861, %v2685, %v2689
      %v2691 = vshrl.u32 %v2202, 16
      %v2693 = vor.u32 %v2691, %v2689
      %v2695 = vshll.u32 %v2203, 16
      %v2697 = vrot.slane %v2695, 1
      %v2698 = vsel %vm1861, %v2693, %v2697
      %v2699 = vshrl.u32 %v2203, 16
      %v2701 = vor.u32 %v2699, %v2697
      %v2703 = vshll.u32 %v2204, 16
      %v2705 = vrot.slane %v2703, 1
      %v2706 = vsel %vm1861, %v2701, %v2705
      %v2707 = vshrl.u32 %v2204, 16
      %v2709 = vor.u32 %v2707, %v2705
      %v2711 = vshll.u32 %v2205, 16
      %v2713 = vrot.slane %v2711, 1
      %v2714 = vsel %vm1861, %v2709, %v2713
      %v2715 = vshrl.u32 %v2205, 16
      %v2717 = vor.u32 %v2715, %v2713
      %v2746 = vunpack.c.l.b16 %v2607
      %v2747 = vunpack.c.l.b16 %v2608
      %v2748 = vunpack.c.l.b16 %v2609
      %v2749 = vunpack.c.l.b16 %v2610
      %v2750 = vunpack.c.l.b16 %v2611
      %v2751 = vunpack.c.l.b16 %v2612
      %v2752 = vunpack.c.l.b16 %v2613
      %v2753 = vunpack.c.l.b16 %v2614
      %v2754 = vunpack.c.l.b16 %v2615
      %v2755 = vunpack.c.l.b16 %v2616
      %v2756 = vunpack.c.l.b16 %v2617
      %v2757 = vunpack.c.l.b16 %v2618
      %v2758 = vunpack.c.l.b16 %v2619
      %v2759 = vunpack.c.l.b16 %v2620
      %v2760 = vunpack.c.l.b16 %v2621
      %v2761 = vunpack.c.l.b16 %v2622
      %v2762 = vpack.c.b16 %v2747, %v2746
      %v2763 = vpack.c.b16 %v2749, %v2748
      %v2764 = vpack.c.b16 %v2751, %v2750
      %v2765 = vpack.c.b16 %v2753, %v2752
      %v2766 = vpack.c.b16 %v2755, %v2754
      %v2767 = vpack.c.b16 %v2757, %v2756
      %v2768 = vpack.c.b16 %v2759, %v2758
      %v2769 = vpack.c.b16 %v2761, %v2760
      %2778 = vmatpush.bf16.msra.mxu0 %v2769
      %2779 = vmatpush.bf16.msra.mxu0 %v2768
      %2780 = vmatpush.bf16.msra.mxu0 %v2767
      %2781 = vmatpush.bf16.msra.mxu0 %v2766
      %2782 = vmatpush.bf16.msra.mxu0 %v2765
      %2783 = vmatpush.bf16.msra.mxu0 %v2764
      %2784 = vmatpush.bf16.msra.mxu0 %v2763
      %2785 = vmatpush.bf16.msra.mxu0 %v2762
      %2786 = vmatmul.bf16.gmra.mxu0 %v2634
      %v2787 = vpop.f32.mrf.mxu0
      %v2788 = vadd.f32 0.0, %v2787
      %v2789 = vpop.f32.mrf.mxu0
      %v2790 = vadd.f32 0.0, %v2789
      %2791 = vmatmul.bf16.gmra.mxu0 %v2642
      %v2792 = vpop.f32.mrf.mxu0
      %v2793 = vadd.f32 0.0, %v2792
      %v2794 = vpop.f32.mrf.mxu0
      %v2795 = vadd.f32 0.0, %v2794
      %2796 = vmatmul.bf16.gmra.mxu0 %v2650
      %v2797 = vpop.f32.mrf.mxu0
      %v2798 = vadd.f32 0.0, %v2797
      %v2799 = vpop.f32.mrf.mxu0
      %v2800 = vadd.f32 0.0, %v2799
      %2801 = vmatmul.bf16.gmra.mxu0 %v2658
      %v2802 = vpop.f32.mrf.mxu0
      %v2803 = vadd.f32 0.0, %v2802
      %v2804 = vpop.f32.mrf.mxu0
      %v2805 = vadd.f32 0.0, %v2804
      %2806 = vmatmul.bf16.gmra.mxu0 %v2666
      %v2807 = vpop.f32.mrf.mxu0
      %v2808 = vadd.f32 0.0, %v2807
      %v2809 = vpop.f32.mrf.mxu0
      %v2810 = vadd.f32 0.0, %v2809
      %2811 = vmatmul.bf16.gmra.mxu0 %v2674
      %v2812 = vpop.f32.mrf.mxu0
      %v2813 = vadd.f32 0.0, %v2812
      %v2814 = vpop.f32.mrf.mxu0
      %v2815 = vadd.f32 0.0, %v2814
      %2816 = vmatmul.bf16.gmra.mxu0 %v2682
      %v2817 = vpop.f32.mrf.mxu0
      %v2818 = vadd.f32 0.0, %v2817
      %v2819 = vpop.f32.mrf.mxu0
      %v2820 = vadd.f32 0.0, %v2819
      %2821 = vmatmul.bf16.gmra.mxu0 %v2690
      %v2822 = vpop.f32.mrf.mxu0
      %v2823 = vadd.f32 0.0, %v2822
      %v2824 = vpop.f32.mrf.mxu0
      %v2825 = vadd.f32 0.0, %v2824
      %2826 = vmatmul.bf16.gmra.mxu0 %v2698
      %v2827 = vpop.f32.mrf.mxu0
      %v2828 = vadd.f32 0.0, %v2827
      %v2829 = vpop.f32.mrf.mxu0
      %v2830 = vadd.f32 0.0, %v2829
      %2831 = vmatmul.bf16.gmra.mxu0 %v2706
      %v2832 = vpop.f32.mrf.mxu0
      %v2833 = vadd.f32 0.0, %v2832
      %v2834 = vpop.f32.mrf.mxu0
      %v2835 = vadd.f32 0.0, %v2834
      %2836 = vmatmul.bf16.gmra.mxu0 %v2714
      %v2837 = vpop.f32.mrf.mxu0
      %v2838 = vadd.f32 0.0, %v2837
      %v2839 = vpop.f32.mrf.mxu0
      %v2840 = vadd.f32 0.0, %v2839
      %2841 = vmatmul.bf16.gmra.mxu0 %v2717
      %v2842 = vpop.f32.mrf.mxu0
      %v2843 = vadd.f32 0.0, %v2842
      %v2844 = vpop.f32.mrf.mxu0
      %2845 = vdwg.mxu0
      %v2846 = vadd.f32 %v2583, %v2788
      %v2847 = vadd.f32 %v2584, %v2790
      %v2848 = vadd.f32 %v2585, %v2793
      %v2849 = vadd.f32 %v2586, %v2795
      %v2850 = vadd.f32 %v2587, %v2798
      %v2851 = vadd.f32 %v2588, %v2800
      %v2852 = vadd.f32 %v2589, %v2803
      %v2853 = vadd.f32 %v2590, %v2805
      %v2854 = vadd.f32 %v2591, %v2808
      %v2855 = vadd.f32 %v2592, %v2810
      %v2856 = vadd.f32 %v2593, %v2813
      %v2857 = vadd.f32 %v2594, %v2815
      %v2858 = vadd.f32 %v2595, %v2818
      %v2859 = vadd.f32 %v2596, %v2820
      %v2860 = vadd.f32 %v2597, %v2823
      %v2861 = vadd.f32 %v2598, %v2825
      %v2862 = vadd.f32 %v2599, %v2828
      %v2863 = vadd.f32 %v2600, %v2830
      %v2864 = vadd.f32 %v2601, %v2833
      %v2865 = vadd.f32 %v2602, %v2835
      %v2866 = vadd.f32 %v2603, %v2838
      %v2867 = vadd.f32 %v2604, %v2840
      %v2868 = vadd.f32 %v2605, %v2843
      %v2869 = vld [vmem:[#allocation2 + $0x4] sm:$0x8]
      %v2870 = vld [vmem:[#allocation2 + $0x8] sm:$0xf]
      %v2871 = vld [vmem:[#allocation2 + $0xc] sm:$0xf]
      %v2872 = vld [vmem:[#allocation2 + $0x10] sm:$0xf]
      %v2873 = vld [vmem:[#allocation2 + $0x14] sm:$0xf]
      %v2874 = vld [vmem:[#allocation2 + $0x18] sm:$0xf]
      %v2875 = vld [vmem:[#allocation2 + $0x1c] sm:$0xf]
      %v2876 = vld [vmem:[#allocation2 + $0x20] sm:$0xf]
      %v2877 = vld [vmem:[#allocation2 + $0x24] sm:$0xf]
      %v2878 = vld [vmem:[#allocation2 + $0x28] sm:$0xf]
      %v2879 = vld [vmem:[#allocation2 + $0x2c] sm:$0xf]
      %v2880 = vld [vmem:[#allocation2 + $0x30] sm:$0xf]
      %v2881 = vld [vmem:[#allocation2 + $0x34] sm:$0xf]
      %v2882 = vld [vmem:[#allocation2 + $0x38] sm:$0xf]
      %v2883 = vld [vmem:[#allocation2 + $0x3c] sm:$0xf]
      %v2884 = vld [vmem:[#allocation2 + $0x40] sm:$0xf]
      %v2885 = vld [vmem:[#allocation2 + $0x44] sm:$0xf]
      %v2886 = vld [vmem:[#allocation2 + $0x48] sm:$0xf]
      %v2887 = vld [vmem:[#allocation2 + $0x4c] sm:$0xf]
      %v2888 = vld [vmem:[#allocation2 + $0x50] sm:$0xf]
      %v2889 = vld [vmem:[#allocation2 + $0x54] sm:$0xf]
      %v2890 = vld [vmem:[#allocation2 + $0x58] sm:$0xf]
      %v2891 = vld [vmem:[#allocation2 + $0x5c] sm:$0xf]
      %v2892 = vld [vmem:[#allocation2 + $0x60] sm:$0x3]
      %s2893 = scalar_lea.vmem %s3, 384
      %v2894 = vld [vmem:[%s2893] sm:$0xf]
      %v2895 = vld [vmem:[%s2893 + $0x4] sm:$0xf]
      %v2896 = vld [vmem:[%s2893 + $0x8] sm:$0xf]
      %v2897 = vld [vmem:[%s2893 + $0xc] sm:$0xf]
      %v2898 = vld [vmem:[%s2893 + $0x10] sm:$0xf]
      %v2899 = vld [vmem:[%s2893 + $0x14] sm:$0xf]
      %v2900 = vld [vmem:[%s2893 + $0x18] sm:$0xf]
      %v2901 = vld [vmem:[%s2893 + $0x1c] sm:$0xf]
      %v2902 = vld [vmem:[%s2893 + $0x20] sm:$0xf]
      %v2903 = vld [vmem:[%s2893 + $0x24] sm:$0xf]
      %v2904 = vld [vmem:[%s2893 + $0x28] sm:$0xf]
      %v2905 = vld [vmem:[%s2893 + $0x2c] sm:$0xf]
      %v2906 = vld [vmem:[%s2893 + $0x30] sm:$0xf]
      %v2907 = vld [vmem:[%s2893 + $0x34] sm:$0xf]
      %v2908 = vld [vmem:[%s2893 + $0x38] sm:$0xf]
      %v2909 = vld [vmem:[%s2893 + $0x3c] sm:$0xf]
      %v2934 = vunpack.c.l.b16 %v2869
      %v2935 = vunpack.c.l.b16 %v2870
      %v2936 = vunpack.c.l.b16 %v2871
      %v2937 = vunpack.c.l.b16 %v2872
      %v2938 = vunpack.c.l.b16 %v2873
      %v2939 = vunpack.c.l.b16 %v2874
      %v2940 = vunpack.c.l.b16 %v2875
      %v2941 = vunpack.c.l.b16 %v2876
      %v2942 = vunpack.c.l.b16 %v2877
      %v2943 = vunpack.c.l.b16 %v2878
      %v2944 = vunpack.c.l.b16 %v2879
      %v2945 = vunpack.c.l.b16 %v2880
      %v2946 = vunpack.c.l.b16 %v2881
      %v2947 = vunpack.c.l.b16 %v2882
      %v2948 = vunpack.c.l.b16 %v2883
      %v2949 = vunpack.c.l.b16 %v2884
      %v2950 = vunpack.c.l.b16 %v2885
      %v2951 = vunpack.c.l.b16 %v2886
      %v2952 = vunpack.c.l.b16 %v2887
      %v2953 = vunpack.c.l.b16 %v2888
      %v2954 = vunpack.c.l.b16 %v2889
      %v2955 = vunpack.c.l.b16 %v2890
      %v2956 = vunpack.c.l.b16 %v2891
      %v2957 = vunpack.c.l.b16 %v2892
      %v2958 = vpack.c.b16 %v2935, %v2934
      %v2959 = vpack.c.b16 %v2937, %v2936
      %v2960 = vpack.c.b16 %v2939, %v2938
      %v2961 = vpack.c.b16 %v2941, %v2940
      %v2962 = vpack.c.b16 %v2943, %v2942
      %v2963 = vpack.c.b16 %v2945, %v2944
      %v2964 = vpack.c.b16 %v2947, %v2946
      %v2965 = vpack.c.b16 %v2949, %v2948
      %v2966 = vpack.c.b16 %v2951, %v2950
      %v2967 = vpack.c.b16 %v2953, %v2952
      %v2968 = vpack.c.b16 %v2955, %v2954
      %v2969 = vpack.c.b16 %v2957, %v2956
      %vm2970 = vcmask 1044480
      %v2971 = vrot.slane %v2958, 3
      %v2972 = vrot.slane %v2959, 3
      %v2973 = vsel %vm2970, %v2971, %v2972
      %v2974 = vrot.slane %v2960, 3
      %v2975 = vsel %vm2970, %v2972, %v2974
      %v2976 = vrot.slane %v2961, 3
      %v2977 = vsel %vm2970, %v2974, %v2976
      %v2978 = vrot.slane %v2962, 3
      %v2979 = vsel %vm2970, %v2976, %v2978
      %v2980 = vrot.slane %v2963, 3
      %v2981 = vsel %vm2970, %v2978, %v2980
      %v2982 = vrot.slane %v2964, 3
      %v2983 = vsel %vm2970, %v2980, %v2982
      %v2984 = vrot.slane %v2965, 3
      %v2985 = vsel %vm2970, %v2982, %v2984
      %v2986 = vrot.slane %v2966, 3
      %v2987 = vsel %vm2970, %v2984, %v2986
      %v2988 = vrot.slane %v2967, 3
      %v2989 = vsel %vm2970, %v2986, %v2988
      %v2990 = vrot.slane %v2968, 3
      %v2991 = vsel %vm2970, %v2988, %v2990
      %v2992 = vrot.slane %v2969, 3
      %v2993 = vsel %vm2970, %v2990, %v2992
      %v3022 = vunpack.c.l.b16 %v2894
      %v3023 = vunpack.c.l.b16 %v2895
      %v3024 = vunpack.c.l.b16 %v2896
      %v3025 = vunpack.c.l.b16 %v2897
      %v3026 = vunpack.c.l.b16 %v2898
      %v3027 = vunpack.c.l.b16 %v2899
      %v3028 = vunpack.c.l.b16 %v2900
      %v3029 = vunpack.c.l.b16 %v2901
      %v3030 = vunpack.c.l.b16 %v2902
      %v3031 = vunpack.c.l.b16 %v2903
      %v3032 = vunpack.c.l.b16 %v2904
      %v3033 = vunpack.c.l.b16 %v2905
      %v3034 = vunpack.c.l.b16 %v2906
      %v3035 = vunpack.c.l.b16 %v2907
      %v3036 = vunpack.c.l.b16 %v2908
      %v3037 = vunpack.c.l.b16 %v2909
      %v3038 = vpack.c.b16 %v3023, %v3022
      %v3039 = vpack.c.b16 %v3025, %v3024
      %v3040 = vpack.c.b16 %v3027, %v3026
      %v3041 = vpack.c.b16 %v3029, %v3028
      %v3042 = vpack.c.b16 %v3031, %v3030
      %v3043 = vpack.c.b16 %v3033, %v3032
      %v3044 = vpack.c.b16 %v3035, %v3034
      %v3045 = vpack.c.b16 %v3037, %v3036
      %3054 = vmatpush.bf16.msra.mxu0 %v3045
      %3055 = vmatpush.bf16.msra.mxu0 %v3044
      %3056 = vmatpush.bf16.msra.mxu0 %v3043
      %3057 = vmatpush.bf16.msra.mxu0 %v3042
      %3058 = vmatpush.bf16.msra.mxu0 %v3041
      %3059 = vmatpush.bf16.msra.mxu0 %v3040
      %3060 = vmatpush.bf16.msra.mxu0 %v3039
      %3061 = vmatpush.bf16.msra.mxu0 %v3038
      %3062 = vmatmul.bf16.gmra.mxu0 %v2973
      %v3063 = vpop.f32.mrf.mxu0
      %v3064 = vadd.f32 0.0, %v3063
      %v3065 = vpop.f32.mrf.mxu0
      %v3066 = vadd.f32 0.0, %v3065
      %3067 = vmatmul.bf16.gmra.mxu0 %v2975
      %v3068 = vpop.f32.mrf.mxu0
      %v3069 = vadd.f32 0.0, %v3068
      %v3070 = vpop.f32.mrf.mxu0
      %v3071 = vadd.f32 0.0, %v3070
      %3072 = vmatmul.bf16.gmra.mxu0 %v2977
      %v3073 = vpop.f32.mrf.mxu0
      %v3074 = vadd.f32 0.0, %v3073
      %v3075 = vpop.f32.mrf.mxu0
      %v3076 = vadd.f32 0.0, %v3075
      %3077 = vmatmul.bf16.gmra.mxu0 %v2979
      %v3078 = vpop.f32.mrf.mxu0
      %v3079 = vadd.f32 0.0, %v3078
      %v3080 = vpop.f32.mrf.mxu0
      %v3081 = vadd.f32 0.0, %v3080
      %3082 = vmatmul.bf16.gmra.mxu0 %v2981
      %v3083 = vpop.f32.mrf.mxu0
      %v3084 = vadd.f32 0.0, %v3083
      %v3085 = vpop.f32.mrf.mxu0
      %v3086 = vadd.f32 0.0, %v3085
      %3087 = vmatmul.bf16.gmra.mxu0 %v2983
      %v3088 = vpop.f32.mrf.mxu0
      %v3089 = vadd.f32 0.0, %v3088
      %v3090 = vpop.f32.mrf.mxu0
      %v3091 = vadd.f32 0.0, %v3090
      %3092 = vmatmul.bf16.gmra.mxu0 %v2985
      %v3093 = vpop.f32.mrf.mxu0
      %v3094 = vadd.f32 0.0, %v3093
      %v3095 = vpop.f32.mrf.mxu0
      %v3096 = vadd.f32 0.0, %v3095
      %3097 = vmatmul.bf16.gmra.mxu0 %v2987
      %v3098 = vpop.f32.mrf.mxu0
      %v3099 = vadd.f32 0.0, %v3098
      %v3100 = vpop.f32.mrf.mxu0
      %v3101 = vadd.f32 0.0, %v3100
      %3102 = vmatmul.bf16.gmra.mxu0 %v2989
      %v3103 = vpop.f32.mrf.mxu0
      %v3104 = vadd.f32 0.0, %v3103
      %v3105 = vpop.f32.mrf.mxu0
      %v3106 = vadd.f32 0.0, %v3105
      %3107 = vmatmul.bf16.gmra.mxu0 %v2991
      %v3108 = vpop.f32.mrf.mxu0
      %v3109 = vadd.f32 0.0, %v3108
      %v3110 = vpop.f32.mrf.mxu0
      %v3111 = vadd.f32 0.0, %v3110
      %3112 = vmatmul.bf16.gmra.mxu0 %v2993
      %v3113 = vpop.f32.mrf.mxu0
      %v3114 = vadd.f32 0.0, %v3113
      %v3115 = vpop.f32.mrf.mxu0
      %v3116 = vadd.f32 0.0, %v3115
      %3117 = vmatmul.bf16.gmra.mxu0 %v2992
      %v3118 = vpop.f32.mrf.mxu0
      %v3119 = vadd.f32 0.0, %v3118
      %v3120 = vpop.f32.mrf.mxu0
      %3121 = vdwg.mxu0
      %v3122 = vadd.f32 %v2846, %v3064
      %v3123 = vadd.f32 %v2847, %v3066
      %v3124 = vadd.f32 %v2848, %v3069
      %v3125 = vadd.f32 %v2849, %v3071
      %v3126 = vadd.f32 %v2850, %v3074
      %v3127 = vadd.f32 %v2851, %v3076
      %v3128 = vadd.f32 %v2852, %v3079
      %v3129 = vadd.f32 %v2853, %v3081
      %v3130 = vadd.f32 %v2854, %v3084
      %v3131 = vadd.f32 %v2855, %v3086
      %v3132 = vadd.f32 %v2856, %v3089
      %v3133 = vadd.f32 %v2857, %v3091
      %v3134 = vadd.f32 %v2858, %v3094
      %v3135 = vadd.f32 %v2859, %v3096
      %v3136 = vadd.f32 %v2860, %v3099
      %v3137 = vadd.f32 %v2861, %v3101
      %v3138 = vadd.f32 %v2862, %v3104
      %v3139 = vadd.f32 %v2863, %v3106
      %v3140 = vadd.f32 %v2864, %v3109
      %v3141 = vadd.f32 %v2865, %v3111
      %v3142 = vadd.f32 %v2866, %v3114
      %v3143 = vadd.f32 %v2867, %v3116
      %v3144 = vadd.f32 %v2868, %v3119
      %v3145 = vld [vmem:[%s785 + $0x4] sm:$0x8]
      %v3146 = vld [vmem:[%s785 + $0x8] sm:$0xf]
      %v3147 = vld [vmem:[%s785 + $0xc] sm:$0xf]
      %v3148 = vld [vmem:[%s785 + $0x10] sm:$0xf]
      %v3149 = vld [vmem:[%s785 + $0x14] sm:$0xf]
      %v3150 = vld [vmem:[%s785 + $0x18] sm:$0xf]
      %v3151 = vld [vmem:[%s785 + $0x1c] sm:$0xf]
      %v3152 = vld [vmem:[%s785 + $0x20] sm:$0xf]
      %v3153 = vld [vmem:[%s785 + $0x24] sm:$0xf]
      %v3154 = vld [vmem:[%s785 + $0x28] sm:$0xf]
      %v3155 = vld [vmem:[%s785 + $0x2c] sm:$0xf]
      %v3156 = vld [vmem:[%s785 + $0x30] sm:$0xf]
      %v3157 = vld [vmem:[%s785 + $0x34] sm:$0xf]
      %v3158 = vld [vmem:[%s785 + $0x38] sm:$0xf]
      %v3159 = vld [vmem:[%s785 + $0x3c] sm:$0xf]
      %v3160 = vld [vmem:[%s785 + $0x40] sm:$0xf]
      %v3161 = vld [vmem:[%s785 + $0x44] sm:$0xf]
      %v3162 = vld [vmem:[%s785 + $0x48] sm:$0xf]
      %v3163 = vld [vmem:[%s785 + $0x4c] sm:$0xf]
      %v3164 = vld [vmem:[%s785 + $0x50] sm:$0xf]
      %v3165 = vld [vmem:[%s785 + $0x54] sm:$0xf]
      %v3166 = vld [vmem:[%s785 + $0x58] sm:$0xf]
      %v3167 = vld [vmem:[%s785 + $0x5c] sm:$0xf]
      %v3168 = vld [vmem:[%s785 + $0x60] sm:$0x3]
      %s3169 = scalar_lea.vmem %s3, 448
      %v3170 = vld [vmem:[%s3169] sm:$0xf]
      %v3171 = vld [vmem:[%s3169 + $0x4] sm:$0xf]
      %v3172 = vld [vmem:[%s3169 + $0x8] sm:$0xf]
      %v3173 = vld [vmem:[%s3169 + $0xc] sm:$0xf]
      %v3174 = vld [vmem:[%s3169 + $0x10] sm:$0xf]
      %v3175 = vld [vmem:[%s3169 + $0x14] sm:$0xf]
      %v3176 = vld [vmem:[%s3169 + $0x18] sm:$0xf]
      %v3177 = vld [vmem:[%s3169 + $0x1c] sm:$0xf]
      %v3178 = vld [vmem:[%s3169 + $0x20] sm:$0xf]
      %v3179 = vld [vmem:[%s3169 + $0x24] sm:$0xf]
      %v3180 = vld [vmem:[%s3169 + $0x28] sm:$0xf]
      %v3181 = vld [vmem:[%s3169 + $0x2c] sm:$0xf]
      %v3182 = vld [vmem:[%s3169 + $0x30] sm:$0xf]
      %v3183 = vld [vmem:[%s3169 + $0x34] sm:$0xf]
      %v3184 = vld [vmem:[%s3169 + $0x38] sm:$0xf]
      %v3185 = vld [vmem:[%s3169 + $0x3c] sm:$0xf]
      %v3210 = vunpack.c.l.b16 %v3145
      %v3211 = vunpack.c.l.b16 %v3146
      %v3212 = vunpack.c.l.b16 %v3147
      %v3213 = vunpack.c.l.b16 %v3148
      %v3214 = vunpack.c.l.b16 %v3149
      %v3215 = vunpack.c.l.b16 %v3150
      %v3216 = vunpack.c.l.b16 %v3151
      %v3217 = vunpack.c.l.b16 %v3152
      %v3218 = vunpack.c.l.b16 %v3153
      %v3219 = vunpack.c.l.b16 %v3154
      %v3220 = vunpack.c.l.b16 %v3155
      %v3221 = vunpack.c.l.b16 %v3156
      %v3222 = vunpack.c.l.b16 %v3157
      %v3223 = vunpack.c.l.b16 %v3158
      %v3224 = vunpack.c.l.b16 %v3159
      %v3225 = vunpack.c.l.b16 %v3160
      %v3226 = vunpack.c.l.b16 %v3161
      %v3227 = vunpack.c.l.b16 %v3162
      %v3228 = vunpack.c.l.b16 %v3163
      %v3229 = vunpack.c.l.b16 %v3164
      %v3230 = vunpack.c.l.b16 %v3165
      %v3231 = vunpack.c.l.b16 %v3166
      %v3232 = vunpack.c.l.b16 %v3167
      %v3233 = vunpack.c.l.b16 %v3168
      %v3234 = vpack.c.b16 %v3211, %v3210
      %v3235 = vpack.c.b16 %v3213, %v3212
      %v3236 = vpack.c.b16 %v3215, %v3214
      %v3237 = vpack.c.b16 %v3217, %v3216
      %v3238 = vpack.c.b16 %v3219, %v3218
      %v3239 = vpack.c.b16 %v3221, %v3220
      %v3240 = vpack.c.b16 %v3223, %v3222
      %v3241 = vpack.c.b16 %v3225, %v3224
      %v3242 = vpack.c.b16 %v3227, %v3226
      %v3243 = vpack.c.b16 %v3229, %v3228
      %v3244 = vpack.c.b16 %v3231, %v3230
      %v3245 = vpack.c.b16 %v3233, %v3232
      %v3246 = vrot.slane %v3234, 3
      %v3247 = vrot.slane %v3235, 3
      %v3248 = vsel %vm2970, %v3246, %v3247
      %v3249 = vrot.slane %v3236, 3
      %v3250 = vsel %vm2970, %v3247, %v3249
      %v3251 = vrot.slane %v3237, 3
      %v3252 = vsel %vm2970, %v3249, %v3251
      %v3253 = vrot.slane %v3238, 3
      %v3254 = vsel %vm2970, %v3251, %v3253
      %v3255 = vrot.slane %v3239, 3
      %v3256 = vsel %vm2970, %v3253, %v3255
      %v3257 = vrot.slane %v3240, 3
      %v3258 = vsel %vm2970, %v3255, %v3257
      %v3259 = vrot.slane %v3241, 3
      %v3260 = vsel %vm2970, %v3257, %v3259
      %v3261 = vrot.slane %v3242, 3
      %v3262 = vsel %vm2970, %v3259, %v3261
      %v3263 = vrot.slane %v3243, 3
      %v3264 = vsel %vm2970, %v3261, %v3263
      %v3265 = vrot.slane %v3244, 3
      %v3266 = vsel %vm2970, %v3263, %v3265
      %v3267 = vrot.slane %v3245, 3
      %v3268 = vsel %vm2970, %v3265, %v3267
      %v3297 = vunpack.c.l.b16 %v3170
      %v3298 = vunpack.c.l.b16 %v3171
      %v3299 = vunpack.c.l.b16 %v3172
      %v3300 = vunpack.c.l.b16 %v3173
      %v3301 = vunpack.c.l.b16 %v3174
      %v3302 = vunpack.c.l.b16 %v3175
      %v3303 = vunpack.c.l.b16 %v3176
      %v3304 = vunpack.c.l.b16 %v3177
      %v3305 = vunpack.c.l.b16 %v3178
      %v3306 = vunpack.c.l.b16 %v3179
      %v3307 = vunpack.c.l.b16 %v3180
      %v3308 = vunpack.c.l.b16 %v3181
      %v3309 = vunpack.c.l.b16 %v3182
      %v3310 = vunpack.c.l.b16 %v3183
      %v3311 = vunpack.c.l.b16 %v3184
      %v3312 = vunpack.c.l.b16 %v3185
      %v3313 = vpack.c.b16 %v3298, %v3297
      %v3314 = vpack.c.b16 %v3300, %v3299
      %v3315 = vpack.c.b16 %v3302, %v3301
      %v3316 = vpack.c.b16 %v3304, %v3303
      %v3317 = vpack.c.b16 %v3306, %v3305
      %v3318 = vpack.c.b16 %v3308, %v3307
      %v3319 = vpack.c.b16 %v3310, %v3309
      %v3320 = vpack.c.b16 %v3312, %v3311
      %3329 = vmatpush.bf16.msra.mxu0 %v3320
      %3330 = vmatpush.bf16.msra.mxu0 %v3319
      %3331 = vmatpush.bf16.msra.mxu0 %v3318
      %3332 = vmatpush.bf16.msra.mxu0 %v3317
      %3333 = vmatpush.bf16.msra.mxu0 %v3316
      %3334 = vmatpush.bf16.msra.mxu0 %v3315
      %3335 = vmatpush.bf16.msra.mxu0 %v3314
      %3336 = vmatpush.bf16.msra.mxu0 %v3313
      %3337 = vmatmul.bf16.gmra.mxu0 %v3248
      %v3338 = vpop.f32.mrf.mxu0
      %v3339 = vadd.f32 0.0, %v3338
      %v3340 = vpop.f32.mrf.mxu0
      %v3341 = vadd.f32 0.0, %v3340
      %3342 = vmatmul.bf16.gmra.mxu0 %v3250
      %v3343 = vpop.f32.mrf.mxu0
      %v3344 = vadd.f32 0.0, %v3343
      %v3345 = vpop.f32.mrf.mxu0
      %v3346 = vadd.f32 0.0, %v3345
      %3347 = vmatmul.bf16.gmra.mxu0 %v3252
      %v3348 = vpop.f32.mrf.mxu0
      %v3349 = vadd.f32 0.0, %v3348
      %v3350 = vpop.f32.mrf.mxu0
      %v3351 = vadd.f32 0.0, %v3350
      %3352 = vmatmul.bf16.gmra.mxu0 %v3254
      %v3353 = vpop.f32.mrf.mxu0
      %v3354 = vadd.f32 0.0, %v3353
      %v3355 = vpop.f32.mrf.mxu0
      %v3356 = vadd.f32 0.0, %v3355
      %3357 = vmatmul.bf16.gmra.mxu0 %v3256
      %v3358 = vpop.f32.mrf.mxu0
      %v3359 = vadd.f32 0.0, %v3358
      %v3360 = vpop.f32.mrf.mxu0
      %v3361 = vadd.f32 0.0, %v3360
      %3362 = vmatmul.bf16.gmra.mxu0 %v3258
      %v3363 = vpop.f32.mrf.mxu0
      %v3364 = vadd.f32 0.0, %v3363
      %v3365 = vpop.f32.mrf.mxu0
      %v3366 = vadd.f32 0.0, %v3365
      %3367 = vmatmul.bf16.gmra.mxu0 %v3260
      %v3368 = vpop.f32.mrf.mxu0
      %v3369 = vadd.f32 0.0, %v3368
      %v3370 = vpop.f32.mrf.mxu0
      %v3371 = vadd.f32 0.0, %v3370
      %3372 = vmatmul.bf16.gmra.mxu0 %v3262
      %v3373 = vpop.f32.mrf.mxu0
      %v3374 = vadd.f32 0.0, %v3373
      %v3375 = vpop.f32.mrf.mxu0
      %v3376 = vadd.f32 0.0, %v3375
      %3377 = vmatmul.bf16.gmra.mxu0 %v3264
      %v3378 = vpop.f32.mrf.mxu0
      %v3379 = vadd.f32 0.0, %v3378
      %v3380 = vpop.f32.mrf.mxu0
      %v3381 = vadd.f32 0.0, %v3380
      %3382 = vmatmul.bf16.gmra.mxu0 %v3266
      %v3383 = vpop.f32.mrf.mxu0
      %v3384 = vadd.f32 0.0, %v3383
      %v3385 = vpop.f32.mrf.mxu0
      %v3386 = vadd.f32 0.0, %v3385
      %3387 = vmatmul.bf16.gmra.mxu0 %v3268
      %v3388 = vpop.f32.mrf.mxu0
      %v3389 = vadd.f32 0.0, %v3388
      %v3390 = vpop.f32.mrf.mxu0
      %v3391 = vadd.f32 0.0, %v3390
      %3392 = vmatmul.bf16.gmra.mxu0 %v3267
      %v3393 = vpop.f32.mrf.mxu0
      %v3394 = vadd.f32 0.0, %v3393
      %v3395 = vpop.f32.mrf.mxu0
      %3396 = vdwg.mxu0
      %v3397 = vadd.f32 %v3122, %v3339
      %v3398 = vadd.f32 %v3123, %v3341
      %v3399 = vadd.f32 %v3124, %v3344
      %v3400 = vadd.f32 %v3125, %v3346
      %v3401 = vadd.f32 %v3126, %v3349
      %v3402 = vadd.f32 %v3127, %v3351
      %v3403 = vadd.f32 %v3128, %v3354
      %v3404 = vadd.f32 %v3129, %v3356
      %v3405 = vadd.f32 %v3130, %v3359
      %v3406 = vadd.f32 %v3131, %v3361
      %v3407 = vadd.f32 %v3132, %v3364
      %v3408 = vadd.f32 %v3133, %v3366
      %v3409 = vadd.f32 %v3134, %v3369
      %v3410 = vadd.f32 %v3135, %v3371
      %v3411 = vadd.f32 %v3136, %v3374
      %v3412 = vadd.f32 %v3137, %v3376
      %v3413 = vadd.f32 %v3138, %v3379
      %v3414 = vadd.f32 %v3139, %v3381
      %v3415 = vadd.f32 %v3140, %v3384
      %v3416 = vadd.f32 %v3141, %v3386
      %v3417 = vadd.f32 %v3142, %v3389
      %v3418 = vadd.f32 %v3143, %v3391
      %v3419 = vadd.f32 %v3144, %v3394
      %s3420 = scalar_lea.vmem %s3, 512
      %v3421 = vld [vmem:[%s3420] sm:$0xf]
      %v3422 = vld [vmem:[%s3420 + $0x4] sm:$0xf]
      %v3423 = vld [vmem:[%s3420 + $0x8] sm:$0xf]
      %v3424 = vld [vmem:[%s3420 + $0xc] sm:$0xf]
      %v3425 = vld [vmem:[%s3420 + $0x10] sm:$0xf]
      %v3426 = vld [vmem:[%s3420 + $0x14] sm:$0xf]
      %v3427 = vld [vmem:[%s3420 + $0x18] sm:$0xf]
      %v3428 = vld [vmem:[%s3420 + $0x1c] sm:$0xf]
      %v3429 = vld [vmem:[%s3420 + $0x20] sm:$0xf]
      %v3430 = vld [vmem:[%s3420 + $0x24] sm:$0xf]
      %v3431 = vld [vmem:[%s3420 + $0x28] sm:$0xf]
      %v3432 = vld [vmem:[%s3420 + $0x2c] sm:$0xf]
      %v3433 = vld [vmem:[%s3420 + $0x30] sm:$0xf]
      %v3434 = vld [vmem:[%s3420 + $0x34] sm:$0xf]
      %v3435 = vld [vmem:[%s3420 + $0x38] sm:$0xf]
      %v3436 = vld [vmem:[%s3420 + $0x3c] sm:$0xf]
      %vm3437 = vsmask.f32 4352
      %v3439 = vshrl.u32 %v2958, 16
      %v3441 = vrot.slane %v3439, 3
      %v3442 = vshll.u32 %v2958, 16
      %v3444 = vrot.slane %v3442, 4
      %v3445 = vor.u32 %v3441, %v3444
      %v3447 = vshrl.u32 %v2959, 16
      %v3449 = vrot.slane %v3447, 3
      %v3450 = vshll.u32 %v2959, 16
      %v3452 = vrot.slane %v3450, 4
      %v3453 = vor.u32 %v3449, %v3452
      %v3454 = vsel %vm3437, %v3445, %v3453
      %v3456 = vshrl.u32 %v2960, 16
      %v3458 = vrot.slane %v3456, 3
      %v3459 = vshll.u32 %v2960, 16
      %v3461 = vrot.slane %v3459, 4
      %v3462 = vor.u32 %v3458, %v3461
      %v3463 = vsel %vm3437, %v3453, %v3462
      %v3465 = vshrl.u32 %v2961, 16
      %v3467 = vrot.slane %v3465, 3
      %v3468 = vshll.u32 %v2961, 16
      %v3470 = vrot.slane %v3468, 4
      %v3471 = vor.u32 %v3467, %v3470
      %v3472 = vsel %vm3437, %v3462, %v3471
      %v3474 = vshrl.u32 %v2962, 16
      %v3476 = vrot.slane %v3474, 3
      %v3477 = vshll.u32 %v2962, 16
      %v3479 = vrot.slane %v3477, 4
      %v3480 = vor.u32 %v3476, %v3479
      %v3481 = vsel %vm3437, %v3471, %v3480
      %v3483 = vshrl.u32 %v2963, 16
      %v3485 = vrot.slane %v3483, 3
      %v3486 = vshll.u32 %v2963, 16
      %v3488 = vrot.slane %v3486, 4
      %v3489 = vor.u32 %v3485, %v3488
      %v3490 = vsel %vm3437, %v3480, %v3489
      %v3492 = vshrl.u32 %v2964, 16
      %v3494 = vrot.slane %v3492, 3
      %v3495 = vshll.u32 %v2964, 16
      %v3497 = vrot.slane %v3495, 4
      %v3498 = vor.u32 %v3494, %v3497
      %v3499 = vsel %vm3437, %v3489, %v3498
      %v3501 = vshrl.u32 %v2965, 16
      %v3503 = vrot.slane %v3501, 3
      %v3504 = vshll.u32 %v2965, 16
      %v3506 = vrot.slane %v3504, 4
      %v3507 = vor.u32 %v3503, %v3506
      %v3508 = vsel %vm3437, %v3498, %v3507
      %v3510 = vshrl.u32 %v2966, 16
      %v3512 = vrot.slane %v3510, 3
      %v3513 = vshll.u32 %v2966, 16
      %v3515 = vrot.slane %v3513, 4
      %v3516 = vor.u32 %v3512, %v3515
      %v3517 = vsel %vm3437, %v3507, %v3516
      %v3519 = vshrl.u32 %v2967, 16
      %v3521 = vrot.slane %v3519, 3
      %v3522 = vshll.u32 %v2967, 16
      %v3524 = vrot.slane %v3522, 4
      %v3525 = vor.u32 %v3521, %v3524
      %v3526 = vsel %vm3437, %v3516, %v3525
      %v3528 = vshrl.u32 %v2968, 16
      %v3530 = vrot.slane %v3528, 3
      %v3531 = vshll.u32 %v2968, 16
      %v3533 = vrot.slane %v3531, 4
      %v3534 = vor.u32 %v3530, %v3533
      %v3535 = vsel %vm3437, %v3525, %v3534
      %v3537 = vshrl.u32 %v2969, 16
      %v3539 = vrot.slane %v3537, 3
      %v3540 = vshll.u32 %v2969, 16
      %v3542 = vrot.slane %v3540, 4
      %v3543 = vor.u32 %v3539, %v3542
      %v3544 = vsel %vm3437, %v3534, %v3543
      %v3573 = vunpack.c.l.b16 %v3421
      %v3574 = vunpack.c.l.b16 %v3422
      %v3575 = vunpack.c.l.b16 %v3423
      %v3576 = vunpack.c.l.b16 %v3424
      %v3577 = vunpack.c.l.b16 %v3425
      %v3578 = vunpack.c.l.b16 %v3426
      %v3579 = vunpack.c.l.b16 %v3427
      %v3580 = vunpack.c.l.b16 %v3428
      %v3581 = vunpack.c.l.b16 %v3429
      %v3582 = vunpack.c.l.b16 %v3430
      %v3583 = vunpack.c.l.b16 %v3431
      %v3584 = vunpack.c.l.b16 %v3432
      %v3585 = vunpack.c.l.b16 %v3433
      %v3586 = vunpack.c.l.b16 %v3434
      %v3587 = vunpack.c.l.b16 %v3435
      %v3588 = vunpack.c.l.b16 %v3436
      %v3589 = vpack.c.b16 %v3574, %v3573
      %v3590 = vpack.c.b16 %v3576, %v3575
      %v3591 = vpack.c.b16 %v3578, %v3577
      %v3592 = vpack.c.b16 %v3580, %v3579
      %v3593 = vpack.c.b16 %v3582, %v3581
      %v3594 = vpack.c.b16 %v3584, %v3583
      %v3595 = vpack.c.b16 %v3586, %v3585
      %v3596 = vpack.c.b16 %v3588, %v3587
      %3605 = vmatpush.bf16.msra.mxu0 %v3596
      %3606 = vmatpush.bf16.msra.mxu0 %v3595
      %3607 = vmatpush.bf16.msra.mxu0 %v3594
      %3608 = vmatpush.bf16.msra.mxu0 %v3593
      %3609 = vmatpush.bf16.msra.mxu0 %v3592
      %3610 = vmatpush.bf16.msra.mxu0 %v3591
      %3611 = vmatpush.bf16.msra.mxu0 %v3590
      %3612 = vmatpush.bf16.msra.mxu0 %v3589
      %3613 = vmatmul.bf16.gmra.mxu0 %v3454
      %v3614 = vpop.f32.mrf.mxu0
      %v3615 = vadd.f32 0.0, %v3614
      %v3616 = vpop.f32.mrf.mxu0
      %v3617 = vadd.f32 0.0, %v3616
      %3618 = vmatmul.bf16.gmra.mxu0 %v3463
      %v3619 = vpop.f32.mrf.mxu0
      %v3620 = vadd.f32 0.0, %v3619
      %v3621 = vpop.f32.mrf.mxu0
      %v3622 = vadd.f32 0.0, %v3621
      %3623 = vmatmul.bf16.gmra.mxu0 %v3472
      %v3624 = vpop.f32.mrf.mxu0
      %v3625 = vadd.f32 0.0, %v3624
      %v3626 = vpop.f32.mrf.mxu0
      %v3627 = vadd.f32 0.0, %v3626
      %3628 = vmatmul.bf16.gmra.mxu0 %v3481
      %v3629 = vpop.f32.mrf.mxu0
      %v3630 = vadd.f32 0.0, %v3629
      %v3631 = vpop.f32.mrf.mxu0
      %v3632 = vadd.f32 0.0, %v3631
      %3633 = vmatmul.bf16.gmra.mxu0 %v3490
      %v3634 = vpop.f32.mrf.mxu0
      %v3635 = vadd.f32 0.0, %v3634
      %v3636 = vpop.f32.mrf.mxu0
      %v3637 = vadd.f32 0.0, %v3636
      %3638 = vmatmul.bf16.gmra.mxu0 %v3499
      %v3639 = vpop.f32.mrf.mxu0
      %v3640 = vadd.f32 0.0, %v3639
      %v3641 = vpop.f32.mrf.mxu0
      %v3642 = vadd.f32 0.0, %v3641
      %3643 = vmatmul.bf16.gmra.mxu0 %v3508
      %v3644 = vpop.f32.mrf.mxu0
      %v3645 = vadd.f32 0.0, %v3644
      %v3646 = vpop.f32.mrf.mxu0
      %v3647 = vadd.f32 0.0, %v3646
      %3648 = vmatmul.bf16.gmra.mxu0 %v3517
      %v3649 = vpop.f32.mrf.mxu0
      %v3650 = vadd.f32 0.0, %v3649
      %v3651 = vpop.f32.mrf.mxu0
      %v3652 = vadd.f32 0.0, %v3651
      %3653 = vmatmul.bf16.gmra.mxu0 %v3526
      %v3654 = vpop.f32.mrf.mxu0
      %v3655 = vadd.f32 0.0, %v3654
      %v3656 = vpop.f32.mrf.mxu0
      %v3657 = vadd.f32 0.0, %v3656
      %3658 = vmatmul.bf16.gmra.mxu0 %v3535
      %v3659 = vpop.f32.mrf.mxu0
      %v3660 = vadd.f32 0.0, %v3659
      %v3661 = vpop.f32.mrf.mxu0
      %v3662 = vadd.f32 0.0, %v3661
      %3663 = vmatmul.bf16.gmra.mxu0 %v3544
      %v3664 = vpop.f32.mrf.mxu0
      %v3665 = vadd.f32 0.0, %v3664
      %v3666 = vpop.f32.mrf.mxu0
      %v3667 = vadd.f32 0.0, %v3666
      %3668 = vmatmul.bf16.gmra.mxu0 %v3543
      %v3669 = vpop.f32.mrf.mxu0
      %v3670 = vadd.f32 0.0, %v3669
      %v3671 = vpop.f32.mrf.mxu0
      %3672 = vdwg.mxu0
      %v3673 = vadd.f32 %v3397, %v3615
      %v3674 = vadd.f32 %v3398, %v3617
      %v3675 = vadd.f32 %v3399, %v3620
      %v3676 = vadd.f32 %v3400, %v3622
      %v3677 = vadd.f32 %v3401, %v3625
      %v3678 = vadd.f32 %v3402, %v3627
      %v3679 = vadd.f32 %v3403, %v3630
      %v3680 = vadd.f32 %v3404, %v3632
      %v3681 = vadd.f32 %v3405, %v3635
      %v3682 = vadd.f32 %v3406, %v3637
      %v3683 = vadd.f32 %v3407, %v3640
      %v3684 = vadd.f32 %v3408, %v3642
      %v3685 = vadd.f32 %v3409, %v3645
      %v3686 = vadd.f32 %v3410, %v3647
      %v3687 = vadd.f32 %v3411, %v3650
      %v3688 = vadd.f32 %v3412, %v3652
      %v3689 = vadd.f32 %v3413, %v3655
      %v3690 = vadd.f32 %v3414, %v3657
      %v3691 = vadd.f32 %v3415, %v3660
      %v3692 = vadd.f32 %v3416, %v3662
      %v3693 = vadd.f32 %v3417, %v3665
      %v3694 = vadd.f32 %v3418, %v3667
      %v3695 = vadd.f32 %v3419, %v3670
      %v3696 = vld [vmem:[%s4] sm:$0x1]
      %v3698 = vperm.slane %v3696, 0
      %v3700 = vadd.f32 %v3673, %v3698
      %v3701 = vadd.f32 %v3674, %v3698
      %v3702 = vadd.f32 %v3675, %v3698
      %v3703 = vadd.f32 %v3676, %v3698
      %v3704 = vadd.f32 %v3677, %v3698
      %v3705 = vadd.f32 %v3678, %v3698
      %v3706 = vadd.f32 %v3679, %v3698
      %v3707 = vadd.f32 %v3680, %v3698
      %v3708 = vadd.f32 %v3681, %v3698
      %v3709 = vadd.f32 %v3682, %v3698
      %v3710 = vadd.f32 %v3683, %v3698
      %v3711 = vadd.f32 %v3684, %v3698
      %v3712 = vadd.f32 %v3685, %v3698
      %v3713 = vadd.f32 %v3686, %v3698
      %v3714 = vadd.f32 %v3687, %v3698
      %v3715 = vadd.f32 %v3688, %v3698
      %v3716 = vadd.f32 %v3689, %v3698
      %v3717 = vadd.f32 %v3690, %v3698
      %v3718 = vadd.f32 %v3691, %v3698
      %v3719 = vadd.f32 %v3692, %v3698
      %v3720 = vadd.f32 %v3693, %v3698
      %v3721 = vadd.f32 %v3694, %v3698
      %v3722 = vadd.f32 %v3695, %v3698
      %v3723 = vmax.f32 %v3700, 0.0
      %v3724 = vmax.f32 %v3701, 0.0
      %v3725 = vmax.f32 %v3702, 0.0
      %v3726 = vmax.f32 %v3703, 0.0
      %v3727 = vmax.f32 %v3704, 0.0
      %v3728 = vmax.f32 %v3705, 0.0
      %v3729 = vmax.f32 %v3706, 0.0
      %v3730 = vmax.f32 %v3707, 0.0
      %v3731 = vmax.f32 %v3708, 0.0
      %v3732 = vmax.f32 %v3709, 0.0
      %v3733 = vmax.f32 %v3710, 0.0
      %v3734 = vmax.f32 %v3711, 0.0
      %v3735 = vmax.f32 %v3712, 0.0
      %v3736 = vmax.f32 %v3713, 0.0
      %v3737 = vmax.f32 %v3714, 0.0
      %v3738 = vmax.f32 %v3715, 0.0
      %v3739 = vmax.f32 %v3716, 0.0
      %v3740 = vmax.f32 %v3717, 0.0
      %v3741 = vmax.f32 %v3718, 0.0
      %v3742 = vmax.f32 %v3719, 0.0
      %v3743 = vmax.f32 %v3720, 0.0
      %v3744 = vmax.f32 %v3721, 0.0
      %v3745 = vmax.f32 %v3722, 0.0
      %v3746 = vpack.c.bf16 %v3723, %v3723
      %v3747 = vpack.c.bf16 %v3724, %v3724
      %v3748 = vpack.c.bf16 %v3725, %v3725
      %v3749 = vpack.c.bf16 %v3726, %v3726
      %v3750 = vpack.c.bf16 %v3727, %v3727
      %v3751 = vpack.c.bf16 %v3728, %v3728
      %v3752 = vpack.c.bf16 %v3729, %v3729
      %v3753 = vpack.c.bf16 %v3730, %v3730
      %v3754 = vpack.c.bf16 %v3731, %v3731
      %v3755 = vpack.c.bf16 %v3732, %v3732
      %v3756 = vpack.c.bf16 %v3733, %v3733
      %v3757 = vpack.c.bf16 %v3734, %v3734
      %v3758 = vpack.c.bf16 %v3735, %v3735
      %v3759 = vpack.c.bf16 %v3736, %v3736
      %v3760 = vpack.c.bf16 %v3737, %v3737
      %v3761 = vpack.c.bf16 %v3738, %v3738
      %v3762 = vpack.c.bf16 %v3739, %v3739
      %v3763 = vpack.c.bf16 %v3740, %v3740
      %v3764 = vpack.c.bf16 %v3741, %v3741
      %v3765 = vpack.c.bf16 %v3742, %v3742
      %v3766 = vpack.c.bf16 %v3743, %v3743
      %v3767 = vpack.c.bf16 %v3744, %v3744
      %v3768 = vpack.c.bf16 %v3745, %v3745
      %vm3769 = vcmask 519168
      %3770 = vst.msk [vmem:[%s224] sm:$0xf] %vm3769, %v3746
      %3771 = vst.msk [vmem:[%s224 + $0x4] sm:$0xf] %vm3769, %v3747
      %3772 = vst.msk [vmem:[%s224 + $0x8] sm:$0xf] %vm3769, %v3748
      %3773 = vst.msk [vmem:[%s224 + $0xc] sm:$0xf] %vm3769, %v3749
      %3774 = vst.msk [vmem:[%s224 + $0x10] sm:$0xf] %vm3769, %v3750
      %3775 = vst.msk [vmem:[%s224 + $0x14] sm:$0xf] %vm3769, %v3751
      %3776 = vst.msk [vmem:[%s224 + $0x18] sm:$0xf] %vm3769, %v3752
      %3777 = vst.msk [vmem:[%s224 + $0x1c] sm:$0xf] %vm3769, %v3753
      %3778 = vst.msk [vmem:[%s224 + $0x20] sm:$0xf] %vm3769, %v3754
      %3779 = vst.msk [vmem:[%s224 + $0x24] sm:$0xf] %vm3769, %v3755
      %3780 = vst.msk [vmem:[%s224 + $0x28] sm:$0xf] %vm3769, %v3756
      %3781 = vst.msk [vmem:[%s224 + $0x2c] sm:$0xf] %vm3769, %v3757
      %3782 = vst.msk [vmem:[%s224 + $0x30] sm:$0xf] %vm3769, %v3758
      %3783 = vst.msk [vmem:[%s224 + $0x34] sm:$0xf] %vm3769, %v3759
      %3784 = vst.msk [vmem:[%s224 + $0x38] sm:$0xf] %vm3769, %v3760
      %3785 = vst.msk [vmem:[%s224 + $0x3c] sm:$0xf] %vm3769, %v3761
      %3786 = vst.msk [vmem:[%s224 + $0x40] sm:$0xf] %vm3769, %v3762
      %3787 = vst.msk [vmem:[%s224 + $0x44] sm:$0xf] %vm3769, %v3763
      %3788 = vst.msk [vmem:[%s224 + $0x48] sm:$0xf] %vm3769, %v3764
      %3789 = vst.msk [vmem:[%s224 + $0x4c] sm:$0xf] %vm3769, %v3765
      %3790 = vst.msk [vmem:[%s224 + $0x50] sm:$0xf] %vm3769, %v3766
      %3791 = vst.msk [vmem:[%s224 + $0x54] sm:$0xf] %vm3769, %v3767
      %vm3792 = vcmask 518144
      %vm3793 = vsmask.f32 2304
      %vm3794 = vmand %vm3792, %vm3793
      %v3795 = vld [vmem:[%s224 + $0x58] sm:$0x7]
      %v3796 = vsel %vm3794, %v3768, %v3795
      %3797 = vst [vmem:[%s224 + $0x58] sm:$0x7] %v3796
      %vm3798 = vcmask 519170
      %vm3799 = vsmask.f32 7946
      %vm3800 = vmand %vm3798, %vm3799
      %v3801 = vld [vmem:[%s224 + $0x58] sm:$0xc]
      %v3802 = vsel %vm3800, 0, %v3801
      %3803 = vst [vmem:[%s224 + $0x58] sm:$0xc] %v3802
      %3804 = vst.msk [vmem:[%s224 + $0x5c] sm:$0xf] %vm3769, 0
      %p3805 = scmp.lt.s32.totalorder %s16, 1
      %s3806 = scalar_select %p3805, %s16, 1
      %s3807 = smul.addr %s3806, 24
      %s3808 = smul.addr %s3807, 4
      %s3809 = scalar_lea.vmem %s5, %s3808
      // Predicated region
      $region41: #{classifier_c_forward.2} parent=39 // pred_check
        %p3810 = pneg %p144
      $region42: #{classifier_c_forward.2} parent=39 // pred_check_branch
        %3812 = sbr.rel (%p3810) target = $region44
      $region43: #{classifier_c_forward.2} parent=39 // pred_region
        _
      $region44: #{classifier_c_forward.2} parent=39 // pred_fallthru
        _
    $region40: #{classifier_c_forward.2} parent=5 // pred_fallthru
      _
    %p3813 = scmp.le.s32.totalorder 2, %s11
    // Predicated region
    $region45: #{classifier_c_forward.2} parent=5 // pred_check
      %p3814 = pneg %p3813
    $region46: #{classifier_c_forward.2} parent=5 // pred_check_branch
      %3816 = sbr.rel (%p3814) target = $region48
    $region47: #{classifier_c_forward.2} parent=5 // pred_region
      %s3817 = ssub.s32 %s11, 2
      // Predicated region
      $region49: #{classifier_c_forward.2} parent=47 // pred_check
        %p3818 = pneg %p150
      $region50: #{classifier_c_forward.2} parent=47 // pred_check_branch
        %3820 = sbr.rel (%p3818) target = $region52
      $region51: #{classifier_c_forward.2} parent=47 // pred_region
        %p3821 = scmp.lt.s32.totalorder %s17, 1
        %s3822 = scalar_select %p3821, %s17, 1
        %s3823 = smul.addr %s3822, 24
        %s3824 = smul.addr %s3823, 4
        %s3825 = scalar_lea.vmem %s5, %s3824
      $region52: #{classifier_c_forward.2} parent=47 // pred_fallthru
        _
    $region48: #{classifier_c_forward.2} parent=5 // pred_fallthru
      _
  $region6: #{classifier_c_forward.2} parent=0 // loop_footer
    %s15 = sadd.s32 1, %s11
  $region7: #{classifier_c_forward.2} parent=0 // loop_footer_branch
    %10 = sbr.rel target = $region3
  $region8: #{classifier_c_forward.2} parent=0 // loop_exit
    _

</llo_original>
